<compile_context>
chip_gen: v5e
topology: v5e:2x2
jax: 0.10.0
libtpu: 0.0.40
codegen_flags: <defaults>
</compile_context>

<pallas_src>
import numpy as np
import jax
import jax.numpy as jnp
from jax.experimental import pallas as pl
from jax.experimental.pallas import tpu as pltpu

# ----------------------------- small config ---------------------------------
B       = 2          # batch
IMG     = 16         # image_size
PATCH   = 4          # patch_size
CIN     = 3          # in_channels
EMB     = 32         # emb_dim
DEPTH   = 2          # transformer depth
HEADS   = 4          # num_heads
MLP_R   = 4.0
FF      = int(EMB * MLP_R)          # 128
LBIN    = 8          # binary_length
NPATCH  = (IMG // PATCH) ** 2       # 16
SEQ     = NPATCH + 1                # 17 (cls + patches)
PDIM    = CIN * PATCH * PATCH       # 48
DH      = EMB // HEADS              # 8
LN_EPS  = 1e-5
PADL    = 128                       # lane-dense pad width for the head output
KSEG    = 64                        # key rows per head segment (>= padded rows)
NEG     = np.float32(-1e30)


def _round_up(n, m):
    return ((n + m - 1) // m) * m


# ----------------------------- in-kernel helpers ----------------------------
def _erf(x):
    # Abramowitz & Stegun 7.1.26 rational approximation, |err| <= 1.5e-7
    a1, a2, a3, a4, a5 = 0.254829592, -0.284496736, 1.421413741, -1.453152027, 1.061405429
    p = 0.3275911
    sgn = jnp.where(x >= 0.0, 1.0, -1.0)
    ax = jnp.abs(x)
    t = 1.0 / (1.0 + p * ax)
    poly = ((((a5 * t + a4) * t + a3) * t + a2) * t + a1) * t
    return sgn * (1.0 - poly * jnp.exp(-ax * ax))


def _gelu_exact(x):
    # PyTorch F.gelu default (erf-based, non-approximate)
    return 0.5 * x * (1.0 + _erf(x * np.float32(1.0 / np.sqrt(2.0))))


def _layernorm(x, g, b):
    mu = jnp.mean(x, axis=-1, keepdims=True)
    xc = x - mu
    var = jnp.mean(xc * xc, axis=-1, keepdims=True)
    return xc * jax.lax.rsqrt(var + LN_EPS) * g + b


# ------------------------------- Pallas kernel -------------------------------
def vit_kernel(pe_ref, pw_ref, mask_ref, wbig_ref, w2_ref, lvec_ref, headp_ref,
               out_ref):
    f32, bf16 = jnp.float32, jnp.bfloat16
    rows = out_ref.shape[0]                          # padded stacked-row count

    # Patch embedding + (cls / conv-bias / pos) additive term, folded into the
    # same matmul through the identity columns of pe_ref.  Kept in f32: the raw
    # pixel data is the dominant error source under bf16.
    x = jnp.dot(pe_ref[...], pw_ref[...], preferred_element_type=f32)   # [rows, EMB]

    # Additive attention mask (block-diag across batch elements + pad-column
    # masking), already tiled once per 64-lane head segment.  Precomputed in
    # the wrapper -> no constant-mask construction in the kernel prologue.
    mask = mask_ref[...]                                                # [rows, HEADS*KSEG]

    # Constant per-head lane selectors (hoisted out of the layer loop; folded
    # by Mosaic).  Selecting lanes h*DH..(h+1)*DH is exact: zeroed lanes
    # contribute exactly 0 to the contraction.
    lane = jax.lax.broadcasted_iota(jnp.int32, (1, EMB), 1)
    head_sel = [jnp.logical_and(lane >= h * DH, lane < (h + 1) * DH)
                for h in range(HEADS)]
    zpad = jnp.zeros((KSEG - rows, EMB), f32)

    for l in range(DEPTH):
        wl = wbig_ref[l]          # [2E, 4E] bf16: rows 0:E = [Wq*s|Wk|Wv|Wo], rows E:2E = W1
        lv = lvec_ref[l]          # [8, 128] f32 vector slab

        # --- fused QKV(+dummy O) projection: ONE MXU op, bf16 in / f32 acc ---
        fused = jnp.dot(x.astype(bf16), wl[0:EMB, :],
                        preferred_element_type=f32) + lv[0:1, :]        # [rows, 128]
        q = fused[:, 0:EMB]            # static 32-lane slices (cheap lane shuffles,
        k = fused[:, EMB:2 * EMB]      # XLU/VPU slots have slack)
        v = fused[:, 2 * EMB:3 * EMB]

        # --- batched heads: head-masked K/V stacked at KSEG-row offsets ------
        kparts, vparts = [], []
        for h in range(HEADS):
            kparts += [jnp.where(head_sel[h], k, f32(0.0)), zpad]
            vparts += [jnp.where(head_sel[h], v, f32(0.0)), zpad]
        kcat = jnp.concatenate(kparts, axis=0).astype(bf16)             # [HEADS*KSEG, EMB]
        vcat = jnp.concatenate(vparts, axis=0).astype(bf16)

        # all-head scores in ONE matmul; additive mask handles batch blocks + pads
        s = jax.lax.dot_general(q.astype(bf16), kcat,
                                (((1,), (1,)), ((), ())),
                                preferred_element_type=f32) + mask      # [rows, HEADS*KSEG]

        # per-head (64-lane segment) softmax in f32
        pparts = []
        for h in range(HEADS):
            sh = s[:, h * KSEG:(h + 1) * KSEG]
            sh = sh - jnp.max(sh, axis=-1, keepdims=True)
            eh = jnp.exp(sh)
            pparts.append(eh * pl.reciprocal(jnp.sum(eh, axis=-1, keepdims=True),
                                             approx=False))
        p = jnp.concatenate(pparts, axis=1).astype(bf16)                # [rows, HEADS*KSEG]

        # all-head context in ONE matmul; head outputs land in disjoint lanes
        ctx = jnp.dot(p, vcat, preferred_element_type=f32)              # [rows, EMB]
        attn = jnp.dot(ctx.astype(bf16), wl[0:EMB, 3 * EMB:4 * EMB],
                       preferred_element_type=f32) + lv[2:3, 0:EMB]
        x = _layernorm(x + attn, lv[3:4, 0:EMB], lv[4:5, 0:EMB])

        # --- MLP --------------------------------------------------------------
        h1 = _gelu_exact(jnp.dot(x.astype(bf16), wl[EMB:2 * EMB, :],
                                 preferred_element_type=f32) + lv[1:2, :])
        ff = jnp.dot(h1.astype(bf16), w2_ref[l],
                     preferred_element_type=f32) + lv[5:6, 0:EMB]
        x = _layernorm(x + ff, lv[6:7, 0:EMB], lv[7:8, 0:EMB])

    # Classification head applied to all rows (lane-dense store); kept in f32
    # to preserve error budget.  Wrapper keeps CLS rows / first LBIN lanes.
    hp = headp_ref[...]                                                 # [E+3, PADL]
    xh = _layernorm(x, hp[EMB + 1:EMB + 2, 0:EMB], hp[EMB + 2:EMB + 3, 0:EMB])
    logits = jnp.dot(xh, hp[0:EMB, :],
                     preferred_element_type=f32) + hp[EMB:EMB + 1, :]   # [rows, PADL]
    out_ref[...] = jax.nn.sigmoid(logits)


# ------------------------------- glue / wrapper ------------------------------
def _extract_patches(x):
    """x: [B, C, H, W] (NCHW) -> [B, NPATCH, C*p*p], flatten order (c, ph, pw)."""
    b = x.shape[0]
    g = IMG // PATCH
    xp = x.reshape(b, CIN, g, PATCH, g, PATCH)
    xp = xp.transpose(0, 2, 4, 1, 3, 5)            # [B, gh, gw, C, p, p]
    return xp.reshape(b, g * g, PDIM)


def _build_mask(rows, nb):
    """Additive mask [rows, HEADS*KSEG]: 0 within a batch block, -1e30 elsewhere
    (other batch element, pad key columns).  Fully-masked padded query rows stay
    finite because -1e30 - (-1e30) == 0 after the max subtraction."""
    m = np.full((rows, KSEG), NEG, np.float32)
    for e in range(nb):
        lo, hi = e * SEQ, (e + 1) * SEQ
        m[lo:hi, lo:hi] = 0.0
    return jnp.asarray(np.tile(m, (1, HEADS)))


def _pack_params(p, rows, nb):
    """Pack natural params into lane-dense kernel slabs (plain JAX, outside kernel)."""
    f32, bf16 = jnp.float32, jnp.bfloat16
    scale = np.float32(1.0 / np.sqrt(DH))

    # [Wq^T*s | Wk^T | Wv^T | Wo^T] on rows 0:E, W1^T on rows E:2E -> [D, 2E, 4E] bf16
    wq_t = p['wqkv_t'][:, :, 0:EMB] * scale
    wk_t = p['wqkv_t'][:, :, EMB:2 * EMB]
    wv_t = p['wqkv_t'][:, :, 2 * EMB:3 * EMB]
    wqkvo = jnp.concatenate([wq_t, wk_t, wv_t, p['wo_t']], axis=2)      # [D, E, 4E]
    wbig = jnp.concatenate([wqkvo, p['w1_t']], axis=1).astype(bf16)     # [D, 2E, 4E]
    w2 = p['w2_t'].astype(bf16)                                         # [D, FF, E]

    # per-layer vector slab [D, 8, 128]:
    #   row 0: [bq*s | bk | bv | 0]   row 1: b1 (128 wide)
    #   rows 2..7: bo, g1, be1, b2, g2, be2  (lanes 0:E)
    def lanepad(a, w=4 * EMB):
        return jnp.zeros(a.shape[:-1] + (w,), f32).at[..., :a.shape[-1]].set(a)

    qkvb = jnp.concatenate([p['bqkv'][:, :, 0:EMB] * scale,
                            p['bqkv'][:, :, EMB:2 * EMB],
                            p['bqkv'][:, :, 2 * EMB:3 * EMB]], axis=2)  # [D, 1, 3E]
    lvec = jnp.concatenate([lanepad(qkvb), p['b1'],
                            lanepad(p['bo']), lanepad(p['g1']), lanepad(p['be1']),
                            lanepad(p['b2']), lanepad(p['g2']), lanepad(p['be2'])],
                           axis=1)                                      # [D, 8, 128] f32

    # head slab: [hw rows | hbias row | ln-gamma row | ln-beta row] -> [E+3, PADL] f32
    hw_pad = jnp.zeros((EMB, PADL), f32).at[:, :LBIN].set(p['hw_t'])
    hb_pad = jnp.zeros((1, PADL), f32).at[:, :LBIN].set(p['hbias'])
    hg_pad = jnp.zeros((1, PADL), f32).at[:, :EMB].set(p['hg'])
    hbe_pad = jnp.zeros((1, PADL), f32).at[:, :EMB].set(p['hb'])
    headp = jnp.concatenate([hw_pad, hb_pad, hg_pad, hbe_pad], axis=0)

    # patch-embed weight with the per-row additive term (cls / conv-bias / pos)
    # appended, so the wrapper's identity columns fold the add into the matmul.
    add = p['pos'].at[0].add(p['cls']).at[1:].add(p['patch_b'][None, :])   # [SEQ, EMB]
    add_rows = jnp.zeros((rows, EMB), f32)
    for e in range(nb):
        add_rows = add_rows.at[e * SEQ:(e + 1) * SEQ].set(add)
    pw_ext = jnp.concatenate([p['patch_w_t'], add_rows], axis=0)           # [PDIM+rows, E]

    return dict(wbig=wbig, w2=w2, lvec=lvec, headp=headp, pw_ext=pw_ext)


def _grid_steps():
    """v7x has 2 TensorCores/chip -> split the batch across a parallel grid.
    v5e/v6e (1 TC) keep the stacked grid-of-1 form (per perf review)."""
    try:
        kind = jax.devices()[0].device_kind.lower()
    except Exception:
        kind = ""
    return B if "v7" in kind else 1


def vit_forward(x, p, n_steps=None):
    b = x.shape[0]
    assert b == B, "kernel is specialized to the configured batch size"
    if n_steps is None:
        n_steps = _grid_steps()
    nb = b // n_steps                           # batch elements per grid step
    rows = _round_up(nb * SEQ, 8)               # sublane-aligned row count per step
    assert rows <= KSEG

    kp = _pack_params(p, rows, nb)
    mask = _build_mask(rows, nb)

    # per-step activation slab: [pixels | I_rows]; identity columns pick the
    # per-row additive term stored in pw_ext, so patch-embed is one matmul.
    patches = _extract_patches(x)                                        # [B, NPATCH, PDIM]
    pix = jnp.zeros((n_steps, rows, PDIM), x.dtype)
    for s in range(n_steps):
        for e in range(nb):
            pix = pix.at[s, e * SEQ + 1:(e + 1) * SEQ, :].set(patches[s * nb + e])
    eye = jnp.broadcast_to(jnp.eye(rows, dtype=x.dtype), (n_steps, rows, rows))
    pe = jnp.concatenate([pix, eye], axis=2).reshape(n_steps * rows, PDIM + rows)

    pd_ext = PDIM + rows
    out = pl.pallas_call(
        vit_kernel,
        out_shape=jax.ShapeDtypeStruct((n_steps * rows, PADL), jnp.float32),
        grid=(n_steps,),
        in_specs=[
            pl.BlockSpec((rows, pd_ext), lambda i: (i, 0)),              # pixels+eye
            pl.BlockSpec((pd_ext, EMB), lambda i: (0, 0)),               # pw_ext
            pl.BlockSpec((rows, HEADS * KSEG), lambda i: (0, 0)),        # attn mask
            pl.BlockSpec((DEPTH, 2 * EMB, 4 * EMB), lambda i: (0, 0, 0)),  # wbig (bf16)
            pl.BlockSpec((DEPTH, FF, EMB), lambda i: (0, 0, 0)),         # w2 (bf16)
            pl.BlockSpec((DEPTH, 8, PADL), lambda i: (0, 0, 0)),         # lvec
            pl.BlockSpec((EMB + 3, PADL), lambda i: (0, 0)),             # head slab
        ],
        out_specs=pl.BlockSpec((rows, PADL), lambda i: (i, 0)),
        compiler_params=pltpu.CompilerParams(dimension_semantics=("parallel",)),
    )(pe, kp['pw_ext'], mask, kp['wbig'], kp['w2'], kp['lvec'], kp['headp'])

    # CLS row of each batch element, first LBIN lanes
    cls_rows = jnp.asarray([s * rows + e * SEQ
                            for s in range(n_steps) for e in range(nb)])
    return out[cls_rows, :LBIN]


# ------------------------------ parameter init -------------------------------
def init_params(key):
    cnt = [0]

    def rnd(shape, std=0.02):
        cnt[0] += 1
        return (std * jax.random.normal(jax.random.fold_in(key, cnt[0]),
                                        shape)).astype(jnp.float32)

    p = {}
    # patch embed conv: weight [E, C, p, p] -> [PDIM, E] (pre-transposed)
    conv_w = rnd((EMB, PDIM), std=float(np.sqrt(2.0 / PDIM)))
    p['patch_w_t'] = conv_w.T
    p['patch_b'] = rnd((EMB,), std=0.01)
    p['cls'] = rnd((EMB,), std=0.02)
    p['pos'] = rnd((SEQ, EMB), std=0.02)

    def stack(fn):
        return jnp.stack([fn() for _ in range(DEPTH)], axis=0)

    p['wqkv_t'] = stack(lambda: rnd((3 * EMB, EMB)).T)          # [D, E, 3E]
    p['bqkv']   = stack(lambda: rnd((1, 3 * EMB), std=0.01))
    p['wo_t']   = stack(lambda: rnd((EMB, EMB)).T)              # [D, E, E]
    p['bo']     = stack(lambda: rnd((1, EMB), std=0.01))
    p['g1']     = stack(lambda: 1.0 + rnd((1, EMB), std=0.01))
    p['be1']    = stack(lambda: rnd((1, EMB), std=0.01))
    p['w1_t']   = stack(lambda: rnd((FF, EMB)).T)               # [D, E, FF]
    p['b1']     = stack(lambda: rnd((1, FF), std=0.01))
    p['w2_t']   = stack(lambda: rnd((EMB, FF)).T)               # [D, FF, E]
    p['b2']     = stack(lambda: rnd((1, EMB), std=0.01))
    p['g2']     = stack(lambda: 1.0 + rnd((1, EMB), std=0.01))
    p['be2']    = stack(lambda: rnd((1, EMB), std=0.01))
    p['hg']     = 1.0 + rnd((1, EMB), std=0.01)
    p['hb']     = rnd((1, EMB), std=0.01)
    p['hw_t']   = rnd((LBIN, EMB)).T                            # [E, LBIN]
    p['hbias']  = rnd((1, LBIN), std=0.01)
    return p


# ------------------------------ pure-JAX reference ---------------------------
def reference_forward(x, p):
    b = x.shape[0]
    patches = _extract_patches(x)                                        # [B, N, PDIM]
    emb = patches @ p['patch_w_t'] + p['patch_b'][None, None, :]         # conv-as-matmul
    cls = jnp.broadcast_to(p['cls'][None, None, :], (b, 1, EMB))
    z = jnp.concatenate([cls, emb], axis=1) + p['pos'][None]
    scale = 1.0 / np.sqrt(DH)

    def ln(t, g, bb):
        mu = jnp.mean(t, -1, keepdims=True)
        var = jnp.mean((t - mu) ** 2, -1, keepdims=True)
        return (t - mu) / jnp.sqrt(var + LN_EPS) * g + bb

    for l in range(DEPTH):
        qkv = z @ p['wqkv_t'][l] + p['bqkv'][l]
        q, k, v = jnp.split(qkv, 3, axis=-1)
        q = q.reshape(b, SEQ, HEADS, DH).transpose(0, 2, 1, 3) * scale
        k = k.reshape(b, SEQ, HEADS, DH).transpose(0, 2, 1, 3)
        v = v.reshape(b, SEQ, HEADS, DH).transpose(0, 2, 1, 3)
        s = q @ jnp.swapaxes(k, -1, -2)
        a = jax.nn.softmax(s, axis=-1)
        o = (a @ v).transpose(0, 2, 1, 3).reshape(b, SEQ, EMB)
        o = o @ p['wo_t'][l] + p['bo'][l]
        z = ln(z + o, p['g1'][l], p['be1'][l])
        h1 = jax.nn.gelu(z @ p['w1_t'][l] + p['b1'][l], approximate=False)
        f = h1 @ p['w2_t'][l] + p['b2'][l]
        z = ln(z + f, p['g2'][l], p['be2'][l])

    c = ln(z[:, 0], p['hg'], p['hb'])
    logits = c @ p['hw_t'] + p['hbias']
    return jax.nn.sigmoid(logits)


# ----------------------------------- main ------------------------------------
if __name__ == "__main__":
    key = jax.random.PRNGKey(0)
    kx, kp = jax.random.split(key)
    x = jax.random.normal(kx, (B, CIN, IMG, IMG), dtype=jnp.float32)
    params = init_params(kp)

    fwd = jax.jit(vit_forward)
    out = fwd(x, params)
    out = jax.block_until_ready(out)
    assert out.shape == (B, LBIN), out.shape

    ref = reference_forward(x, params)
    np.testing.assert_allclose(np.asarray(out), np.asarray(ref), atol=1e-3, rtol=1e-3)

    print("KERNEL_OK")
</pallas_src>

<mosaic_0001>
module attributes {stable_mosaic.version = 11 : i64} {
  func.func @vit_kernel(%arg0: i32, %arg1: memref<40x88xf32, #tpu.memory_space<vmem>>, %arg2: memref<88x32xf32, #tpu.memory_space<vmem>>, %arg3: memref<40x256xf32, #tpu.memory_space<vmem>>, %arg4: memref<2x64x128xbf16, #tpu.memory_space<vmem>>, %arg5: memref<2x128x32xbf16, #tpu.memory_space<vmem>>, %arg6: memref<2x8x128xf32, #tpu.memory_space<vmem>>, %arg7: memref<35x128xf32, #tpu.memory_space<vmem>>, %arg8: memref<40x128xf32, #tpu.memory_space<vmem>>) attributes {dimension_semantics = [#tpu.dimension_semantics<parallel>], iteration_bounds = array<i64: 1>, scalar_prefetch = 0 : i64, scratch_operands = 0 : i64, tpu.core_type = #tpu.core_type<tc>, window_params = [{transform_indices = @transform_0, window_bounds = array<i64: 40, 88>}, {pipeline_mode = #tpu.pipeline_mode<synchronous>, transform_indices = @transform_1, window_bounds = array<i64: 88, 32>}, {pipeline_mode = #tpu.pipeline_mode<synchronous>, transform_indices = @transform_2, window_bounds = array<i64: 40, 256>}, {pipeline_mode = #tpu.pipeline_mode<synchronous>, transform_indices = @transform_3, window_bounds = array<i64: 2, 64, 128>}, {pipeline_mode = #tpu.pipeline_mode<synchronous>, transform_indices = @transform_4, window_bounds = array<i64: 2, 128, 32>}, {pipeline_mode = #tpu.pipeline_mode<synchronous>, transform_indices = @transform_5, window_bounds = array<i64: 2, 8, 128>}, {pipeline_mode = #tpu.pipeline_mode<synchronous>, transform_indices = @transform_6, window_bounds = array<i64: 35, 128>}, {transform_indices = @transform_7, window_bounds = array<i64: 40, 128>}]} {
    %c0 = arith.constant 0 : index
    %c0_0 = arith.constant 0 : index
    %0 = vector.load %arg1[%c0, %c0_0] : memref<40x88xf32, #tpu.memory_space<vmem>>, vector<40x88xf32>
    %c0_1 = arith.constant 0 : index
    %c0_2 = arith.constant 0 : index
    %1 = vector.load %arg2[%c0_1, %c0_2] : memref<88x32xf32, #tpu.memory_space<vmem>>, vector<88x32xf32>
    %cst = arith.constant dense<0.000000e+00> : vector<40x32xf32>
    %2 = tpu.matmul %0, %1, %cst {dimension_numbers = #tpu.dot_dimension_numbers<[1], [0], [0], [1], [0, 0, 1, 1], [], []>} : vector<40x88xf32>, vector<88x32xf32>, vector<40x32xf32> -> vector<40x32xf32>
    %c0_3 = arith.constant 0 : index
    %c0_4 = arith.constant 0 : index
    %3 = vector.load %arg3[%c0_3, %c0_4] : memref<40x256xf32, #tpu.memory_space<vmem>>, vector<40x256xf32>
    %4 = tpu.iota {dimensions = array<i32: 1>} : vector<1x32xi32>
    %c0_i32 = arith.constant 0 : i32
    %5 = vector.broadcast %c0_i32 : i32 to vector<1x32xi32>
    %6 = arith.cmpi sge, %4, %5 : vector<1x32xi32>
    %c8_i32 = arith.constant 8 : i32
    %7 = vector.broadcast %c8_i32 : i32 to vector<1x32xi32>
    %8 = arith.cmpi slt, %4, %7 : vector<1x32xi32>
    %9 = arith.andi %6, %8 : vector<1x32xi1>
    %c8_i32_5 = arith.constant 8 : i32
    %10 = vector.broadcast %c8_i32_5 : i32 to vector<1x32xi32>
    %11 = arith.cmpi sge, %4, %10 : vector<1x32xi32>
    %c16_i32 = arith.constant 16 : i32
    %12 = vector.broadcast %c16_i32 : i32 to vector<1x32xi32>
    %13 = arith.cmpi slt, %4, %12 : vector<1x32xi32>
    %14 = arith.andi %11, %13 : vector<1x32xi1>
    %c16_i32_6 = arith.constant 16 : i32
    %15 = vector.broadcast %c16_i32_6 : i32 to vector<1x32xi32>
    %16 = arith.cmpi sge, %4, %15 : vector<1x32xi32>
    %c24_i32 = arith.constant 24 : i32
    %17 = vector.broadcast %c24_i32 : i32 to vector<1x32xi32>
    %18 = arith.cmpi slt, %4, %17 : vector<1x32xi32>
    %19 = arith.andi %16, %18 : vector<1x32xi1>
    %c24_i32_7 = arith.constant 24 : i32
    %20 = vector.broadcast %c24_i32_7 : i32 to vector<1x32xi32>
    %21 = arith.cmpi sge, %4, %20 : vector<1x32xi32>
    %c32_i32 = arith.constant 32 : i32
    %22 = vector.broadcast %c32_i32 : i32 to vector<1x32xi32>
    %23 = arith.cmpi slt, %4, %22 : vector<1x32xi32>
    %24 = arith.andi %21, %23 : vector<1x32xi1>
    %cst_8 = arith.constant 0.000000e+00 : f32
    %25 = vector.broadcast %cst_8 : f32 to vector<24x32xf32>
    %c0_9 = arith.constant 0 : index
    %c0_10 = arith.constant 0 : index
    %c0_11 = arith.constant 0 : index
    %26 = vector.load %arg4[%c0_9, %c0_10, %c0_11] : memref<2x64x128xbf16, #tpu.memory_space<vmem>>, vector<1x64x128xbf16>
    %27 = vector.shape_cast %26 : vector<1x64x128xbf16> to vector<64x128xbf16>
    %c0_12 = arith.constant 0 : index
    %c0_13 = arith.constant 0 : index
    %c0_14 = arith.constant 0 : index
    %28 = vector.load %arg6[%c0_12, %c0_13, %c0_14] : memref<2x8x128xf32, #tpu.memory_space<vmem>>, vector<1x8x128xf32>
    %29 = vector.shape_cast %28 : vector<1x8x128xf32> to vector<8x128xf32>
    %30 = arith.truncf %2 : vector<40x32xf32> to vector<40x32xbf16>
    %31 = vector.extract_strided_slice %27 {offsets = [0, 0], sizes = [32, 128], strides = [1, 1]} : vector<64x128xbf16> to vector<32x128xbf16>
    %cst_15 = arith.constant dense<0.000000e+00> : vector<40x128xf32>
    %32 = tpu.matmul %30, %31, %cst_15 {dimension_numbers = #tpu.dot_dimension_numbers<[1], [0], [0], [1], [0, 0, 1, 1], [], []>} : vector<40x32xbf16>, vector<32x128xbf16>, vector<40x128xf32> -> vector<40x128xf32>
    %33 = vector.extract_strided_slice %29 {offsets = [0, 0], sizes = [1, 128], strides = [1, 1]} : vector<8x128xf32> to vector<1x128xf32>
    %34 = vector.broadcast %33 : vector<1x128xf32> to vector<40x128xf32>
    %35 = arith.addf %32, %34 : vector<40x128xf32>
    %36 = vector.extract_strided_slice %35 {offsets = [0, 0], sizes = [40, 32], strides = [1, 1]} : vector<40x128xf32> to vector<40x32xf32>
    %37 = vector.extract_strided_slice %35 {offsets = [0, 32], sizes = [40, 32], strides = [1, 1]} : vector<40x128xf32> to vector<40x32xf32>
    %38 = vector.extract_strided_slice %35 {offsets = [0, 64], sizes = [40, 32], strides = [1, 1]} : vector<40x128xf32> to vector<40x32xf32>
    %cst_16 = arith.constant 0.000000e+00 : f32
    %39 = vector.shape_cast %9 : vector<1x32xi1> to vector<1x32xi1>
    %40 = vector.broadcast %39 : vector<1x32xi1> to vector<40x32xi1>
    %41 = vector.broadcast %cst_16 : f32 to vector<40x32xf32>
    %42 = arith.select %40, %37, %41 : vector<40x32xi1>, vector<40x32xf32>
    %cst_17 = arith.constant 0.000000e+00 : f32
    %43 = vector.shape_cast %9 : vector<1x32xi1> to vector<1x32xi1>
    %44 = vector.broadcast %43 : vector<1x32xi1> to vector<40x32xi1>
    %45 = vector.broadcast %cst_17 : f32 to vector<40x32xf32>
    %46 = arith.select %44, %38, %45 : vector<40x32xi1>, vector<40x32xf32>
    %cst_18 = arith.constant 0.000000e+00 : f32
    %47 = vector.shape_cast %14 : vector<1x32xi1> to vector<1x32xi1>
    %48 = vector.broadcast %47 : vector<1x32xi1> to vector<40x32xi1>
    %49 = vector.broadcast %cst_18 : f32 to vector<40x32xf32>
    %50 = arith.select %48, %37, %49 : vector<40x32xi1>, vector<40x32xf32>
    %cst_19 = arith.constant 0.000000e+00 : f32
    %51 = vector.shape_cast %14 : vector<1x32xi1> to vector<1x32xi1>
    %52 = vector.broadcast %51 : vector<1x32xi1> to vector<40x32xi1>
    %53 = vector.broadcast %cst_19 : f32 to vector<40x32xf32>
    %54 = arith.select %52, %38, %53 : vector<40x32xi1>, vector<40x32xf32>
    %cst_20 = arith.constant 0.000000e+00 : f32
    %55 = vector.shape_cast %19 : vector<1x32xi1> to vector<1x32xi1>
    %56 = vector.broadcast %55 : vector<1x32xi1> to vector<40x32xi1>
    %57 = vector.broadcast %cst_20 : f32 to vector<40x32xf32>
    %58 = arith.select %56, %37, %57 : vector<40x32xi1>, vector<40x32xf32>
    %cst_21 = arith.constant 0.000000e+00 : f32
    %59 = vector.shape_cast %19 : vector<1x32xi1> to vector<1x32xi1>
    %60 = vector.broadcast %59 : vector<1x32xi1> to vector<40x32xi1>
    %61 = vector.broadcast %cst_21 : f32 to vector<40x32xf32>
    %62 = arith.select %60, %38, %61 : vector<40x32xi1>, vector<40x32xf32>
    %cst_22 = arith.constant 0.000000e+00 : f32
    %63 = vector.shape_cast %24 : vector<1x32xi1> to vector<1x32xi1>
    %64 = vector.broadcast %63 : vector<1x32xi1> to vector<40x32xi1>
    %65 = vector.broadcast %cst_22 : f32 to vector<40x32xf32>
    %66 = arith.select %64, %37, %65 : vector<40x32xi1>, vector<40x32xf32>
    %cst_23 = arith.constant 0.000000e+00 : f32
    %67 = vector.shape_cast %24 : vector<1x32xi1> to vector<1x32xi1>
    %68 = vector.broadcast %67 : vector<1x32xi1> to vector<40x32xi1>
    %69 = vector.broadcast %cst_23 : f32 to vector<40x32xf32>
    %70 = arith.select %68, %38, %69 : vector<40x32xi1>, vector<40x32xf32>
    %71 = tpu.concatenate %42, %25, %50, %25, %58, %25, %66, %25 in 0 : vector<40x32xf32>, vector<24x32xf32>, vector<40x32xf32>, vector<24x32xf32>, vector<40x32xf32>, vector<24x32xf32>, vector<40x32xf32>, vector<24x32xf32> -> vector<256x32xf32>
    %72 = arith.truncf %71 : vector<256x32xf32> to vector<256x32xbf16>
    %73 = tpu.concatenate %46, %25, %54, %25, %62, %25, %70, %25 in 0 : vector<40x32xf32>, vector<24x32xf32>, vector<40x32xf32>, vector<24x32xf32>, vector<40x32xf32>, vector<24x32xf32>, vector<40x32xf32>, vector<24x32xf32> -> vector<256x32xf32>
    %74 = arith.truncf %73 : vector<256x32xf32> to vector<256x32xbf16>
    %75 = arith.truncf %36 : vector<40x32xf32> to vector<40x32xbf16>
    %cst_24 = arith.constant dense<0.000000e+00> : vector<40x256xf32>
    %76 = tpu.matmul %75, %72, %cst_24 {dimension_numbers = #tpu.dot_dimension_numbers<[1], [1], [0], [0], [0, 0, 1, 0], [], []>} : vector<40x32xbf16>, vector<256x32xbf16>, vector<40x256xf32> -> vector<40x256xf32>
    %77 = arith.addf %76, %3 : vector<40x256xf32>
    %78 = vector.extract_strided_slice %77 {offsets = [0, 0], sizes = [40, 64], strides = [1, 1]} : vector<40x256xf32> to vector<40x64xf32>
    %cst_25 = arith.constant dense<0xFF800000> : vector<40xf32>
    %79 = vector.multi_reduction <maximumf>, %78, %cst_25 [1] : vector<40x64xf32> to vector<40xf32>
    %80 = vector.shape_cast %79 : vector<40xf32> to vector<40x1xf32>
    %81 = vector.broadcast %80 : vector<40x1xf32> to vector<40x64xf32>
    %82 = arith.subf %78, %81 : vector<40x64xf32>
    %83 = math.exp %82 : vector<40x64xf32>
    %cst_26 = arith.constant dense<0.000000e+00> : vector<40xf32>
    %84 = vector.multi_reduction <add>, %83, %cst_26 [1] : vector<40x64xf32> to vector<40xf32>
    %85 = vector.shape_cast %84 : vector<40xf32> to vector<40x1xf32>
    %86 = tpu.reciprocal %85 : vector<40x1xf32> -> vector<40x1xf32>
    %87 = vector.broadcast %86 : vector<40x1xf32> to vector<40x64xf32>
    %88 = arith.mulf %83, %87 : vector<40x64xf32>
    %89 = vector.extract_strided_slice %77 {offsets = [0, 64], sizes = [40, 64], strides = [1, 1]} : vector<40x256xf32> to vector<40x64xf32>
    %cst_27 = arith.constant dense<0xFF800000> : vector<40xf32>
    %90 = vector.multi_reduction <maximumf>, %89, %cst_27 [1] : vector<40x64xf32> to vector<40xf32>
    %91 = vector.shape_cast %90 : vector<40xf32> to vector<40x1xf32>
    %92 = vector.broadcast %91 : vector<40x1xf32> to vector<40x64xf32>
    %93 = arith.subf %89, %92 : vector<40x64xf32>
    %94 = math.exp %93 : vector<40x64xf32>
    %cst_28 = arith.constant dense<0.000000e+00> : vector<40xf32>
    %95 = vector.multi_reduction <add>, %94, %cst_28 [1] : vector<40x64xf32> to vector<40xf32>
    %96 = vector.shape_cast %95 : vector<40xf32> to vector<40x1xf32>
    %97 = tpu.reciprocal %96 : vector<40x1xf32> -> vector<40x1xf32>
    %98 = vector.broadcast %97 : vector<40x1xf32> to vector<40x64xf32>
    %99 = arith.mulf %94, %98 : vector<40x64xf32>
    %100 = vector.extract_strided_slice %77 {offsets = [0, 128], sizes = [40, 64], strides = [1, 1]} : vector<40x256xf32> to vector<40x64xf32>
    %cst_29 = arith.constant dense<0xFF800000> : vector<40xf32>
    %101 = vector.multi_reduction <maximumf>, %100, %cst_29 [1] : vector<40x64xf32> to vector<40xf32>
    %102 = vector.shape_cast %101 : vector<40xf32> to vector<40x1xf32>
    %103 = vector.broadcast %102 : vector<40x1xf32> to vector<40x64xf32>
    %104 = arith.subf %100, %103 : vector<40x64xf32>
    %105 = math.exp %104 : vector<40x64xf32>
    %cst_30 = arith.constant dense<0.000000e+00> : vector<40xf32>
    %106 = vector.multi_reduction <add>, %105, %cst_30 [1] : vector<40x64xf32> to vector<40xf32>
    %107 = vector.shape_cast %106 : vector<40xf32> to vector<40x1xf32>
    %108 = tpu.reciprocal %107 : vector<40x1xf32> -> vector<40x1xf32>
    %109 = vector.broadcast %108 : vector<40x1xf32> to vector<40x64xf32>
    %110 = arith.mulf %105, %109 : vector<40x64xf32>
    %111 = vector.extract_strided_slice %77 {offsets = [0, 192], sizes = [40, 64], strides = [1, 1]} : vector<40x256xf32> to vector<40x64xf32>
    %cst_31 = arith.constant dense<0xFF800000> : vector<40xf32>
    %112 = vector.multi_reduction <maximumf>, %111, %cst_31 [1] : vector<40x64xf32> to vector<40xf32>
    %113 = vector.shape_cast %112 : vector<40xf32> to vector<40x1xf32>
    %114 = vector.broadcast %113 : vector<40x1xf32> to vector<40x64xf32>
    %115 = arith.subf %111, %114 : vector<40x64xf32>
    %116 = math.exp %115 : vector<40x64xf32>
    %cst_32 = arith.constant dense<0.000000e+00> : vector<40xf32>
    %117 = vector.multi_reduction <add>, %116, %cst_32 [1] : vector<40x64xf32> to vector<40xf32>
    %118 = vector.shape_cast %117 : vector<40xf32> to vector<40x1xf32>
    %119 = tpu.reciprocal %118 : vector<40x1xf32> -> vector<40x1xf32>
    %120 = vector.broadcast %119 : vector<40x1xf32> to vector<40x64xf32>
    %121 = arith.mulf %116, %120 : vector<40x64xf32>
    %122 = tpu.concatenate %88, %99, %110, %121 in 1 : vector<40x64xf32>, vector<40x64xf32>, vector<40x64xf32>, vector<40x64xf32> -> vector<40x256xf32>
    %123 = arith.truncf %122 : vector<40x256xf32> to vector<40x256xbf16>
    %cst_33 = arith.constant dense<0.000000e+00> : vector<40x32xf32>
    %124 = tpu.matmul %123, %74, %cst_33 {dimension_numbers = #tpu.dot_dimension_numbers<[1], [0], [0], [1], [0, 0, 1, 1], [], []>} : vector<40x256xbf16>, vector<256x32xbf16>, vector<40x32xf32> -> vector<40x32xf32>
    %125 = arith.truncf %124 : vector<40x32xf32> to vector<40x32xbf16>
    %126 = vector.extract_strided_slice %27 {offsets = [0, 96], sizes = [32, 32], strides = [1, 1]} : vector<64x128xbf16> to vector<32x32xbf16>
    %cst_34 = arith.constant dense<0.000000e+00> : vector<40x32xf32>
    %127 = tpu.matmul %125, %126, %cst_34 {dimension_numbers = #tpu.dot_dimension_numbers<[1], [0], [0], [1], [0, 0, 1, 1], [], []>} : vector<40x32xbf16>, vector<32x32xbf16>, vector<40x32xf32> -> vector<40x32xf32>
    %128 = vector.extract_strided_slice %29 {offsets = [2, 0], sizes = [1, 32], strides = [1, 1]} : vector<8x128xf32> to vector<1x32xf32>
    %129 = vector.broadcast %128 : vector<1x32xf32> to vector<40x32xf32>
    %130 = arith.addf %127, %129 : vector<40x32xf32>
    %131 = arith.addf %2, %130 : vector<40x32xf32>
    %132 = vector.extract_strided_slice %29 {offsets = [3, 0], sizes = [1, 32], strides = [1, 1]} : vector<8x128xf32> to vector<1x32xf32>
    %133 = vector.extract_strided_slice %29 {offsets = [4, 0], sizes = [1, 32], strides = [1, 1]} : vector<8x128xf32> to vector<1x32xf32>
    %cst_35 = arith.constant dense<0.000000e+00> : vector<40xf32>
    %134 = vector.multi_reduction <add>, %131, %cst_35 [1] : vector<40x32xf32> to vector<40xf32>
    %135 = vector.shape_cast %134 : vector<40xf32> to vector<40x1xf32>
    %cst_36 = arith.constant 3.200000e+01 : f32
    %136 = vector.broadcast %cst_36 : f32 to vector<40x1xf32>
    %137 = arith.divf %135, %136 : vector<40x1xf32>
    %138 = vector.broadcast %137 : vector<40x1xf32> to vector<40x32xf32>
    %139 = arith.subf %131, %138 : vector<40x32xf32>
    %140 = arith.mulf %139, %139 : vector<40x32xf32>
    %cst_37 = arith.constant dense<0.000000e+00> : vector<40xf32>
    %141 = vector.multi_reduction <add>, %140, %cst_37 [1] : vector<40x32xf32> to vector<40xf32>
    %142 = vector.shape_cast %141 : vector<40xf32> to vector<40x1xf32>
    %cst_38 = arith.constant 3.200000e+01 : f32
    %143 = vector.broadcast %cst_38 : f32 to vector<40x1xf32>
    %144 = arith.divf %142, %143 : vector<40x1xf32>
    %cst_39 = arith.constant 9.99999974E-6 : f32
    %145 = vector.broadcast %cst_39 : f32 to vector<40x1xf32>
    %146 = arith.addf %144, %145 : vector<40x1xf32>
    %147 = math.rsqrt %146 : vector<40x1xf32>
    %148 = vector.broadcast %147 : vector<40x1xf32> to vector<40x32xf32>
    %149 = arith.mulf %139, %148 : vector<40x32xf32>
    %150 = vector.broadcast %132 : vector<1x32xf32> to vector<40x32xf32>
    %151 = arith.mulf %149, %150 : vector<40x32xf32>
    %152 = vector.broadcast %133 : vector<1x32xf32> to vector<40x32xf32>
    %153 = arith.addf %151, %152 : vector<40x32xf32>
    %154 = arith.truncf %153 : vector<40x32xf32> to vector<40x32xbf16>
    %155 = vector.extract_strided_slice %27 {offsets = [32, 0], sizes = [32, 128], strides = [1, 1]} : vector<64x128xbf16> to vector<32x128xbf16>
    %cst_40 = arith.constant dense<0.000000e+00> : vector<40x128xf32>
    %156 = tpu.matmul %154, %155, %cst_40 {dimension_numbers = #tpu.dot_dimension_numbers<[1], [0], [0], [1], [0, 0, 1, 1], [], []>} : vector<40x32xbf16>, vector<32x128xbf16>, vector<40x128xf32> -> vector<40x128xf32>
    %157 = vector.extract_strided_slice %29 {offsets = [1, 0], sizes = [1, 128], strides = [1, 1]} : vector<8x128xf32> to vector<1x128xf32>
    %158 = vector.broadcast %157 : vector<1x128xf32> to vector<40x128xf32>
    %159 = arith.addf %156, %158 : vector<40x128xf32>
    %cst_41 = arith.constant 5.000000e-01 : f32
    %160 = vector.broadcast %cst_41 : f32 to vector<40x128xf32>
    %161 = arith.mulf %160, %159 : vector<40x128xf32>
    %cst_42 = arith.constant 0.707106769 : f32
    %162 = vector.broadcast %cst_42 : f32 to vector<40x128xf32>
    %163 = arith.mulf %159, %162 : vector<40x128xf32>
    %cst_43 = arith.constant 0.000000e+00 : f32
    %164 = vector.broadcast %cst_43 : f32 to vector<40x128xf32>
    %165 = arith.cmpf oge, %163, %164 : vector<40x128xf32>
    %cst_44 = arith.constant 1.000000e+00 : f32
    %cst_45 = arith.constant -1.000000e+00 : f32
    %166 = vector.broadcast %cst_44 : f32 to vector<40x128xf32>
    %167 = vector.broadcast %cst_45 : f32 to vector<40x128xf32>
    %168 = arith.select %165, %166, %167 : vector<40x128xi1>, vector<40x128xf32>
    %169 = math.absf %163 : vector<40x128xf32>
    %cst_46 = arith.constant 0.327591091 : f32
    %170 = vector.broadcast %cst_46 : f32 to vector<40x128xf32>
    %171 = arith.mulf %170, %169 : vector<40x128xf32>
    %cst_47 = arith.constant 1.000000e+00 : f32
    %172 = vector.broadcast %cst_47 : f32 to vector<40x128xf32>
    %173 = arith.addf %172, %171 : vector<40x128xf32>
    %cst_48 = arith.constant 1.000000e+00 : f32
    %174 = vector.broadcast %cst_48 : f32 to vector<40x128xf32>
    %175 = arith.divf %174, %173 : vector<40x128xf32>
    %cst_49 = arith.constant 1.06140542 : f32
    %176 = vector.broadcast %cst_49 : f32 to vector<40x128xf32>
    %177 = arith.mulf %176, %175 : vector<40x128xf32>
    %cst_50 = arith.constant -1.45315206 : f32
    %178 = vector.broadcast %cst_50 : f32 to vector<40x128xf32>
    %179 = arith.addf %177, %178 : vector<40x128xf32>
    %180 = arith.mulf %179, %175 : vector<40x128xf32>
    %cst_51 = arith.constant 1.42141378 : f32
    %181 = vector.broadcast %cst_51 : f32 to vector<40x128xf32>
    %182 = arith.addf %180, %181 : vector<40x128xf32>
    %183 = arith.mulf %182, %175 : vector<40x128xf32>
    %cst_52 = arith.constant -0.284496725 : f32
    %184 = vector.broadcast %cst_52 : f32 to vector<40x128xf32>
    %185 = arith.addf %183, %184 : vector<40x128xf32>
    %186 = arith.mulf %185, %175 : vector<40x128xf32>
    %cst_53 = arith.constant 0.254829586 : f32
    %187 = vector.broadcast %cst_53 : f32 to vector<40x128xf32>
    %188 = arith.addf %186, %187 : vector<40x128xf32>
    %189 = arith.mulf %188, %175 : vector<40x128xf32>
    %cst_54 = arith.constant 0.000000e+00 : f32
    %190 = vector.broadcast %cst_54 : f32 to vector<40x128xf32>
    %191 = arith.subf %190, %169 : vector<40x128xf32>
    %192 = arith.mulf %191, %169 : vector<40x128xf32>
    %193 = math.exp %192 : vector<40x128xf32>
    %194 = arith.mulf %189, %193 : vector<40x128xf32>
    %cst_55 = arith.constant 1.000000e+00 : f32
    %195 = vector.broadcast %cst_55 : f32 to vector<40x128xf32>
    %196 = arith.subf %195, %194 : vector<40x128xf32>
    %197 = arith.mulf %168, %196 : vector<40x128xf32>
    %cst_56 = arith.constant 1.000000e+00 : f32
    %198 = vector.broadcast %cst_56 : f32 to vector<40x128xf32>
    %199 = arith.addf %198, %197 : vector<40x128xf32>
    %200 = arith.mulf %161, %199 : vector<40x128xf32>
    %201 = arith.truncf %200 : vector<40x128xf32> to vector<40x128xbf16>
    %c0_57 = arith.constant 0 : index
    %c0_58 = arith.constant 0 : index
    %c0_59 = arith.constant 0 : index
    %202 = vector.load %arg5[%c0_57, %c0_58, %c0_59] : memref<2x128x32xbf16, #tpu.memory_space<vmem>>, vector<1x128x32xbf16>
    %203 = vector.shape_cast %202 : vector<1x128x32xbf16> to vector<128x32xbf16>
    %cst_60 = arith.constant dense<0.000000e+00> : vector<40x32xf32>
    %204 = tpu.matmul %201, %203, %cst_60 {dimension_numbers = #tpu.dot_dimension_numbers<[1], [0], [0], [1], [0, 0, 1, 1], [], []>} : vector<40x128xbf16>, vector<128x32xbf16>, vector<40x32xf32> -> vector<40x32xf32>
    %205 = vector.extract_strided_slice %29 {offsets = [5, 0], sizes = [1, 32], strides = [1, 1]} : vector<8x128xf32> to vector<1x32xf32>
    %206 = vector.broadcast %205 : vector<1x32xf32> to vector<40x32xf32>
    %207 = arith.addf %204, %206 : vector<40x32xf32>
    %208 = arith.addf %153, %207 : vector<40x32xf32>
    %209 = vector.extract_strided_slice %29 {offsets = [6, 0], sizes = [1, 32], strides = [1, 1]} : vector<8x128xf32> to vector<1x32xf32>
    %210 = vector.extract_strided_slice %29 {offsets = [7, 0], sizes = [1, 32], strides = [1, 1]} : vector<8x128xf32> to vector<1x32xf32>
    %cst_61 = arith.constant dense<0.000000e+00> : vector<40xf32>
    %211 = vector.multi_reduction <add>, %208, %cst_61 [1] : vector<40x32xf32> to vector<40xf32>
    %212 = vector.shape_cast %211 : vector<40xf32> to vector<40x1xf32>
    %cst_62 = arith.constant 3.200000e+01 : f32
    %213 = vector.broadcast %cst_62 : f32 to vector<40x1xf32>
    %214 = arith.divf %212, %213 : vector<40x1xf32>
    %215 = vector.broadcast %214 : vector<40x1xf32> to vector<40x32xf32>
    %216 = arith.subf %208, %215 : vector<40x32xf32>
    %217 = arith.mulf %216, %216 : vector<40x32xf32>
    %cst_63 = arith.constant dense<0.000000e+00> : vector<40xf32>
    %218 = vector.multi_reduction <add>, %217, %cst_63 [1] : vector<40x32xf32> to vector<40xf32>
    %219 = vector.shape_cast %218 : vector<40xf32> to vector<40x1xf32>
    %cst_64 = arith.constant 3.200000e+01 : f32
    %220 = vector.broadcast %cst_64 : f32 to vector<40x1xf32>
    %221 = arith.divf %219, %220 : vector<40x1xf32>
    %cst_65 = arith.constant 9.99999974E-6 : f32
    %222 = vector.broadcast %cst_65 : f32 to vector<40x1xf32>
    %223 = arith.addf %221, %222 : vector<40x1xf32>
    %224 = math.rsqrt %223 : vector<40x1xf32>
    %225 = vector.broadcast %224 : vector<40x1xf32> to vector<40x32xf32>
    %226 = arith.mulf %216, %225 : vector<40x32xf32>
    %227 = vector.broadcast %209 : vector<1x32xf32> to vector<40x32xf32>
    %228 = arith.mulf %226, %227 : vector<40x32xf32>
    %229 = vector.broadcast %210 : vector<1x32xf32> to vector<40x32xf32>
    %230 = arith.addf %228, %229 : vector<40x32xf32>
    %c1 = arith.constant 1 : index
    %c0_66 = arith.constant 0 : index
    %c0_67 = arith.constant 0 : index
    %231 = vector.load %arg4[%c1, %c0_66, %c0_67] : memref<2x64x128xbf16, #tpu.memory_space<vmem>>, vector<1x64x128xbf16>
    %232 = vector.shape_cast %231 : vector<1x64x128xbf16> to vector<64x128xbf16>
    %c1_68 = arith.constant 1 : index
    %c0_69 = arith.constant 0 : index
    %c0_70 = arith.constant 0 : index
    %233 = vector.load %arg6[%c1_68, %c0_69, %c0_70] : memref<2x8x128xf32, #tpu.memory_space<vmem>>, vector<1x8x128xf32>
    %234 = vector.shape_cast %233 : vector<1x8x128xf32> to vector<8x128xf32>
    %235 = arith.truncf %230 : vector<40x32xf32> to vector<40x32xbf16>
    %236 = vector.extract_strided_slice %232 {offsets = [0, 0], sizes = [32, 128], strides = [1, 1]} : vector<64x128xbf16> to vector<32x128xbf16>
    %cst_71 = arith.constant dense<0.000000e+00> : vector<40x128xf32>
    %237 = tpu.matmul %235, %236, %cst_71 {dimension_numbers = #tpu.dot_dimension_numbers<[1], [0], [0], [1], [0, 0, 1, 1], [], []>} : vector<40x32xbf16>, vector<32x128xbf16>, vector<40x128xf32> -> vector<40x128xf32>
    %238 = vector.extract_strided_slice %234 {offsets = [0, 0], sizes = [1, 128], strides = [1, 1]} : vector<8x128xf32> to vector<1x128xf32>
    %239 = vector.broadcast %238 : vector<1x128xf32> to vector<40x128xf32>
    %240 = arith.addf %237, %239 : vector<40x128xf32>
    %241 = vector.extract_strided_slice %240 {offsets = [0, 0], sizes = [40, 32], strides = [1, 1]} : vector<40x128xf32> to vector<40x32xf32>
    %242 = vector.extract_strided_slice %240 {offsets = [0, 32], sizes = [40, 32], strides = [1, 1]} : vector<40x128xf32> to vector<40x32xf32>
    %243 = vector.extract_strided_slice %240 {offsets = [0, 64], sizes = [40, 32], strides = [1, 1]} : vector<40x128xf32> to vector<40x32xf32>
    %cst_72 = arith.constant 0.000000e+00 : f32
    %244 = vector.shape_cast %9 : vector<1x32xi1> to vector<1x32xi1>
    %245 = vector.broadcast %244 : vector<1x32xi1> to vector<40x32xi1>
    %246 = vector.broadcast %cst_72 : f32 to vector<40x32xf32>
    %247 = arith.select %245, %242, %246 : vector<40x32xi1>, vector<40x32xf32>
    %cst_73 = arith.constant 0.000000e+00 : f32
    %248 = vector.shape_cast %9 : vector<1x32xi1> to vector<1x32xi1>
    %249 = vector.broadcast %248 : vector<1x32xi1> to vector<40x32xi1>
    %250 = vector.broadcast %cst_73 : f32 to vector<40x32xf32>
    %251 = arith.select %249, %243, %250 : vector<40x32xi1>, vector<40x32xf32>
    %cst_74 = arith.constant 0.000000e+00 : f32
    %252 = vector.shape_cast %14 : vector<1x32xi1> to vector<1x32xi1>
    %253 = vector.broadcast %252 : vector<1x32xi1> to vector<40x32xi1>
    %254 = vector.broadcast %cst_74 : f32 to vector<40x32xf32>
    %255 = arith.select %253, %242, %254 : vector<40x32xi1>, vector<40x32xf32>
    %cst_75 = arith.constant 0.000000e+00 : f32
    %256 = vector.shape_cast %14 : vector<1x32xi1> to vector<1x32xi1>
    %257 = vector.broadcast %256 : vector<1x32xi1> to vector<40x32xi1>
    %258 = vector.broadcast %cst_75 : f32 to vector<40x32xf32>
    %259 = arith.select %257, %243, %258 : vector<40x32xi1>, vector<40x32xf32>
    %cst_76 = arith.constant 0.000000e+00 : f32
    %260 = vector.shape_cast %19 : vector<1x32xi1> to vector<1x32xi1>
    %261 = vector.broadcast %260 : vector<1x32xi1> to vector<40x32xi1>
    %262 = vector.broadcast %cst_76 : f32 to vector<40x32xf32>
    %263 = arith.select %261, %242, %262 : vector<40x32xi1>, vector<40x32xf32>
    %cst_77 = arith.constant 0.000000e+00 : f32
    %264 = vector.shape_cast %19 : vector<1x32xi1> to vector<1x32xi1>
    %265 = vector.broadcast %264 : vector<1x32xi1> to vector<40x32xi1>
    %266 = vector.broadcast %cst_77 : f32 to vector<40x32xf32>
    %267 = arith.select %265, %243, %266 : vector<40x32xi1>, vector<40x32xf32>
    %cst_78 = arith.constant 0.000000e+00 : f32
    %268 = vector.shape_cast %24 : vector<1x32xi1> to vector<1x32xi1>
    %269 = vector.broadcast %268 : vector<1x32xi1> to vector<40x32xi1>
    %270 = vector.broadcast %cst_78 : f32 to vector<40x32xf32>
    %271 = arith.select %269, %242, %270 : vector<40x32xi1>, vector<40x32xf32>
    %cst_79 = arith.constant 0.000000e+00 : f32
    %272 = vector.shape_cast %24 : vector<1x32xi1> to vector<1x32xi1>
    %273 = vector.broadcast %272 : vector<1x32xi1> to vector<40x32xi1>
    %274 = vector.broadcast %cst_79 : f32 to vector<40x32xf32>
    %275 = arith.select %273, %243, %274 : vector<40x32xi1>, vector<40x32xf32>
    %276 = tpu.concatenate %247, %25, %255, %25, %263, %25, %271, %25 in 0 : vector<40x32xf32>, vector<24x32xf32>, vector<40x32xf32>, vector<24x32xf32>, vector<40x32xf32>, vector<24x32xf32>, vector<40x32xf32>, vector<24x32xf32> -> vector<256x32xf32>
    %277 = arith.truncf %276 : vector<256x32xf32> to vector<256x32xbf16>
    %278 = tpu.concatenate %251, %25, %259, %25, %267, %25, %275, %25 in 0 : vector<40x32xf32>, vector<24x32xf32>, vector<40x32xf32>, vector<24x32xf32>, vector<40x32xf32>, vector<24x32xf32>, vector<40x32xf32>, vector<24x32xf32> -> vector<256x32xf32>
    %279 = arith.truncf %278 : vector<256x32xf32> to vector<256x32xbf16>
    %280 = arith.truncf %241 : vector<40x32xf32> to vector<40x32xbf16>
    %cst_80 = arith.constant dense<0.000000e+00> : vector<40x256xf32>
    %281 = tpu.matmul %280, %277, %cst_80 {dimension_numbers = #tpu.dot_dimension_numbers<[1], [1], [0], [0], [0, 0, 1, 0], [], []>} : vector<40x32xbf16>, vector<256x32xbf16>, vector<40x256xf32> -> vector<40x256xf32>
    %282 = arith.addf %281, %3 : vector<40x256xf32>
    %283 = vector.extract_strided_slice %282 {offsets = [0, 0], sizes = [40, 64], strides = [1, 1]} : vector<40x256xf32> to vector<40x64xf32>
    %cst_81 = arith.constant dense<0xFF800000> : vector<40xf32>
    %284 = vector.multi_reduction <maximumf>, %283, %cst_81 [1] : vector<40x64xf32> to vector<40xf32>
    %285 = vector.shape_cast %284 : vector<40xf32> to vector<40x1xf32>
    %286 = vector.broadcast %285 : vector<40x1xf32> to vector<40x64xf32>
    %287 = arith.subf %283, %286 : vector<40x64xf32>
    %288 = math.exp %287 : vector<40x64xf32>
    %cst_82 = arith.constant dense<0.000000e+00> : vector<40xf32>
    %289 = vector.multi_reduction <add>, %288, %cst_82 [1] : vector<40x64xf32> to vector<40xf32>
    %290 = vector.shape_cast %289 : vector<40xf32> to vector<40x1xf32>
    %291 = tpu.reciprocal %290 : vector<40x1xf32> -> vector<40x1xf32>
    %292 = vector.broadcast %291 : vector<40x1xf32> to vector<40x64xf32>
    %293 = arith.mulf %288, %292 : vector<40x64xf32>
    %294 = vector.extract_strided_slice %282 {offsets = [0, 64], sizes = [40, 64], strides = [1, 1]} : vector<40x256xf32> to vector<40x64xf32>
    %cst_83 = arith.constant dense<0xFF800000> : vector<40xf32>
    %295 = vector.multi_reduction <maximumf>, %294, %cst_83 [1] : vector<40x64xf32> to vector<40xf32>
    %296 = vector.shape_cast %295 : vector<40xf32> to vector<40x1xf32>
    %297 = vector.broadcast %296 : vector<40x1xf32> to vector<40x64xf32>
    %298 = arith.subf %294, %297 : vector<40x64xf32>
    %299 = math.exp %298 : vector<40x64xf32>
    %cst_84 = arith.constant dense<0.000000e+00> : vector<40xf32>
    %300 = vector.multi_reduction <add>, %299, %cst_84 [1] : vector<40x64xf32> to vector<40xf32>
    %301 = vector.shape_cast %300 : vector<40xf32> to vector<40x1xf32>
    %302 = tpu.reciprocal %301 : vector<40x1xf32> -> vector<40x1xf32>
    %303 = vector.broadcast %302 : vector<40x1xf32> to vector<40x64xf32>
    %304 = arith.mulf %299, %303 : vector<40x64xf32>
    %305 = vector.extract_strided_slice %282 {offsets = [0, 128], sizes = [40, 64], strides = [1, 1]} : vector<40x256xf32> to vector<40x64xf32>
    %cst_85 = arith.constant dense<0xFF800000> : vector<40xf32>
    %306 = vector.multi_reduction <maximumf>, %305, %cst_85 [1] : vector<40x64xf32> to vector<40xf32>
    %307 = vector.shape_cast %306 : vector<40xf32> to vector<40x1xf32>
    %308 = vector.broadcast %307 : vector<40x1xf32> to vector<40x64xf32>
    %309 = arith.subf %305, %308 : vector<40x64xf32>
    %310 = math.exp %309 : vector<40x64xf32>
    %cst_86 = arith.constant dense<0.000000e+00> : vector<40xf32>
    %311 = vector.multi_reduction <add>, %310, %cst_86 [1] : vector<40x64xf32> to vector<40xf32>
    %312 = vector.shape_cast %311 : vector<40xf32> to vector<40x1xf32>
    %313 = tpu.reciprocal %312 : vector<40x1xf32> -> vector<40x1xf32>
    %314 = vector.broadcast %313 : vector<40x1xf32> to vector<40x64xf32>
    %315 = arith.mulf %310, %314 : vector<40x64xf32>
    %316 = vector.extract_strided_slice %282 {offsets = [0, 192], sizes = [40, 64], strides = [1, 1]} : vector<40x256xf32> to vector<40x64xf32>
    %cst_87 = arith.constant dense<0xFF800000> : vector<40xf32>
    %317 = vector.multi_reduction <maximumf>, %316, %cst_87 [1] : vector<40x64xf32> to vector<40xf32>
    %318 = vector.shape_cast %317 : vector<40xf32> to vector<40x1xf32>
    %319 = vector.broadcast %318 : vector<40x1xf32> to vector<40x64xf32>
    %320 = arith.subf %316, %319 : vector<40x64xf32>
    %321 = math.exp %320 : vector<40x64xf32>
    %cst_88 = arith.constant dense<0.000000e+00> : vector<40xf32>
    %322 = vector.multi_reduction <add>, %321, %cst_88 [1] : vector<40x64xf32> to vector<40xf32>
    %323 = vector.shape_cast %322 : vector<40xf32> to vector<40x1xf32>
    %324 = tpu.reciprocal %323 : vector<40x1xf32> -> vector<40x1xf32>
    %325 = vector.broadcast %324 : vector<40x1xf32> to vector<40x64xf32>
    %326 = arith.mulf %321, %325 : vector<40x64xf32>
    %327 = tpu.concatenate %293, %304, %315, %326 in 1 : vector<40x64xf32>, vector<40x64xf32>, vector<40x64xf32>, vector<40x64xf32> -> vector<40x256xf32>
    %328 = arith.truncf %327 : vector<40x256xf32> to vector<40x256xbf16>
    %cst_89 = arith.constant dense<0.000000e+00> : vector<40x32xf32>
    %329 = tpu.matmul %328, %279, %cst_89 {dimension_numbers = #tpu.dot_dimension_numbers<[1], [0], [0], [1], [0, 0, 1, 1], [], []>} : vector<40x256xbf16>, vector<256x32xbf16>, vector<40x32xf32> -> vector<40x32xf32>
    %330 = arith.truncf %329 : vector<40x32xf32> to vector<40x32xbf16>
    %331 = vector.extract_strided_slice %232 {offsets = [0, 96], sizes = [32, 32], strides = [1, 1]} : vector<64x128xbf16> to vector<32x32xbf16>
    %cst_90 = arith.constant dense<0.000000e+00> : vector<40x32xf32>
    %332 = tpu.matmul %330, %331, %cst_90 {dimension_numbers = #tpu.dot_dimension_numbers<[1], [0], [0], [1], [0, 0, 1, 1], [], []>} : vector<40x32xbf16>, vector<32x32xbf16>, vector<40x32xf32> -> vector<40x32xf32>
    %333 = vector.extract_strided_slice %234 {offsets = [2, 0], sizes = [1, 32], strides = [1, 1]} : vector<8x128xf32> to vector<1x32xf32>
    %334 = vector.broadcast %333 : vector<1x32xf32> to vector<40x32xf32>
    %335 = arith.addf %332, %334 : vector<40x32xf32>
    %336 = arith.addf %230, %335 : vector<40x32xf32>
    %337 = vector.extract_strided_slice %234 {offsets = [3, 0], sizes = [1, 32], strides = [1, 1]} : vector<8x128xf32> to vector<1x32xf32>
    %338 = vector.extract_strided_slice %234 {offsets = [4, 0], sizes = [1, 32], strides = [1, 1]} : vector<8x128xf32> to vector<1x32xf32>
    %cst_91 = arith.constant dense<0.000000e+00> : vector<40xf32>
    %339 = vector.multi_reduction <add>, %336, %cst_91 [1] : vector<40x32xf32> to vector<40xf32>
    %340 = vector.shape_cast %339 : vector<40xf32> to vector<40x1xf32>
    %cst_92 = arith.constant 3.200000e+01 : f32
    %341 = vector.broadcast %cst_92 : f32 to vector<40x1xf32>
    %342 = arith.divf %340, %341 : vector<40x1xf32>
    %343 = vector.broadcast %342 : vector<40x1xf32> to vector<40x32xf32>
    %344 = arith.subf %336, %343 : vector<40x32xf32>
    %345 = arith.mulf %344, %344 : vector<40x32xf32>
    %cst_93 = arith.constant dense<0.000000e+00> : vector<40xf32>
    %346 = vector.multi_reduction <add>, %345, %cst_93 [1] : vector<40x32xf32> to vector<40xf32>
    %347 = vector.shape_cast %346 : vector<40xf32> to vector<40x1xf32>
    %cst_94 = arith.constant 3.200000e+01 : f32
    %348 = vector.broadcast %cst_94 : f32 to vector<40x1xf32>
    %349 = arith.divf %347, %348 : vector<40x1xf32>
    %cst_95 = arith.constant 9.99999974E-6 : f32
    %350 = vector.broadcast %cst_95 : f32 to vector<40x1xf32>
    %351 = arith.addf %349, %350 : vector<40x1xf32>
    %352 = math.rsqrt %351 : vector<40x1xf32>
    %353 = vector.broadcast %352 : vector<40x1xf32> to vector<40x32xf32>
    %354 = arith.mulf %344, %353 : vector<40x32xf32>
    %355 = vector.broadcast %337 : vector<1x32xf32> to vector<40x32xf32>
    %356 = arith.mulf %354, %355 : vector<40x32xf32>
    %357 = vector.broadcast %338 : vector<1x32xf32> to vector<40x32xf32>
    %358 = arith.addf %356, %357 : vector<40x32xf32>
    %359 = arith.truncf %358 : vector<40x32xf32> to vector<40x32xbf16>
    %360 = vector.extract_strided_slice %232 {offsets = [32, 0], sizes = [32, 128], strides = [1, 1]} : vector<64x128xbf16> to vector<32x128xbf16>
    %cst_96 = arith.constant dense<0.000000e+00> : vector<40x128xf32>
    %361 = tpu.matmul %359, %360, %cst_96 {dimension_numbers = #tpu.dot_dimension_numbers<[1], [0], [0], [1], [0, 0, 1, 1], [], []>} : vector<40x32xbf16>, vector<32x128xbf16>, vector<40x128xf32> -> vector<40x128xf32>
    %362 = vector.extract_strided_slice %234 {offsets = [1, 0], sizes = [1, 128], strides = [1, 1]} : vector<8x128xf32> to vector<1x128xf32>
    %363 = vector.broadcast %362 : vector<1x128xf32> to vector<40x128xf32>
    %364 = arith.addf %361, %363 : vector<40x128xf32>
    %cst_97 = arith.constant 5.000000e-01 : f32
    %365 = vector.broadcast %cst_97 : f32 to vector<40x128xf32>
    %366 = arith.mulf %365, %364 : vector<40x128xf32>
    %cst_98 = arith.constant 0.707106769 : f32
    %367 = vector.broadcast %cst_98 : f32 to vector<40x128xf32>
    %368 = arith.mulf %364, %367 : vector<40x128xf32>
    %cst_99 = arith.constant 0.000000e+00 : f32
    %369 = vector.broadcast %cst_99 : f32 to vector<40x128xf32>
    %370 = arith.cmpf oge, %368, %369 : vector<40x128xf32>
    %cst_100 = arith.constant 1.000000e+00 : f32
    %cst_101 = arith.constant -1.000000e+00 : f32
    %371 = vector.broadcast %cst_100 : f32 to vector<40x128xf32>
    %372 = vector.broadcast %cst_101 : f32 to vector<40x128xf32>
    %373 = arith.select %370, %371, %372 : vector<40x128xi1>, vector<40x128xf32>
    %374 = math.absf %368 : vector<40x128xf32>
    %cst_102 = arith.constant 0.327591091 : f32
    %375 = vector.broadcast %cst_102 : f32 to vector<40x128xf32>
    %376 = arith.mulf %375, %374 : vector<40x128xf32>
    %cst_103 = arith.constant 1.000000e+00 : f32
    %377 = vector.broadcast %cst_103 : f32 to vector<40x128xf32>
    %378 = arith.addf %377, %376 : vector<40x128xf32>
    %cst_104 = arith.constant 1.000000e+00 : f32
    %379 = vector.broadcast %cst_104 : f32 to vector<40x128xf32>
    %380 = arith.divf %379, %378 : vector<40x128xf32>
    %cst_105 = arith.constant 1.06140542 : f32
    %381 = vector.broadcast %cst_105 : f32 to vector<40x128xf32>
    %382 = arith.mulf %381, %380 : vector<40x128xf32>
    %cst_106 = arith.constant -1.45315206 : f32
    %383 = vector.broadcast %cst_106 : f32 to vector<40x128xf32>
    %384 = arith.addf %382, %383 : vector<40x128xf32>
    %385 = arith.mulf %384, %380 : vector<40x128xf32>
    %cst_107 = arith.constant 1.42141378 : f32
    %386 = vector.broadcast %cst_107 : f32 to vector<40x128xf32>
    %387 = arith.addf %385, %386 : vector<40x128xf32>
    %388 = arith.mulf %387, %380 : vector<40x128xf32>
    %cst_108 = arith.constant -0.284496725 : f32
    %389 = vector.broadcast %cst_108 : f32 to vector<40x128xf32>
    %390 = arith.addf %388, %389 : vector<40x128xf32>
    %391 = arith.mulf %390, %380 : vector<40x128xf32>
    %cst_109 = arith.constant 0.254829586 : f32
    %392 = vector.broadcast %cst_109 : f32 to vector<40x128xf32>
    %393 = arith.addf %391, %392 : vector<40x128xf32>
    %394 = arith.mulf %393, %380 : vector<40x128xf32>
    %cst_110 = arith.constant 0.000000e+00 : f32
    %395 = vector.broadcast %cst_110 : f32 to vector<40x128xf32>
    %396 = arith.subf %395, %374 : vector<40x128xf32>
    %397 = arith.mulf %396, %374 : vector<40x128xf32>
    %398 = math.exp %397 : vector<40x128xf32>
    %399 = arith.mulf %394, %398 : vector<40x128xf32>
    %cst_111 = arith.constant 1.000000e+00 : f32
    %400 = vector.broadcast %cst_111 : f32 to vector<40x128xf32>
    %401 = arith.subf %400, %399 : vector<40x128xf32>
    %402 = arith.mulf %373, %401 : vector<40x128xf32>
    %cst_112 = arith.constant 1.000000e+00 : f32
    %403 = vector.broadcast %cst_112 : f32 to vector<40x128xf32>
    %404 = arith.addf %403, %402 : vector<40x128xf32>
    %405 = arith.mulf %366, %404 : vector<40x128xf32>
    %406 = arith.truncf %405 : vector<40x128xf32> to vector<40x128xbf16>
    %c1_113 = arith.constant 1 : index
    %c0_114 = arith.constant 0 : index
    %c0_115 = arith.constant 0 : index
    %407 = vector.load %arg5[%c1_113, %c0_114, %c0_115] : memref<2x128x32xbf16, #tpu.memory_space<vmem>>, vector<1x128x32xbf16>
    %408 = vector.shape_cast %407 : vector<1x128x32xbf16> to vector<128x32xbf16>
    %cst_116 = arith.constant dense<0.000000e+00> : vector<40x32xf32>
    %409 = tpu.matmul %406, %408, %cst_116 {dimension_numbers = #tpu.dot_dimension_numbers<[1], [0], [0], [1], [0, 0, 1, 1], [], []>} : vector<40x128xbf16>, vector<128x32xbf16>, vector<40x32xf32> -> vector<40x32xf32>
    %410 = vector.extract_strided_slice %234 {offsets = [5, 0], sizes = [1, 32], strides = [1, 1]} : vector<8x128xf32> to vector<1x32xf32>
    %411 = vector.broadcast %410 : vector<1x32xf32> to vector<40x32xf32>
    %412 = arith.addf %409, %411 : vector<40x32xf32>
    %413 = arith.addf %358, %412 : vector<40x32xf32>
    %414 = vector.extract_strided_slice %234 {offsets = [6, 0], sizes = [1, 32], strides = [1, 1]} : vector<8x128xf32> to vector<1x32xf32>
    %415 = vector.extract_strided_slice %234 {offsets = [7, 0], sizes = [1, 32], strides = [1, 1]} : vector<8x128xf32> to vector<1x32xf32>
    %cst_117 = arith.constant dense<0.000000e+00> : vector<40xf32>
    %416 = vector.multi_reduction <add>, %413, %cst_117 [1] : vector<40x32xf32> to vector<40xf32>
    %417 = vector.shape_cast %416 : vector<40xf32> to vector<40x1xf32>
    %cst_118 = arith.constant 3.200000e+01 : f32
    %418 = vector.broadcast %cst_118 : f32 to vector<40x1xf32>
    %419 = arith.divf %417, %418 : vector<40x1xf32>
    %420 = vector.broadcast %419 : vector<40x1xf32> to vector<40x32xf32>
    %421 = arith.subf %413, %420 : vector<40x32xf32>
    %422 = arith.mulf %421, %421 : vector<40x32xf32>
    %cst_119 = arith.constant dense<0.000000e+00> : vector<40xf32>
    %423 = vector.multi_reduction <add>, %422, %cst_119 [1] : vector<40x32xf32> to vector<40xf32>
    %424 = vector.shape_cast %423 : vector<40xf32> to vector<40x1xf32>
    %cst_120 = arith.constant 3.200000e+01 : f32
    %425 = vector.broadcast %cst_120 : f32 to vector<40x1xf32>
    %426 = arith.divf %424, %425 : vector<40x1xf32>
    %cst_121 = arith.constant 9.99999974E-6 : f32
    %427 = vector.broadcast %cst_121 : f32 to vector<40x1xf32>
    %428 = arith.addf %426, %427 : vector<40x1xf32>
    %429 = math.rsqrt %428 : vector<40x1xf32>
    %430 = vector.broadcast %429 : vector<40x1xf32> to vector<40x32xf32>
    %431 = arith.mulf %421, %430 : vector<40x32xf32>
    %432 = vector.broadcast %414 : vector<1x32xf32> to vector<40x32xf32>
    %433 = arith.mulf %431, %432 : vector<40x32xf32>
    %434 = vector.broadcast %415 : vector<1x32xf32> to vector<40x32xf32>
    %435 = arith.addf %433, %434 : vector<40x32xf32>
    %c0_122 = arith.constant 0 : index
    %c0_123 = arith.constant 0 : index
    %436 = vector.load %arg7[%c0_122, %c0_123] : memref<35x128xf32, #tpu.memory_space<vmem>>, vector<35x128xf32>
    %437 = vector.extract_strided_slice %436 {offsets = [33, 0], sizes = [1, 32], strides = [1, 1]} : vector<35x128xf32> to vector<1x32xf32>
    %438 = vector.extract_strided_slice %436 {offsets = [34, 0], sizes = [1, 32], strides = [1, 1]} : vector<35x128xf32> to vector<1x32xf32>
    %cst_124 = arith.constant dense<0.000000e+00> : vector<40xf32>
    %439 = vector.multi_reduction <add>, %435, %cst_124 [1] : vector<40x32xf32> to vector<40xf32>
    %440 = vector.shape_cast %439 : vector<40xf32> to vector<40x1xf32>
    %cst_125 = arith.constant 3.200000e+01 : f32
    %441 = vector.broadcast %cst_125 : f32 to vector<40x1xf32>
    %442 = arith.divf %440, %441 : vector<40x1xf32>
    %443 = vector.broadcast %442 : vector<40x1xf32> to vector<40x32xf32>
    %444 = arith.subf %435, %443 : vector<40x32xf32>
    %445 = arith.mulf %444, %444 : vector<40x32xf32>
    %cst_126 = arith.constant dense<0.000000e+00> : vector<40xf32>
    %446 = vector.multi_reduction <add>, %445, %cst_126 [1] : vector<40x32xf32> to vector<40xf32>
    %447 = vector.shape_cast %446 : vector<40xf32> to vector<40x1xf32>
    %cst_127 = arith.constant 3.200000e+01 : f32
    %448 = vector.broadcast %cst_127 : f32 to vector<40x1xf32>
    %449 = arith.divf %447, %448 : vector<40x1xf32>
    %cst_128 = arith.constant 9.99999974E-6 : f32
    %450 = vector.broadcast %cst_128 : f32 to vector<40x1xf32>
    %451 = arith.addf %449, %450 : vector<40x1xf32>
    %452 = math.rsqrt %451 : vector<40x1xf32>
    %453 = vector.broadcast %452 : vector<40x1xf32> to vector<40x32xf32>
    %454 = arith.mulf %444, %453 : vector<40x32xf32>
    %455 = vector.broadcast %437 : vector<1x32xf32> to vector<40x32xf32>
    %456 = arith.mulf %454, %455 : vector<40x32xf32>
    %457 = vector.broadcast %438 : vector<1x32xf32> to vector<40x32xf32>
    %458 = arith.addf %456, %457 : vector<40x32xf32>
    %459 = vector.extract_strided_slice %436 {offsets = [0, 0], sizes = [32, 128], strides = [1, 1]} : vector<35x128xf32> to vector<32x128xf32>
    %cst_129 = arith.constant dense<0.000000e+00> : vector<40x128xf32>
    %460 = tpu.matmul %458, %459, %cst_129 {dimension_numbers = #tpu.dot_dimension_numbers<[1], [0], [0], [1], [0, 0, 1, 1], [], []>} : vector<40x32xf32>, vector<32x128xf32>, vector<40x128xf32> -> vector<40x128xf32>
    %461 = vector.extract_strided_slice %436 {offsets = [32, 0], sizes = [1, 128], strides = [1, 1]} : vector<35x128xf32> to vector<1x128xf32>
    %462 = vector.broadcast %461 : vector<1x128xf32> to vector<40x128xf32>
    %463 = arith.addf %460, %462 : vector<40x128xf32>
    %464 = arith.negf %463 : vector<40x128xf32>
    %465 = math.exp %464 : vector<40x128xf32>
    %cst_130 = arith.constant 1.000000e+00 : f32
    %466 = vector.broadcast %cst_130 : f32 to vector<40x128xf32>
    %467 = arith.addf %466, %465 : vector<40x128xf32>
    %468 = arith.divf %466, %467 : vector<40x128xf32>
    %c0_131 = arith.constant 0 : index
    %c0_132 = arith.constant 0 : index
    %469 = vector.load %arg8[%c0_131, %c0_132] : memref<40x128xf32, #tpu.memory_space<vmem>>, vector<40x128xf32>
    tpu.vector_store %arg8[%c0_131, %c0_132], %468 {strides = array<i32>} : memref<40x128xf32, #tpu.memory_space<vmem>>, vector<40x128xf32>,
    return
  }
  func.func @transform_0(%arg0: i32) -> (i32, i32) {
    %c0_i32 = arith.constant 0 : i32
    %c0_i32_0 = arith.constant 0 : i32
    return %arg0, %c0_i32 : i32, i32
  }
  func.func @transform_1(%arg0: i32) -> (i32, i32) {
    %c0_i32 = arith.constant 0 : i32
    %c0_i32_0 = arith.constant 0 : i32
    %c0_i32_1 = arith.constant 0 : i32
    return %c0_i32, %c0_i32_0 : i32, i32
  }
  func.func @transform_2(%arg0: i32) -> (i32, i32) {
    %c0_i32 = arith.constant 0 : i32
    %c0_i32_0 = arith.constant 0 : i32
    %c0_i32_1 = arith.constant 0 : i32
    return %c0_i32, %c0_i32_0 : i32, i32
  }
  func.func @transform_3(%arg0: i32) -> (i32, i32, i32) {
    %c0_i32 = arith.constant 0 : i32
    %c0_i32_0 = arith.constant 0 : i32
    %c0_i32_1 = arith.constant 0 : i32
    %c0_i32_2 = arith.constant 0 : i32
    return %c0_i32, %c0_i32_0, %c0_i32_1 : i32, i32, i32
  }
  func.func @transform_4(%arg0: i32) -> (i32, i32, i32) {
    %c0_i32 = arith.constant 0 : i32
    %c0_i32_0 = arith.constant 0 : i32
    %c0_i32_1 = arith.constant 0 : i32
    %c0_i32_2 = arith.constant 0 : i32
    return %c0_i32, %c0_i32_0, %c0_i32_1 : i32, i32, i32
  }
  func.func @transform_5(%arg0: i32) -> (i32, i32, i32) {
    %c0_i32 = arith.constant 0 : i32
    %c0_i32_0 = arith.constant 0 : i32
    %c0_i32_1 = arith.constant 0 : i32
    %c0_i32_2 = arith.constant 0 : i32
    return %c0_i32, %c0_i32_0, %c0_i32_1 : i32, i32, i32
  }
  func.func @transform_6(%arg0: i32) -> (i32, i32) {
    %c0_i32 = arith.constant 0 : i32
    %c0_i32_0 = arith.constant 0 : i32
    %c0_i32_1 = arith.constant 0 : i32
    return %c0_i32, %c0_i32_0 : i32, i32
  }
  func.func @transform_7(%arg0: i32) -> (i32, i32) {
    %c0_i32 = arith.constant 0 : i32
    %c0_i32_0 = arith.constant 0 : i32
    return %arg0, %c0_i32 : i32, i32
  }
}

</mosaic_0001>

<llo_original>
// kernel: custom-call
$region0: #{custom-call}
  %s0 = inlined_call_operand.vmem [shape: f32[2,8], index: 0, kind: output, shape index: {}]

// kernel: vit_forward.1
$region0: #{vit_forward.1}
  #allocation0 [shape = 'u32[]', space=smem, size = 0x4, offset = 0x4, fixed_abs, tag = 'smem constant byte address 0x4 - core index']
  #allocation1 [shape = 'u32[72,128]{1,0:T(1,128)}', space=vmem, size = 0x9000, scoped, tag = 'internal scratch']
  %s0 = inlined_call_operand.vmem [shape: f32[40,88], index: 0, kind: input, shape index: {}]
  %s1 = inlined_call_operand.vmem [shape: f32[88,32], index: 1, kind: input, shape index: {}]
  %s2 = inlined_call_operand.vmem [shape: f32[40,256], index: 2, kind: input, shape index: {}]
  %s3 = inlined_call_operand.vmem [shape: bf16[2,64,128], index: 3, kind: input, shape index: {}]
  %s4 = inlined_call_operand.vmem [shape: bf16[2,128,32], index: 4, kind: input, shape index: {}]
  %s5 = inlined_call_operand.vmem [shape: f32[2,8,128], index: 5, kind: input, shape index: {}]
  %s6 = inlined_call_operand.vmem [shape: f32[35,128], index: 6, kind: input, shape index: {}]
  %s7 = inlined_call_operand.vmem [shape: f32[40,128], index: 7, kind: output, shape index: {}]
  %s8 = sld [smem:[#allocation0]]
  $region38: #{vit_forward.1} parent=0
    _
  %s10 = ssub.s32 1, %s8
  %s11 = scalar_select 0, %s10, %s8
  // Predicated region
  $region2: #{vit_forward.1} parent=0 // pred_check
    _
  $region3: #{vit_forward.1} parent=0 // pred_check_branch
    %13 = sbr.rel (0) target = $region5
  $region4: #{vit_forward.1} parent=0 // pred_region
    _
  $region5: #{vit_forward.1} parent=0 // pred_fallthru
    _
  // Predicated region
  $region6: #{vit_forward.1} parent=0 // pred_check
    _
  $region7: #{vit_forward.1} parent=0 // pred_check_branch
    %15 = sbr.rel (0) target = $region9
  $region8: #{vit_forward.1} parent=0 // pred_region
    _
  $region9: #{vit_forward.1} parent=0 // pred_fallthru
    _
  // Predicated region
  $region10: #{vit_forward.1} parent=0 // pred_check
    _
  $region11: #{vit_forward.1} parent=0 // pred_check_branch
    %17 = sbr.rel (0) target = $region13
  $region12: #{vit_forward.1} parent=0 // pred_region
    _
  $region13: #{vit_forward.1} parent=0 // pred_fallthru
    _
  // Predicated region
  $region14: #{vit_forward.1} parent=0 // pred_check
    _
  $region15: #{vit_forward.1} parent=0 // pred_check_branch
    %19 = sbr.rel (0) target = $region17
  $region16: #{vit_forward.1} parent=0 // pred_region
    _
  $region17: #{vit_forward.1} parent=0 // pred_fallthru
    _
  // Predicated region
  $region18: #{vit_forward.1} parent=0 // pred_check
    _
  $region19: #{vit_forward.1} parent=0 // pred_check_branch
    %21 = sbr.rel (0) target = $region21
  $region20: #{vit_forward.1} parent=0 // pred_region
    _
  $region21: #{vit_forward.1} parent=0 // pred_fallthru
    _
  // Predicated region
  $region22: #{vit_forward.1} parent=0 // pred_check
    _
  $region23: #{vit_forward.1} parent=0 // pred_check_branch
    %23 = sbr.rel (0) target = $region25
  $region24: #{vit_forward.1} parent=0 // pred_region
    _
  $region25: #{vit_forward.1} parent=0 // pred_fallthru
    _
  // Predicated region
  $region26: #{vit_forward.1} parent=0 // pred_check
    _
  $region27: #{vit_forward.1} parent=0 // pred_check_branch
    %25 = sbr.rel (0) target = $region29
  $region28: #{vit_forward.1} parent=0 // pred_region
    _
  $region29: #{vit_forward.1} parent=0 // pred_fallthru
    _
  %v27 = vld [vmem:[%s0] sm:$0xff]
  %v28 = vld [vmem:[%s0 + $0x8] sm:$0xff]
  %v29 = vld [vmem:[%s0 + $0x10] sm:$0xff]
  %v30 = vld [vmem:[%s0 + $0x18] sm:$0xff]
  %v31 = vld [vmem:[%s0 + $0x20] sm:$0xff]
  %v32 = vld [vmem:[%s1] sm:$0xff]
  %v33 = vld [vmem:[%s1 + $0x8] sm:$0xff]
  %v34 = vld [vmem:[%s1 + $0x10] sm:$0xff]
  %v35 = vld [vmem:[%s1 + $0x18] sm:$0xff]
  %v36 = vld [vmem:[%s1 + $0x20] sm:$0xff]
  %v37 = vld [vmem:[%s1 + $0x28] sm:$0xff]
  %v38 = vld [vmem:[%s1 + $0x30] sm:$0xff]
  %v39 = vld [vmem:[%s1 + $0x38] sm:$0xff]
  %v40 = vld [vmem:[%s1 + $0x40] sm:$0xff]
  %v41 = vld [vmem:[%s1 + $0x48] sm:$0xff]
  %v42 = vld [vmem:[%s1 + $0x50] sm:$0xff]
  %vm43 = vcmask 719872
  %v45 = vsel %vm43, %v27, 0
  %v48 = vsel %vm43, %v28, 0
  %v51 = vsel %vm43, %v29, 0
  %v54 = vsel %vm43, %v30, 0
  %v57 = vsel %vm43, %v31, 0
  %59 = vmatpush.msra.mxu0 0.0
  %60 = vmatpush.msra.mxu0 0.0
  %61 = vmatpush.msra.mxu0 0.0
  %62 = vmatpush.msra.mxu0 0.0
  %63 = vmatpush.msra.mxu0 0.0
  %64 = vmatpush.msra.mxu0 %v42
  %65 = vmatpush.msra.mxu0 %v41
  %66 = vmatpush.msra.mxu0 %v40
  %67 = vmatpush.msra.mxu0 %v39
  %68 = vmatpush.msra.mxu0 %v38
  %69 = vmatpush.msra.mxu0 %v37
  %70 = vmatpush.msra.mxu0 %v36
  %71 = vmatpush.msra.mxu0 %v35
  %72 = vmatpush.msra.mxu0 %v34
  %73 = vmatpush.msra.mxu0 %v33
  %74 = vmatpush.msra.mxu0 %v32
  %75 = vmatmul.f32.gmra.mxu0 %v45
  %v76 = vpop.f32.mrf.mxu0
  %v77 = vadd.f32 0.0, %v76
  %78 = vmatmul.f32.gmra.mxu0 %v48
  %v79 = vpop.f32.mrf.mxu0
  %v80 = vadd.f32 0.0, %v79
  %81 = vmatmul.f32.gmra.mxu0 %v51
  %v82 = vpop.f32.mrf.mxu0
  %v83 = vadd.f32 0.0, %v82
  %84 = vmatmul.f32.gmra.mxu0 %v54
  %v85 = vpop.f32.mrf.mxu0
  %v86 = vadd.f32 0.0, %v85
  %87 = vmatmul.f32.gmra.mxu0 %v57
  %v88 = vpop.f32.mrf.mxu0
  %v89 = vadd.f32 0.0, %v88
  %90 = vdwg.mxu0
  %v91 = vld [vmem:[%s2] sm:$0xff]
  %v92 = vld [vmem:[%s2 + $0x8] sm:$0xff]
  %v93 = vld [vmem:[%s2 + $0x10] sm:$0xff]
  %v94 = vld [vmem:[%s2 + $0x18] sm:$0xff]
  %v95 = vld [vmem:[%s2 + $0x20] sm:$0xff]
  %v96 = vld [vmem:[%s2 + $0x28] sm:$0xff]
  %v97 = vld [vmem:[%s2 + $0x30] sm:$0xff]
  %v98 = vld [vmem:[%s2 + $0x38] sm:$0xff]
  %v99 = vld [vmem:[%s2 + $0x40] sm:$0xff]
  %v100 = vld [vmem:[%s2 + $0x48] sm:$0xff]
  %v101 = vlaneseq
  %v102 = vand.u32 %v101, 127
  %vm103 = vcmp.ge.s32.totalorder %v102, 0
  %vm104 = vcmp.lt.s32.totalorder %v102, 8
  %vm105 = vmand %vm103, %vm104
  %vm106 = vcmp.ge.s32.totalorder %v102, 8
  %vm107 = vcmp.lt.s32.totalorder %v102, 16
  %vm108 = vmand %vm106, %vm107
  %vm109 = vcmp.ge.s32.totalorder %v102, 16
  %vm110 = vcmp.lt.s32.totalorder %v102, 24
  %vm111 = vmand %vm109, %vm110
  %vm112 = vcmp.ge.s32.totalorder %v102, 24
  %vm113 = vcmp.lt.s32.totalorder %v102, 32
  %vm114 = vmand %vm112, %vm113
  %v115 = vld [vmem:[%s3] sm:$0xf]
  %v116 = vld [vmem:[%s3 + $0x4] sm:$0xf]
  %v117 = vld [vmem:[%s3 + $0x8] sm:$0xf]
  %v118 = vld [vmem:[%s3 + $0xc] sm:$0xf]
  %v119 = vld [vmem:[%s3 + $0x10] sm:$0xf]
  %v120 = vld [vmem:[%s3 + $0x14] sm:$0xf]
  %v121 = vld [vmem:[%s3 + $0x18] sm:$0xf]
  %v122 = vld [vmem:[%s3 + $0x1c] sm:$0xf]
  %v123 = vld [vmem:[%s5] sm:$0xff]
  %v124 = vpack.c.bf16 %v80, %v77
  %v125 = vpack.c.bf16 %v86, %v83
  %v126 = vpack.c.bf16 %v89, %v89
  %v127 = vperm.slane %v123, 0
  %v132 = vunpack.c.l.b16 %v115
  %v133 = vunpack.c.l.b16 %v116
  %v134 = vunpack.c.l.b16 %v117
  %v135 = vunpack.c.l.b16 %v118
  %v136 = vpack.c.b16 %v133, %v132
  %v137 = vpack.c.b16 %v135, %v134
  %vm140 = vcmask 261120
  %v142 = vsel %vm140, %v124, 0
  %v145 = vsel %vm140, %v125, 0
  %v148 = vsel %vm140, %v126, 0
  %150 = vmatpush.bf16.msra.mxu0 0
  %151 = vmatpush.bf16.msra.mxu0 0
  %152 = vmatpush.bf16.msra.mxu0 0
  %153 = vmatpush.bf16.msra.mxu0 0
  %154 = vmatpush.bf16.msra.mxu0 0
  %155 = vmatpush.bf16.msra.mxu0 0
  %156 = vmatpush.bf16.msra.mxu0 %v137
  %157 = vmatpush.bf16.msra.mxu0 %v136
  %158 = vmatmul.bf16.gmra.mxu0 %v142
  %v159 = vpop.f32.mrf.mxu0
  %v160 = vadd.f32 %v127, %v159
  %v161 = vpop.f32.mrf.mxu0
  %v162 = vadd.f32 %v127, %v161
  %163 = vmatmul.bf16.gmra.mxu0 %v145
  %v164 = vpop.f32.mrf.mxu0
  %v165 = vadd.f32 %v127, %v164
  %v166 = vpop.f32.mrf.mxu0
  %v167 = vadd.f32 %v127, %v166
  %168 = vmatmul.bf16.gmra.mxu0 %v148
  %v169 = vpop.f32.mrf.mxu0
  %v170 = vadd.f32 %v127, %v169
  %v171 = vpop.f32.mrf.mxu0
  %172 = vdwg.mxu0
  %v173 = vsel %vm105, 1, 0
  %vm174 = vcmp.eq.s32.totalorder %v173, 1
  %180 = vrot.lane.b32.xlu0 %v160, 96
  %v181 = vpop.permute.xlu0 %180
  %182 = vrot.lane.b32.xlu0 %v162, 96
  %v183 = vpop.permute.xlu0 %182
  %184 = vrot.lane.b32.xlu0 %v165, 96
  %v185 = vpop.permute.xlu0 %184
  %186 = vrot.lane.b32.xlu0 %v167, 96
  %v187 = vpop.permute.xlu0 %186
  %188 = vrot.lane.b32.xlu0 %v170, 96
  %v189 = vpop.permute.xlu0 %188
  %v195 = vsel %vm174, %v181, 0.0
  %v196 = vsel %vm174, %v183, 0.0
  %v197 = vsel %vm174, %v185, 0.0
  %v198 = vsel %vm174, %v187, 0.0
  %v199 = vsel %vm174, %v189, 0.0
  %200 = vrot.lane.b32.xlu0 %v160, 64
  %v201 = vpop.permute.xlu0 %200
  %202 = vrot.lane.b32.xlu0 %v162, 64
  %v203 = vpop.permute.xlu0 %202
  %204 = vrot.lane.b32.xlu0 %v165, 64
  %v205 = vpop.permute.xlu0 %204
  %206 = vrot.lane.b32.xlu0 %v167, 64
  %v207 = vpop.permute.xlu0 %206
  %208 = vrot.lane.b32.xlu0 %v170, 64
  %v209 = vpop.permute.xlu0 %208
  %v215 = vsel %vm174, %v201, 0.0
  %v216 = vsel %vm174, %v203, 0.0
  %v217 = vsel %vm174, %v205, 0.0
  %v218 = vsel %vm174, %v207, 0.0
  %v219 = vsel %vm174, %v209, 0.0
  %v220 = vsel %vm108, 1, 0
  %vm221 = vcmp.eq.s32.totalorder %v220, 1
  %v222 = vsel %vm221, %v181, 0.0
  %v223 = vsel %vm221, %v183, 0.0
  %v224 = vsel %vm221, %v185, 0.0
  %v225 = vsel %vm221, %v187, 0.0
  %v226 = vsel %vm221, %v189, 0.0
  %v227 = vsel %vm221, %v201, 0.0
  %v228 = vsel %vm221, %v203, 0.0
  %v229 = vsel %vm221, %v205, 0.0
  %v230 = vsel %vm221, %v207, 0.0
  %v231 = vsel %vm221, %v209, 0.0
  %v232 = vsel %vm111, 1, 0
  %vm233 = vcmp.eq.s32.totalorder %v232, 1
  %v234 = vsel %vm233, %v181, 0.0
  %v235 = vsel %vm233, %v183, 0.0
  %v236 = vsel %vm233, %v185, 0.0
  %v237 = vsel %vm233, %v187, 0.0
  %v238 = vsel %vm233, %v189, 0.0
  %v239 = vsel %vm233, %v201, 0.0
  %v240 = vsel %vm233, %v203, 0.0
  %v241 = vsel %vm233, %v205, 0.0
  %v242 = vsel %vm233, %v207, 0.0
  %v243 = vsel %vm233, %v209, 0.0
  %v244 = vsel %vm114, 1, 0
  %vm245 = vcmp.eq.s32.totalorder %v244, 1
  %v246 = vsel %vm245, %v181, 0.0
  %v247 = vsel %vm245, %v183, 0.0
  %v248 = vsel %vm245, %v185, 0.0
  %v249 = vsel %vm245, %v187, 0.0
  %v250 = vsel %vm245, %v189, 0.0
  %v251 = vsel %vm245, %v201, 0.0
  %v252 = vsel %vm245, %v203, 0.0
  %v253 = vsel %vm245, %v205, 0.0
  %v254 = vsel %vm245, %v207, 0.0
  %v255 = vsel %vm245, %v209, 0.0
  %v256 = vpack.c.bf16 %v196, %v195
  %v257 = vpack.c.bf16 %v198, %v197
  %v258 = vpack.c.bf16 0.0, %v199
  %v259 = vpack.c.bf16 0.0, 0.0
  %v260 = vpack.c.bf16 %v223, %v222
  %v261 = vpack.c.bf16 %v225, %v224
  %v262 = vpack.c.bf16 0.0, %v226
  %v263 = vpack.c.bf16 %v235, %v234
  %v264 = vpack.c.bf16 %v237, %v236
  %v265 = vpack.c.bf16 0.0, %v238
  %v266 = vpack.c.bf16 %v247, %v246
  %v267 = vpack.c.bf16 %v249, %v248
  %v268 = vpack.c.bf16 0.0, %v250
  %v269 = vpack.c.bf16 %v216, %v215
  %v270 = vpack.c.bf16 %v218, %v217
  %v271 = vpack.c.bf16 0.0, %v219
  %v272 = vpack.c.bf16 %v228, %v227
  %v273 = vpack.c.bf16 %v230, %v229
  %v274 = vpack.c.bf16 0.0, %v231
  %v275 = vpack.c.bf16 %v240, %v239
  %v276 = vpack.c.bf16 %v242, %v241
  %v277 = vpack.c.bf16 0.0, %v243
  %v278 = vpack.c.bf16 %v252, %v251
  %v279 = vpack.c.bf16 %v254, %v253
  %v280 = vpack.c.bf16 0.0, %v255
  %v281 = vpack.c.bf16 %v162, %v160
  %v282 = vpack.c.bf16 %v167, %v165
  %v283 = vpack.c.bf16 %v170, %v170
  %v285 = vsel %vm140, %v281, 0
  %v288 = vsel %vm140, %v282, 0
  %v291 = vsel %vm140, %v283, 0
  %v294 = vsel %vm140, %v256, 0
  %v297 = vsel %vm140, %v257, 0
  %v300 = vsel %vm140, %v258, 0
  %v303 = vsel %vm140, %v259, 0
  %v306 = vsel %vm140, %v260, 0
  %v309 = vsel %vm140, %v261, 0
  %v312 = vsel %vm140, %v262, 0
  %v315 = vsel %vm140, %v263, 0
  %v318 = vsel %vm140, %v264, 0
  %v321 = vsel %vm140, %v265, 0
  %v324 = vsel %vm140, %v266, 0
  %v327 = vsel %vm140, %v267, 0
  %v330 = vsel %vm140, %v268, 0
  %332 = vmatpush.bf16.xpose.msra.mxu0 %v303
  %333 = vmatpush.bf16.xpose.msra.mxu0 %v312
  %334 = vmatpush.bf16.xpose.msra.mxu0 %v309
  %335 = vmatpush.bf16.xpose.msra.mxu0 %v306
  %336 = vmatpush.bf16.xpose.msra.mxu0 %v303
  %337 = vmatpush.bf16.xpose.msra.mxu0 %v300
  %338 = vmatpush.bf16.xpose.msra.mxu0 %v297
  %339 = vmatpush.bf16.xpose.msra.mxu0 %v294
  %340 = vmatmul.bf16.gmra.mxu0 %v285
  %v341 = vpop.f32.mrf.mxu0
  %v342 = vadd.f32 %v91, %v341
  %v343 = vpop.f32.mrf.mxu0
  %v344 = vadd.f32 %v93, %v343
  %345 = vmatmul.bf16.gmra.mxu0 %v288
  %v346 = vpop.f32.mrf.mxu0
  %v347 = vadd.f32 %v95, %v346
  %v348 = vpop.f32.mrf.mxu0
  %v349 = vadd.f32 %v97, %v348
  %350 = vmatmul.bf16.gmra.mxu0 %v291
  %v351 = vpop.f32.mrf.mxu0
  %v352 = vadd.f32 %v99, %v351
  %v353 = vpop.f32.mrf.mxu0
  %354 = vdwg.mxu0
  %355 = vmatpush.bf16.xpose.msra.mxu0 %v303
  %356 = vmatpush.bf16.xpose.msra.mxu0 %v330
  %357 = vmatpush.bf16.xpose.msra.mxu0 %v327
  %358 = vmatpush.bf16.xpose.msra.mxu0 %v324
  %359 = vmatpush.bf16.xpose.msra.mxu0 %v303
  %360 = vmatpush.bf16.xpose.msra.mxu0 %v321
  %361 = vmatpush.bf16.xpose.msra.mxu0 %v318
  %362 = vmatpush.bf16.xpose.msra.mxu0 %v315
  %363 = vmatmul.bf16.gmra.mxu0 %v285
  %v364 = vpop.f32.mrf.mxu0
  %v365 = vadd.f32 %v92, %v364
  %v366 = vpop.f32.mrf.mxu0
  %v367 = vadd.f32 %v94, %v366
  %368 = vmatmul.bf16.gmra.mxu0 %v288
  %v369 = vpop.f32.mrf.mxu0
  %v370 = vadd.f32 %v96, %v369
  %v371 = vpop.f32.mrf.mxu0
  %v372 = vadd.f32 %v98, %v371
  %373 = vmatmul.bf16.gmra.mxu0 %v291
  %v374 = vpop.f32.mrf.mxu0
  %v375 = vadd.f32 %v100, %v374
  %v376 = vpop.f32.mrf.mxu0
  %377 = vdwg.mxu0
  %vm378 = vcmask 523264
  %v379 = vsel %vm378, %v342, -inf
  %380 = vmax.xlane.f32.xlu0 %v379
  %v381 = vpop.xlane.xlu0 %380
  %v382 = vsel %vm378, %v344, -inf
  %383 = vmax.xlane.f32.xlu0 %v382
  %v384 = vpop.xlane.xlu0 %383
  %v385 = vsel %vm378, %v347, -inf
  %386 = vmax.xlane.f32.xlu0 %v385
  %v387 = vpop.xlane.xlu0 %386
  %v388 = vsel %vm378, %v349, -inf
  %389 = vmax.xlane.f32.xlu0 %v388
  %v390 = vpop.xlane.xlu0 %389
  %v391 = vsel %vm378, %v352, -inf
  %392 = vmax.xlane.f32.xlu0 %v391
  %v393 = vpop.xlane.xlu0 %392
  %v394 = vsub.f32 %v342, %v381
  %v395 = vsub.f32 %v344, %v384
  %v396 = vsub.f32 %v347, %v387
  %v397 = vsub.f32 %v349, %v390
  %v398 = vsub.f32 %v352, %v393
  %v399 = vmul.f32 %v394, 1.442695
  %v400 = vpow.pop %v399
  %v401 = vmul.f32 %v395, 1.442695
  %v402 = vpow.pop %v401
  %v403 = vmul.f32 %v396, 1.442695
  %v404 = vpow.pop %v403
  %v405 = vmul.f32 %v397, 1.442695
  %v406 = vpow.pop %v405
  %v407 = vmul.f32 %v398, 1.442695
  %v408 = vpow.pop %v407
  %v409 = vsel %vm378, %v400, 0.0
  %410 = vadd.xlane.f32.xlu0 %v409
  %v411 = vpop.xlane.xlu0 %410
  %v412 = vsel %vm378, %v402, 0.0
  %413 = vadd.xlane.f32.xlu0 %v412
  %v414 = vpop.xlane.xlu0 %413
  %v415 = vsel %vm378, %v404, 0.0
  %416 = vadd.xlane.f32.xlu0 %v415
  %v417 = vpop.xlane.xlu0 %416
  %v418 = vsel %vm378, %v406, 0.0
  %419 = vadd.xlane.f32.xlu0 %v418
  %v420 = vpop.xlane.xlu0 %419
  %v421 = vsel %vm378, %v408, 0.0
  %422 = vadd.xlane.f32.xlu0 %v421
  %v423 = vpop.xlane.xlu0 %422
  %v424 = vrcp.pop %v411
  %v425 = vmul.f32 %v411, %v424
  %v426 = vsub.f32 1.0, %v425
  %v427 = vmul.f32 %v424, %v426
  %v428 = vadd.f32 %v424, %v427
  %vm429 = vweird.f32 %v411
  %vm430 = vweird.f32 %v424
  %vm431 = vmor %vm429, %vm430
  %v432 = vsel %vm431, %v424, %v428
  %v433 = vand.u32 2147483647, %v411
  %vm434 = vcmp.eq.f32.partialorder %v433, 8.507059e+37
  %v435 = vand.u32 %v411, 2147483648
  %v436 = vor.u32 1.1754944e-38, %v435
  %v437 = vsel %vm434, %v436, %v432
  %v438 = vrcp.pop %v414
  %v439 = vmul.f32 %v414, %v438
  %v440 = vsub.f32 1.0, %v439
  %v441 = vmul.f32 %v438, %v440
  %v442 = vadd.f32 %v438, %v441
  %vm443 = vweird.f32 %v414
  %vm444 = vweird.f32 %v438
  %vm445 = vmor %vm443, %vm444
  %v446 = vsel %vm445, %v438, %v442
  %v447 = vand.u32 2147483647, %v414
  %vm448 = vcmp.eq.f32.partialorder %v447, 8.507059e+37
  %v449 = vand.u32 %v414, 2147483648
  %v450 = vor.u32 1.1754944e-38, %v449
  %v451 = vsel %vm448, %v450, %v446
  %v452 = vrcp.pop %v417
  %v453 = vmul.f32 %v417, %v452
  %v454 = vsub.f32 1.0, %v453
  %v455 = vmul.f32 %v452, %v454
  %v456 = vadd.f32 %v452, %v455
  %vm457 = vweird.f32 %v417
  %vm458 = vweird.f32 %v452
  %vm459 = vmor %vm457, %vm458
  %v460 = vsel %vm459, %v452, %v456
  %v461 = vand.u32 2147483647, %v417
  %vm462 = vcmp.eq.f32.partialorder %v461, 8.507059e+37
  %v463 = vand.u32 %v417, 2147483648
  %v464 = vor.u32 1.1754944e-38, %v463
  %v465 = vsel %vm462, %v464, %v460
  %v466 = vrcp.pop %v420
  %v467 = vmul.f32 %v420, %v466
  %v468 = vsub.f32 1.0, %v467
  %v469 = vmul.f32 %v466, %v468
  %v470 = vadd.f32 %v466, %v469
  %vm471 = vweird.f32 %v420
  %vm472 = vweird.f32 %v466
  %vm473 = vmor %vm471, %vm472
  %v474 = vsel %vm473, %v466, %v470
  %v475 = vand.u32 2147483647, %v420
  %vm476 = vcmp.eq.f32.partialorder %v475, 8.507059e+37
  %v477 = vand.u32 %v420, 2147483648
  %v478 = vor.u32 1.1754944e-38, %v477
  %v479 = vsel %vm476, %v478, %v474
  %v480 = vrcp.pop %v423
  %v481 = vmul.f32 %v423, %v480
  %v482 = vsub.f32 1.0, %v481
  %v483 = vmul.f32 %v480, %v482
  %v484 = vadd.f32 %v480, %v483
  %vm485 = vweird.f32 %v423
  %vm486 = vweird.f32 %v480
  %vm487 = vmor %vm485, %vm486
  %v488 = vsel %vm487, %v480, %v484
  %v489 = vand.u32 2147483647, %v423
  %vm490 = vcmp.eq.f32.partialorder %v489, 8.507059e+37
  %v491 = vand.u32 %v423, 2147483648
  %v492 = vor.u32 1.1754944e-38, %v491
  %v493 = vsel %vm490, %v492, %v488
  %v494 = vmul.f32 %v400, %v437
  %v495 = vmul.f32 %v402, %v451
  %v496 = vmul.f32 %v404, %v465
  %v497 = vmul.f32 %v406, %v479
  %v498 = vmul.f32 %v408, %v493
  %vm499 = vcmask 1048064
  %v500 = vsel %vm499, %v342, -inf
  %501 = vmax.xlane.f32.xlu0 %v500
  %v502 = vpop.xlane.xlu0 %501
  %v503 = vsel %vm499, %v344, -inf
  %504 = vmax.xlane.f32.xlu0 %v503
  %v505 = vpop.xlane.xlu0 %504
  %v506 = vsel %vm499, %v347, -inf
  %507 = vmax.xlane.f32.xlu0 %v506
  %v508 = vpop.xlane.xlu0 %507
  %v509 = vsel %vm499, %v349, -inf
  %510 = vmax.xlane.f32.xlu0 %v509
  %v511 = vpop.xlane.xlu0 %510
  %v512 = vsel %vm499, %v352, -inf
  %513 = vmax.xlane.f32.xlu0 %v512
  %v514 = vpop.xlane.xlu0 %513
  %v515 = vsub.f32 %v342, %v502
  %v516 = vsub.f32 %v344, %v505
  %v517 = vsub.f32 %v347, %v508
  %v518 = vsub.f32 %v349, %v511
  %v519 = vsub.f32 %v352, %v514
  %v520 = vmul.f32 %v515, 1.442695
  %v521 = vpow.pop %v520
  %v522 = vmul.f32 %v516, 1.442695
  %v523 = vpow.pop %v522
  %v524 = vmul.f32 %v517, 1.442695
  %v525 = vpow.pop %v524
  %v526 = vmul.f32 %v518, 1.442695
  %v527 = vpow.pop %v526
  %v528 = vmul.f32 %v519, 1.442695
  %v529 = vpow.pop %v528
  %535 = vrot.lane.b32.xlu0 %v521, 64
  %v536 = vpop.permute.xlu0 %535
  %537 = vrot.lane.b32.xlu0 %v523, 64
  %v538 = vpop.permute.xlu0 %537
  %539 = vrot.lane.b32.xlu0 %v525, 64
  %v540 = vpop.permute.xlu0 %539
  %541 = vrot.lane.b32.xlu0 %v527, 64
  %v542 = vpop.permute.xlu0 %541
  %543 = vrot.lane.b32.xlu0 %v529, 64
  %v544 = vpop.permute.xlu0 %543
  %v550 = vsel %vm378, %v536, 0.0
  %551 = vadd.xlane.f32.xlu0 %v550
  %v552 = vpop.xlane.xlu0 %551
  %v553 = vsel %vm378, %v538, 0.0
  %554 = vadd.xlane.f32.xlu0 %v553
  %v555 = vpop.xlane.xlu0 %554
  %v556 = vsel %vm378, %v540, 0.0
  %557 = vadd.xlane.f32.xlu0 %v556
  %v558 = vpop.xlane.xlu0 %557
  %v559 = vsel %vm378, %v542, 0.0
  %560 = vadd.xlane.f32.xlu0 %v559
  %v561 = vpop.xlane.xlu0 %560
  %v562 = vsel %vm378, %v544, 0.0
  %563 = vadd.xlane.f32.xlu0 %v562
  %v564 = vpop.xlane.xlu0 %563
  %v565 = vrcp.pop %v552
  %v566 = vmul.f32 %v552, %v565
  %v567 = vsub.f32 1.0, %v566
  %v568 = vmul.f32 %v565, %v567
  %v569 = vadd.f32 %v565, %v568
  %vm570 = vweird.f32 %v552
  %vm571 = vweird.f32 %v565
  %vm572 = vmor %vm570, %vm571
  %v573 = vsel %vm572, %v565, %v569
  %v574 = vand.u32 2147483647, %v552
  %vm575 = vcmp.eq.f32.partialorder %v574, 8.507059e+37
  %v576 = vand.u32 %v552, 2147483648
  %v577 = vor.u32 1.1754944e-38, %v576
  %v578 = vsel %vm575, %v577, %v573
  %v579 = vrcp.pop %v555
  %v580 = vmul.f32 %v555, %v579
  %v581 = vsub.f32 1.0, %v580
  %v582 = vmul.f32 %v579, %v581
  %v583 = vadd.f32 %v579, %v582
  %vm584 = vweird.f32 %v555
  %vm585 = vweird.f32 %v579
  %vm586 = vmor %vm584, %vm585
  %v587 = vsel %vm586, %v579, %v583
  %v588 = vand.u32 2147483647, %v555
  %vm589 = vcmp.eq.f32.partialorder %v588, 8.507059e+37
  %v590 = vand.u32 %v555, 2147483648
  %v591 = vor.u32 1.1754944e-38, %v590
  %v592 = vsel %vm589, %v591, %v587
  %v593 = vrcp.pop %v558
  %v594 = vmul.f32 %v558, %v593
  %v595 = vsub.f32 1.0, %v594
  %v596 = vmul.f32 %v593, %v595
  %v597 = vadd.f32 %v593, %v596
  %vm598 = vweird.f32 %v558
  %vm599 = vweird.f32 %v593
  %vm600 = vmor %vm598, %vm599
  %v601 = vsel %vm600, %v593, %v597
  %v602 = vand.u32 2147483647, %v558
  %vm603 = vcmp.eq.f32.partialorder %v602, 8.507059e+37
  %v604 = vand.u32 %v558, 2147483648
  %v605 = vor.u32 1.1754944e-38, %v604
  %v606 = vsel %vm603, %v605, %v601
  %v607 = vrcp.pop %v561
  %v608 = vmul.f32 %v561, %v607
  %v609 = vsub.f32 1.0, %v608
  %v610 = vmul.f32 %v607, %v609
  %v611 = vadd.f32 %v607, %v610
  %vm612 = vweird.f32 %v561
  %vm613 = vweird.f32 %v607
  %vm614 = vmor %vm612, %vm613
  %v615 = vsel %vm614, %v607, %v611
  %v616 = vand.u32 2147483647, %v561
  %vm617 = vcmp.eq.f32.partialorder %v616, 8.507059e+37
  %v618 = vand.u32 %v561, 2147483648
  %v619 = vor.u32 1.1754944e-38, %v618
  %v620 = vsel %vm617, %v619, %v615
  %v621 = vrcp.pop %v564
  %v622 = vmul.f32 %v564, %v621
  %v623 = vsub.f32 1.0, %v622
  %v624 = vmul.f32 %v621, %v623
  %v625 = vadd.f32 %v621, %v624
  %vm626 = vweird.f32 %v564
  %vm627 = vweird.f32 %v621
  %vm628 = vmor %vm626, %vm627
  %v629 = vsel %vm628, %v621, %v625
  %v630 = vand.u32 2147483647, %v564
  %vm631 = vcmp.eq.f32.partialorder %v630, 8.507059e+37
  %v632 = vand.u32 %v564, 2147483648
  %v633 = vor.u32 1.1754944e-38, %v632
  %v634 = vsel %vm631, %v633, %v629
  %v635 = vmul.f32 %v521, %v578
  %v636 = vmul.f32 %v523, %v592
  %v637 = vmul.f32 %v525, %v606
  %v638 = vmul.f32 %v527, %v620
  %v639 = vmul.f32 %v529, %v634
  %v640 = vsel %vm378, %v365, -inf
  %641 = vmax.xlane.f32.xlu0 %v640
  %v642 = vpop.xlane.xlu0 %641
  %v643 = vsel %vm378, %v367, -inf
  %644 = vmax.xlane.f32.xlu0 %v643
  %v645 = vpop.xlane.xlu0 %644
  %v646 = vsel %vm378, %v370, -inf
  %647 = vmax.xlane.f32.xlu0 %v646
  %v648 = vpop.xlane.xlu0 %647
  %v649 = vsel %vm378, %v372, -inf
  %650 = vmax.xlane.f32.xlu0 %v649
  %v651 = vpop.xlane.xlu0 %650
  %v652 = vsel %vm378, %v375, -inf
  %653 = vmax.xlane.f32.xlu0 %v652
  %v654 = vpop.xlane.xlu0 %653
  %v655 = vsub.f32 %v365, %v642
  %v656 = vsub.f32 %v367, %v645
  %v657 = vsub.f32 %v370, %v648
  %v658 = vsub.f32 %v372, %v651
  %v659 = vsub.f32 %v375, %v654
  %v660 = vmul.f32 %v655, 1.442695
  %v661 = vpow.pop %v660
  %v662 = vmul.f32 %v656, 1.442695
  %v663 = vpow.pop %v662
  %v664 = vmul.f32 %v657, 1.442695
  %v665 = vpow.pop %v664
  %v666 = vmul.f32 %v658, 1.442695
  %v667 = vpow.pop %v666
  %v668 = vmul.f32 %v659, 1.442695
  %v669 = vpow.pop %v668
  %v670 = vsel %vm378, %v661, 0.0
  %671 = vadd.xlane.f32.xlu0 %v670
  %v672 = vpop.xlane.xlu0 %671
  %v673 = vsel %vm378, %v663, 0.0
  %674 = vadd.xlane.f32.xlu0 %v673
  %v675 = vpop.xlane.xlu0 %674
  %v676 = vsel %vm378, %v665, 0.0
  %677 = vadd.xlane.f32.xlu0 %v676
  %v678 = vpop.xlane.xlu0 %677
  %v679 = vsel %vm378, %v667, 0.0
  %680 = vadd.xlane.f32.xlu0 %v679
  %v681 = vpop.xlane.xlu0 %680
  %v682 = vsel %vm378, %v669, 0.0
  %683 = vadd.xlane.f32.xlu0 %v682
  %v684 = vpop.xlane.xlu0 %683
  %v685 = vrcp.pop %v672
  %v686 = vmul.f32 %v672, %v685
  %v687 = vsub.f32 1.0, %v686
  %v688 = vmul.f32 %v685, %v687
  %v689 = vadd.f32 %v685, %v688
  %vm690 = vweird.f32 %v672
  %vm691 = vweird.f32 %v685
  %vm692 = vmor %vm690, %vm691
  %v693 = vsel %vm692, %v685, %v689
  %v694 = vand.u32 2147483647, %v672
  %vm695 = vcmp.eq.f32.partialorder %v694, 8.507059e+37
  %v696 = vand.u32 %v672, 2147483648
  %v697 = vor.u32 1.1754944e-38, %v696
  %v698 = vsel %vm695, %v697, %v693
  %v699 = vrcp.pop %v675
  %v700 = vmul.f32 %v675, %v699
  %v701 = vsub.f32 1.0, %v700
  %v702 = vmul.f32 %v699, %v701
  %v703 = vadd.f32 %v699, %v702
  %vm704 = vweird.f32 %v675
  %vm705 = vweird.f32 %v699
  %vm706 = vmor %vm704, %vm705
  %v707 = vsel %vm706, %v699, %v703
  %v708 = vand.u32 2147483647, %v675
  %vm709 = vcmp.eq.f32.partialorder %v708, 8.507059e+37
  %v710 = vand.u32 %v675, 2147483648
  %v711 = vor.u32 1.1754944e-38, %v710
  %v712 = vsel %vm709, %v711, %v707
  %v713 = vrcp.pop %v678
  %v714 = vmul.f32 %v678, %v713
  %v715 = vsub.f32 1.0, %v714
  %v716 = vmul.f32 %v713, %v715
  %v717 = vadd.f32 %v713, %v716
  %vm718 = vweird.f32 %v678
  %vm719 = vweird.f32 %v713
  %vm720 = vmor %vm718, %vm719
  %v721 = vsel %vm720, %v713, %v717
  %v722 = vand.u32 2147483647, %v678
  %vm723 = vcmp.eq.f32.partialorder %v722, 8.507059e+37
  %v724 = vand.u32 %v678, 2147483648
  %v725 = vor.u32 1.1754944e-38, %v724
  %v726 = vsel %vm723, %v725, %v721
  %v727 = vrcp.pop %v681
  %v728 = vmul.f32 %v681, %v727
  %v729 = vsub.f32 1.0, %v728
  %v730 = vmul.f32 %v727, %v729
  %v731 = vadd.f32 %v727, %v730
  %vm732 = vweird.f32 %v681
  %vm733 = vweird.f32 %v727
  %vm734 = vmor %vm732, %vm733
  %v735 = vsel %vm734, %v727, %v731
  %v736 = vand.u32 2147483647, %v681
  %vm737 = vcmp.eq.f32.partialorder %v736, 8.507059e+37
  %v738 = vand.u32 %v681, 2147483648
  %v739 = vor.u32 1.1754944e-38, %v738
  %v740 = vsel %vm737, %v739, %v735
  %v741 = vrcp.pop %v684
  %v742 = vmul.f32 %v684, %v741
  %v743 = vsub.f32 1.0, %v742
  %v744 = vmul.f32 %v741, %v743
  %v745 = vadd.f32 %v741, %v744
  %vm746 = vweird.f32 %v684
  %vm747 = vweird.f32 %v741
  %vm748 = vmor %vm746, %vm747
  %v749 = vsel %vm748, %v741, %v745
  %v750 = vand.u32 2147483647, %v684
  %vm751 = vcmp.eq.f32.partialorder %v750, 8.507059e+37
  %v752 = vand.u32 %v684, 2147483648
  %v753 = vor.u32 1.1754944e-38, %v752
  %v754 = vsel %vm751, %v753, %v749
  %v755 = vmul.f32 %v661, %v698
  %v756 = vmul.f32 %v663, %v712
  %v757 = vmul.f32 %v665, %v726
  %v758 = vmul.f32 %v667, %v740
  %v759 = vmul.f32 %v669, %v754
  %v760 = vsel %vm499, %v365, -inf
  %761 = vmax.xlane.f32.xlu0 %v760
  %v762 = vpop.xlane.xlu0 %761
  %v763 = vsel %vm499, %v367, -inf
  %764 = vmax.xlane.f32.xlu0 %v763
  %v765 = vpop.xlane.xlu0 %764
  %v766 = vsel %vm499, %v370, -inf
  %767 = vmax.xlane.f32.xlu0 %v766
  %v768 = vpop.xlane.xlu0 %767
  %v769 = vsel %vm499, %v372, -inf
  %770 = vmax.xlane.f32.xlu0 %v769
  %v771 = vpop.xlane.xlu0 %770
  %v772 = vsel %vm499, %v375, -inf
  %773 = vmax.xlane.f32.xlu0 %v772
  %v774 = vpop.xlane.xlu0 %773
  %v775 = vsub.f32 %v365, %v762
  %v776 = vsub.f32 %v367, %v765
  %v777 = vsub.f32 %v370, %v768
  %v778 = vsub.f32 %v372, %v771
  %v779 = vsub.f32 %v375, %v774
  %v780 = vmul.f32 %v775, 1.442695
  %v781 = vpow.pop %v780
  %v782 = vmul.f32 %v776, 1.442695
  %v783 = vpow.pop %v782
  %v784 = vmul.f32 %v777, 1.442695
  %v785 = vpow.pop %v784
  %v786 = vmul.f32 %v778, 1.442695
  %v787 = vpow.pop %v786
  %v788 = vmul.f32 %v779, 1.442695
  %v789 = vpow.pop %v788
  %795 = vrot.lane.b32.xlu0 %v781, 64
  %v796 = vpop.permute.xlu0 %795
  %797 = vrot.lane.b32.xlu0 %v783, 64
  %v798 = vpop.permute.xlu0 %797
  %799 = vrot.lane.b32.xlu0 %v785, 64
  %v800 = vpop.permute.xlu0 %799
  %801 = vrot.lane.b32.xlu0 %v787, 64
  %v802 = vpop.permute.xlu0 %801
  %803 = vrot.lane.b32.xlu0 %v789, 64
  %v804 = vpop.permute.xlu0 %803
  %v810 = vsel %vm378, %v796, 0.0
  %811 = vadd.xlane.f32.xlu0 %v810
  %v812 = vpop.xlane.xlu0 %811
  %v813 = vsel %vm378, %v798, 0.0
  %814 = vadd.xlane.f32.xlu0 %v813
  %v815 = vpop.xlane.xlu0 %814
  %v816 = vsel %vm378, %v800, 0.0
  %817 = vadd.xlane.f32.xlu0 %v816
  %v818 = vpop.xlane.xlu0 %817
  %v819 = vsel %vm378, %v802, 0.0
  %820 = vadd.xlane.f32.xlu0 %v819
  %v821 = vpop.xlane.xlu0 %820
  %v822 = vsel %vm378, %v804, 0.0
  %823 = vadd.xlane.f32.xlu0 %v822
  %v824 = vpop.xlane.xlu0 %823
  %v825 = vrcp.pop %v812
  %v826 = vmul.f32 %v812, %v825
  %v827 = vsub.f32 1.0, %v826
  %v828 = vmul.f32 %v825, %v827
  %v829 = vadd.f32 %v825, %v828
  %vm830 = vweird.f32 %v812
  %vm831 = vweird.f32 %v825
  %vm832 = vmor %vm830, %vm831
  %v833 = vsel %vm832, %v825, %v829
  %v834 = vand.u32 2147483647, %v812
  %vm835 = vcmp.eq.f32.partialorder %v834, 8.507059e+37
  %v836 = vand.u32 %v812, 2147483648
  %v837 = vor.u32 1.1754944e-38, %v836
  %v838 = vsel %vm835, %v837, %v833
  %v839 = vrcp.pop %v815
  %v840 = vmul.f32 %v815, %v839
  %v841 = vsub.f32 1.0, %v840
  %v842 = vmul.f32 %v839, %v841
  %v843 = vadd.f32 %v839, %v842
  %vm844 = vweird.f32 %v815
  %vm845 = vweird.f32 %v839
  %vm846 = vmor %vm844, %vm845
  %v847 = vsel %vm846, %v839, %v843
  %v848 = vand.u32 2147483647, %v815
  %vm849 = vcmp.eq.f32.partialorder %v848, 8.507059e+37
  %v850 = vand.u32 %v815, 2147483648
  %v851 = vor.u32 1.1754944e-38, %v850
  %v852 = vsel %vm849, %v851, %v847
  %v853 = vrcp.pop %v818
  %v854 = vmul.f32 %v818, %v853
  %v855 = vsub.f32 1.0, %v854
  %v856 = vmul.f32 %v853, %v855
  %v857 = vadd.f32 %v853, %v856
  %vm858 = vweird.f32 %v818
  %vm859 = vweird.f32 %v853
  %vm860 = vmor %vm858, %vm859
  %v861 = vsel %vm860, %v853, %v857
  %v862 = vand.u32 2147483647, %v818
  %vm863 = vcmp.eq.f32.partialorder %v862, 8.507059e+37
  %v864 = vand.u32 %v818, 2147483648
  %v865 = vor.u32 1.1754944e-38, %v864
  %v866 = vsel %vm863, %v865, %v861
  %v867 = vrcp.pop %v821
  %v868 = vmul.f32 %v821, %v867
  %v869 = vsub.f32 1.0, %v868
  %v870 = vmul.f32 %v867, %v869
  %v871 = vadd.f32 %v867, %v870
  %vm872 = vweird.f32 %v821
  %vm873 = vweird.f32 %v867
  %vm874 = vmor %vm872, %vm873
  %v875 = vsel %vm874, %v867, %v871
  %v876 = vand.u32 2147483647, %v821
  %vm877 = vcmp.eq.f32.partialorder %v876, 8.507059e+37
  %v878 = vand.u32 %v821, 2147483648
  %v879 = vor.u32 1.1754944e-38, %v878
  %v880 = vsel %vm877, %v879, %v875
  %v881 = vrcp.pop %v824
  %v882 = vmul.f32 %v824, %v881
  %v883 = vsub.f32 1.0, %v882
  %v884 = vmul.f32 %v881, %v883
  %v885 = vadd.f32 %v881, %v884
  %vm886 = vweird.f32 %v824
  %vm887 = vweird.f32 %v881
  %vm888 = vmor %vm886, %vm887
  %v889 = vsel %vm888, %v881, %v885
  %v890 = vand.u32 2147483647, %v824
  %vm891 = vcmp.eq.f32.partialorder %v890, 8.507059e+37
  %v892 = vand.u32 %v824, 2147483648
  %v893 = vor.u32 1.1754944e-38, %v892
  %v894 = vsel %vm891, %v893, %v889
  %v895 = vmul.f32 %v781, %v838
  %v896 = vmul.f32 %v783, %v852
  %v897 = vmul.f32 %v785, %v866
  %v898 = vmul.f32 %v787, %v880
  %v899 = vmul.f32 %v789, %v894
  %v900 = vsel %vm378, %v494, %v635
  %v901 = vsel %vm378, %v495, %v636
  %v902 = vsel %vm378, %v496, %v637
  %v903 = vsel %vm378, %v497, %v638
  %v904 = vsel %vm378, %v498, %v639
  %v905 = vsel %vm378, %v755, %v895
  %v906 = vsel %vm378, %v756, %v896
  %v907 = vsel %vm378, %v757, %v897
  %v908 = vsel %vm378, %v758, %v898
  %v909 = vsel %vm378, %v759, %v899
  %v910 = vpack.c.bf16 %v901, %v900
  %v911 = vpack.c.bf16 %v906, %v905
  %v912 = vpack.c.bf16 %v903, %v902
  %v913 = vpack.c.bf16 %v908, %v907
  %v914 = vpack.c.bf16 %v904, %v904
  %v915 = vpack.c.bf16 %v909, %v909
  %916 = vmatpush.bf16.msra.mxu0 %v259
  %917 = vmatpush.bf16.msra.mxu0 %v274
  %918 = vmatpush.bf16.msra.mxu0 %v273
  %919 = vmatpush.bf16.msra.mxu0 %v272
  %920 = vmatpush.bf16.msra.mxu0 %v259
  %921 = vmatpush.bf16.msra.mxu0 %v271
  %922 = vmatpush.bf16.msra.mxu0 %v270
  %923 = vmatpush.bf16.msra.mxu0 %v269
  %924 = vmatmul.bf16.gmra.mxu0 %v910
  %v925 = vpop.f32.mrf.mxu0
  %v926 = vadd.f32 0.0, %v925
  %v927 = vpop.f32.mrf.mxu0
  %v928 = vadd.f32 0.0, %v927
  %929 = vmatmul.bf16.gmra.mxu0 %v912
  %v930 = vpop.f32.mrf.mxu0
  %v931 = vadd.f32 0.0, %v930
  %v932 = vpop.f32.mrf.mxu0
  %v933 = vadd.f32 0.0, %v932
  %934 = vmatmul.bf16.gmra.mxu0 %v914
  %v935 = vpop.f32.mrf.mxu0
  %v936 = vadd.f32 0.0, %v935
  %v937 = vpop.f32.mrf.mxu0
  %938 = vdwg.mxu0
  %939 = vmatpush.bf16.msra.mxu0 %v259
  %940 = vmatpush.bf16.msra.mxu0 %v280
  %941 = vmatpush.bf16.msra.mxu0 %v279
  %942 = vmatpush.bf16.msra.mxu0 %v278
  %943 = vmatpush.bf16.msra.mxu0 %v259
  %944 = vmatpush.bf16.msra.mxu0 %v277
  %945 = vmatpush.bf16.msra.mxu0 %v276
  %946 = vmatpush.bf16.msra.mxu0 %v275
  %947 = vmatmul.bf16.gmra.mxu0 %v911
  %v948 = vpop.f32.mrf.mxu0
  %v949 = vadd.f32 %v926, %v948
  %v950 = vpop.f32.mrf.mxu0
  %v951 = vadd.f32 %v928, %v950
  %952 = vmatmul.bf16.gmra.mxu0 %v913
  %v953 = vpop.f32.mrf.mxu0
  %v954 = vadd.f32 %v931, %v953
  %v955 = vpop.f32.mrf.mxu0
  %v956 = vadd.f32 %v933, %v955
  %957 = vmatmul.bf16.gmra.mxu0 %v915
  %v958 = vpop.f32.mrf.mxu0
  %v959 = vadd.f32 %v936, %v958
  %v960 = vpop.f32.mrf.mxu0
  %961 = vdwg.mxu0
  %v962 = vpack.c.bf16 %v951, %v949
  %v963 = vpack.c.bf16 %v956, %v954
  %v964 = vpack.c.bf16 %v959, %v959
  %v965 = vperm.slane %v123, 2
  %966 = vrot.lane.b32.xlu0 %v136, 32
  %v967 = vpop.permute.xlu0 %966
  %968 = vrot.lane.b32.xlu0 %v137, 32
  %v969 = vpop.permute.xlu0 %968
  %v973 = vsel %vm140, %v962, 0
  %v976 = vsel %vm140, %v963, 0
  %v979 = vsel %vm140, %v964, 0
  %981 = vmatpush.bf16.msra.mxu0 0
  %982 = vmatpush.bf16.msra.mxu0 0
  %983 = vmatpush.bf16.msra.mxu0 0
  %984 = vmatpush.bf16.msra.mxu0 0
  %985 = vmatpush.bf16.msra.mxu0 0
  %986 = vmatpush.bf16.msra.mxu0 0
  %987 = vmatpush.bf16.msra.mxu0 %v969
  %988 = vmatpush.bf16.msra.mxu0 %v967
  %989 = vmatmul.bf16.gmra.mxu0 %v973
  %v990 = vpop.f32.mrf.mxu0
  %v991 = vadd.f32 %v965, %v990
  %v992 = vpop.f32.mrf.mxu0
  %v993 = vadd.f32 %v965, %v992
  %994 = vmatmul.bf16.gmra.mxu0 %v976
  %v995 = vpop.f32.mrf.mxu0
  %v996 = vadd.f32 %v965, %v995
  %v997 = vpop.f32.mrf.mxu0
  %v998 = vadd.f32 %v965, %v997
  %999 = vmatmul.bf16.gmra.mxu0 %v979
  %v1000 = vpop.f32.mrf.mxu0
  %v1001 = vadd.f32 %v965, %v1000
  %v1002 = vpop.f32.mrf.mxu0
  %1003 = vdwg.mxu0
  %v1004 = vadd.f32 %v77, %v991
  %v1005 = vadd.f32 %v80, %v993
  %v1006 = vadd.f32 %v83, %v996
  %v1007 = vadd.f32 %v86, %v998
  %v1008 = vadd.f32 %v89, %v1001
  %v1009 = vsel %vm140, %v1004, 0.0
  %1010 = vadd.xlane.f32.xlu0 %v1009
  %v1011 = vpop.xlane.xlu0 %1010
  %v1012 = vsel %vm140, %v1005, 0.0
  %1013 = vadd.xlane.f32.xlu0 %v1012
  %v1014 = vpop.xlane.xlu0 %1013
  %v1015 = vsel %vm140, %v1006, 0.0
  %1016 = vadd.xlane.f32.xlu0 %v1015
  %v1017 = vpop.xlane.xlu0 %1016
  %v1018 = vsel %vm140, %v1007, 0.0
  %1019 = vadd.xlane.f32.xlu0 %v1018
  %v1020 = vpop.xlane.xlu0 %1019
  %v1021 = vsel %vm140, %v1008, 0.0
  %1022 = vadd.xlane.f32.xlu0 %v1021
  %v1023 = vpop.xlane.xlu0 %1022
  %v1024 = vrcp.pop 32.0
  %v1025 = vmul.f32 32.0, %v1024
  %v1026 = vsub.f32 1.0, %v1025
  %v1027 = vmul.f32 %v1024, %v1026
  %v1028 = vadd.f32 %v1024, %v1027
  %vm1029 = vweird.f32 %v1024
  %v1030 = vsel %vm1029, %v1024, %v1028
  %v1031 = vmul.f32 %v1011, %v1030
  %v1032 = vmul.f32 %v1014, %v1030
  %v1033 = vmul.f32 %v1017, %v1030
  %v1034 = vmul.f32 %v1020, %v1030
  %v1035 = vmul.f32 %v1023, %v1030
  %v1036 = vsub.f32 %v1004, %v1031
  %v1037 = vsub.f32 %v1005, %v1032
  %v1038 = vsub.f32 %v1006, %v1033
  %v1039 = vsub.f32 %v1007, %v1034
  %v1040 = vsub.f32 %v1008, %v1035
  %v1041 = vmul.f32 %v1036, %v1036
  %v1042 = vmul.f32 %v1037, %v1037
  %v1043 = vmul.f32 %v1038, %v1038
  %v1044 = vmul.f32 %v1039, %v1039
  %v1045 = vmul.f32 %v1040, %v1040
  %v1046 = vsel %vm140, %v1041, 0.0
  %1047 = vadd.xlane.f32.xlu0 %v1046
  %v1048 = vpop.xlane.xlu0 %1047
  %v1049 = vsel %vm140, %v1042, 0.0
  %1050 = vadd.xlane.f32.xlu0 %v1049
  %v1051 = vpop.xlane.xlu0 %1050
  %v1052 = vsel %vm140, %v1043, 0.0
  %1053 = vadd.xlane.f32.xlu0 %v1052
  %v1054 = vpop.xlane.xlu0 %1053
  %v1055 = vsel %vm140, %v1044, 0.0
  %1056 = vadd.xlane.f32.xlu0 %v1055
  %v1057 = vpop.xlane.xlu0 %1056
  %v1058 = vsel %vm140, %v1045, 0.0
  %1059 = vadd.xlane.f32.xlu0 %v1058
  %v1060 = vpop.xlane.xlu0 %1059
  %v1061 = vmul.f32 %v1048, %v1030
  %v1062 = vmul.f32 %v1051, %v1030
  %v1063 = vmul.f32 %v1054, %v1030
  %v1064 = vmul.f32 %v1057, %v1030
  %v1065 = vmul.f32 %v1060, %v1030
  %v1066 = vadd.f32 %v1061, 1e-05
  %v1067 = vadd.f32 %v1062, 1e-05
  %v1068 = vadd.f32 %v1063, 1e-05
  %v1069 = vadd.f32 %v1064, 1e-05
  %v1070 = vadd.f32 %v1065, 1e-05
  %v1071 = vrsqrt.pop %v1066
  %v1072 = vmul.f32 %v1071, %v1066
  %v1073 = vmul.f32 %v1072, %v1071
  %v1074 = vmul.f32 0.5, %v1073
  %v1075 = vsub.f32 1.5, %v1074
  %v1076 = vmul.f32 %v1071, %v1075
  %vm1077 = vweird.f32 %v1066
  %vm1078 = vweird.f32 %v1071
  %vm1079 = vmor %vm1077, %vm1078
  %v1080 = vsel %vm1079, %v1071, %v1076
  %v1081 = vrsqrt.pop %v1067
  %v1082 = vmul.f32 %v1081, %v1067
  %v1083 = vmul.f32 %v1082, %v1081
  %v1084 = vmul.f32 0.5, %v1083
  %v1085 = vsub.f32 1.5, %v1084
  %v1086 = vmul.f32 %v1081, %v1085
  %vm1087 = vweird.f32 %v1067
  %vm1088 = vweird.f32 %v1081
  %vm1089 = vmor %vm1087, %vm1088
  %v1090 = vsel %vm1089, %v1081, %v1086
  %v1091 = vrsqrt.pop %v1068
  %v1092 = vmul.f32 %v1091, %v1068
  %v1093 = vmul.f32 %v1092, %v1091
  %v1094 = vmul.f32 0.5, %v1093
  %v1095 = vsub.f32 1.5, %v1094
  %v1096 = vmul.f32 %v1091, %v1095
  %vm1097 = vweird.f32 %v1068
  %vm1098 = vweird.f32 %v1091
  %vm1099 = vmor %vm1097, %vm1098
  %v1100 = vsel %vm1099, %v1091, %v1096
  %v1101 = vrsqrt.pop %v1069
  %v1102 = vmul.f32 %v1101, %v1069
  %v1103 = vmul.f32 %v1102, %v1101
  %v1104 = vmul.f32 0.5, %v1103
  %v1105 = vsub.f32 1.5, %v1104
  %v1106 = vmul.f32 %v1101, %v1105
  %vm1107 = vweird.f32 %v1069
  %vm1108 = vweird.f32 %v1101
  %vm1109 = vmor %vm1107, %vm1108
  %v1110 = vsel %vm1109, %v1101, %v1106
  %v1111 = vrsqrt.pop %v1070
  %v1112 = vmul.f32 %v1111, %v1070
  %v1113 = vmul.f32 %v1112, %v1111
  %v1114 = vmul.f32 0.5, %v1113
  %v1115 = vsub.f32 1.5, %v1114
  %v1116 = vmul.f32 %v1111, %v1115
  %vm1117 = vweird.f32 %v1070
  %vm1118 = vweird.f32 %v1111
  %vm1119 = vmor %vm1117, %vm1118
  %v1120 = vsel %vm1119, %v1111, %v1116
  %v1121 = vmul.f32 %v1036, %v1080
  %v1122 = vmul.f32 %v1037, %v1090
  %v1123 = vmul.f32 %v1038, %v1100
  %v1124 = vmul.f32 %v1039, %v1110
  %v1125 = vmul.f32 %v1040, %v1120
  %v1126 = vperm.slane %v123, 3
  %v1127 = vmul.f32 %v1121, %v1126
  %v1128 = vmul.f32 %v1122, %v1126
  %v1129 = vmul.f32 %v1123, %v1126
  %v1130 = vmul.f32 %v1124, %v1126
  %v1131 = vmul.f32 %v1125, %v1126
  %v1132 = vperm.slane %v123, 4
  %v1133 = vadd.f32 %v1127, %v1132
  %v1134 = vadd.f32 %v1128, %v1132
  %v1135 = vadd.f32 %v1129, %v1132
  %v1136 = vadd.f32 %v1130, %v1132
  %v1137 = vadd.f32 %v1131, %v1132
  %v1138 = vpack.c.bf16 %v1134, %v1133
  %v1139 = vpack.c.bf16 %v1136, %v1135
  %v1140 = vpack.c.bf16 %v1137, %v1137
  %v1141 = vperm.slane %v123, 1
  %v1146 = vunpack.c.l.b16 %v119
  %v1147 = vunpack.c.l.b16 %v120
  %v1148 = vunpack.c.l.b16 %v121
  %v1149 = vunpack.c.l.b16 %v122
  %v1150 = vpack.c.b16 %v1147, %v1146
  %v1151 = vpack.c.b16 %v1149, %v1148
  %v1155 = vsel %vm140, %v1138, 0
  %v1158 = vsel %vm140, %v1139, 0
  %v1161 = vsel %vm140, %v1140, 0
  %1163 = vmatpush.bf16.msra.mxu0 0
  %1164 = vmatpush.bf16.msra.mxu0 0
  %1165 = vmatpush.bf16.msra.mxu0 0
  %1166 = vmatpush.bf16.msra.mxu0 0
  %1167 = vmatpush.bf16.msra.mxu0 0
  %1168 = vmatpush.bf16.msra.mxu0 0
  %1169 = vmatpush.bf16.msra.mxu0 %v1151
  %1170 = vmatpush.bf16.msra.mxu0 %v1150
  %1171 = vmatmul.bf16.gmra.mxu0 %v1155
  %v1172 = vpop.f32.mrf.mxu0
  %v1173 = vadd.f32 %v1141, %v1172
  %v1174 = vpop.f32.mrf.mxu0
  %v1175 = vadd.f32 %v1141, %v1174
  %1176 = vmatmul.bf16.gmra.mxu0 %v1158
  %v1177 = vpop.f32.mrf.mxu0
  %v1178 = vadd.f32 %v1141, %v1177
  %v1179 = vpop.f32.mrf.mxu0
  %v1180 = vadd.f32 %v1141, %v1179
  %1181 = vmatmul.bf16.gmra.mxu0 %v1161
  %v1182 = vpop.f32.mrf.mxu0
  %v1183 = vadd.f32 %v1141, %v1182
  %v1184 = vpop.f32.mrf.mxu0
  %1185 = vdwg.mxu0
  %v1186 = vmul.f32 %v1173, 0.5
  %v1187 = vmul.f32 %v1175, 0.5
  %v1188 = vmul.f32 %v1178, 0.5
  %v1189 = vmul.f32 %v1180, 0.5
  %v1190 = vmul.f32 %v1183, 0.5
  %v1191 = vmul.f32 %v1173, 0.70710677
  %v1192 = vmul.f32 %v1175, 0.70710677
  %v1193 = vmul.f32 %v1178, 0.70710677
  %v1194 = vmul.f32 %v1180, 0.70710677
  %v1195 = vmul.f32 %v1183, 0.70710677
  %vm1196 = vcmp.ge.f32.partialorder %v1191, 0.0
  %vm1197 = vcmp.ge.f32.partialorder %v1192, 0.0
  %vm1198 = vcmp.ge.f32.partialorder %v1193, 0.0
  %vm1199 = vcmp.ge.f32.partialorder %v1194, 0.0
  %vm1200 = vcmp.ge.f32.partialorder %v1195, 0.0
  %v1201 = vsel %vm1196, 1.0, -1.0
  %v1202 = vsel %vm1197, 1.0, -1.0
  %v1203 = vsel %vm1198, 1.0, -1.0
  %v1204 = vsel %vm1199, 1.0, -1.0
  %v1205 = vsel %vm1200, 1.0, -1.0
  %v1206 = vand.u32 2147483647, %v1191
  %v1207 = vand.u32 2147483647, %v1192
  %v1208 = vand.u32 2147483647, %v1193
  %v1209 = vand.u32 2147483647, %v1194
  %v1210 = vand.u32 2147483647, %v1195
  %v1211 = vmul.f32 %v1206, 0.3275911
  %v1212 = vmul.f32 %v1207, 0.3275911
  %v1213 = vmul.f32 %v1208, 0.3275911
  %v1214 = vmul.f32 %v1209, 0.3275911
  %v1215 = vmul.f32 %v1210, 0.3275911
  %v1216 = vadd.f32 %v1211, 1.0
  %v1217 = vadd.f32 %v1212, 1.0
  %v1218 = vadd.f32 %v1213, 1.0
  %v1219 = vadd.f32 %v1214, 1.0
  %v1220 = vadd.f32 %v1215, 1.0
  %v1221 = vrcp.pop %v1216
  %v1222 = vmul.f32 %v1216, %v1221
  %v1223 = vsub.f32 1.0, %v1222
  %v1224 = vmul.f32 %v1221, %v1223
  %v1225 = vadd.f32 %v1221, %v1224
  %vm1226 = vweird.f32 %v1216
  %vm1227 = vweird.f32 %v1221
  %vm1228 = vmor %vm1226, %vm1227
  %v1229 = vsel %vm1228, %v1221, %v1225
  %v1230 = vand.u32 2147483647, %v1216
  %vm1231 = vcmp.eq.f32.partialorder %v1230, 8.507059e+37
  %v1232 = vand.u32 %v1216, 2147483648
  %v1233 = vor.u32 1.1754944e-38, %v1232
  %v1234 = vsel %vm1231, %v1233, %v1229
  %v1235 = vmul.f32 1.0, %v1234
  %v1236 = vrcp.pop %v1217
  %v1237 = vmul.f32 %v1217, %v1236
  %v1238 = vsub.f32 1.0, %v1237
  %v1239 = vmul.f32 %v1236, %v1238
  %v1240 = vadd.f32 %v1236, %v1239
  %vm1241 = vweird.f32 %v1217
  %vm1242 = vweird.f32 %v1236
  %vm1243 = vmor %vm1241, %vm1242
  %v1244 = vsel %vm1243, %v1236, %v1240
  %v1245 = vand.u32 2147483647, %v1217
  %vm1246 = vcmp.eq.f32.partialorder %v1245, 8.507059e+37
  %v1247 = vand.u32 %v1217, 2147483648
  %v1248 = vor.u32 1.1754944e-38, %v1247
  %v1249 = vsel %vm1246, %v1248, %v1244
  %v1250 = vmul.f32 1.0, %v1249
  %v1251 = vrcp.pop %v1218
  %v1252 = vmul.f32 %v1218, %v1251
  %v1253 = vsub.f32 1.0, %v1252
  %v1254 = vmul.f32 %v1251, %v1253
  %v1255 = vadd.f32 %v1251, %v1254
  %vm1256 = vweird.f32 %v1218
  %vm1257 = vweird.f32 %v1251
  %vm1258 = vmor %vm1256, %vm1257
  %v1259 = vsel %vm1258, %v1251, %v1255
  %v1260 = vand.u32 2147483647, %v1218
  %vm1261 = vcmp.eq.f32.partialorder %v1260, 8.507059e+37
  %v1262 = vand.u32 %v1218, 2147483648
  %v1263 = vor.u32 1.1754944e-38, %v1262
  %v1264 = vsel %vm1261, %v1263, %v1259
  %v1265 = vmul.f32 1.0, %v1264
  %v1266 = vrcp.pop %v1219
  %v1267 = vmul.f32 %v1219, %v1266
  %v1268 = vsub.f32 1.0, %v1267
  %v1269 = vmul.f32 %v1266, %v1268
  %v1270 = vadd.f32 %v1266, %v1269
  %vm1271 = vweird.f32 %v1219
  %vm1272 = vweird.f32 %v1266
  %vm1273 = vmor %vm1271, %vm1272
  %v1274 = vsel %vm1273, %v1266, %v1270
  %v1275 = vand.u32 2147483647, %v1219
  %vm1276 = vcmp.eq.f32.partialorder %v1275, 8.507059e+37
  %v1277 = vand.u32 %v1219, 2147483648
  %v1278 = vor.u32 1.1754944e-38, %v1277
  %v1279 = vsel %vm1276, %v1278, %v1274
  %v1280 = vmul.f32 1.0, %v1279
  %v1281 = vrcp.pop %v1220
  %v1282 = vmul.f32 %v1220, %v1281
  %v1283 = vsub.f32 1.0, %v1282
  %v1284 = vmul.f32 %v1281, %v1283
  %v1285 = vadd.f32 %v1281, %v1284
  %vm1286 = vweird.f32 %v1220
  %vm1287 = vweird.f32 %v1281
  %vm1288 = vmor %vm1286, %vm1287
  %v1289 = vsel %vm1288, %v1281, %v1285
  %v1290 = vand.u32 2147483647, %v1220
  %vm1291 = vcmp.eq.f32.partialorder %v1290, 8.507059e+37
  %v1292 = vand.u32 %v1220, 2147483648
  %v1293 = vor.u32 1.1754944e-38, %v1292
  %v1294 = vsel %vm1291, %v1293, %v1289
  %v1295 = vmul.f32 1.0, %v1294
  %v1296 = vmul.f32 %v1235, 1.0614054
  %v1297 = vmul.f32 %v1250, 1.0614054
  %v1298 = vmul.f32 %v1265, 1.0614054
  %v1299 = vmul.f32 %v1280, 1.0614054
  %v1300 = vmul.f32 %v1295, 1.0614054
  %v1301 = vadd.f32 %v1296, -1.4531521
  %v1302 = vadd.f32 %v1297, -1.4531521
  %v1303 = vadd.f32 %v1298, -1.4531521
  %v1304 = vadd.f32 %v1299, -1.4531521
  %v1305 = vadd.f32 %v1300, -1.4531521
  %v1306 = vmul.f32 %v1301, %v1235
  %v1307 = vmul.f32 %v1302, %v1250
  %v1308 = vmul.f32 %v1303, %v1265
  %v1309 = vmul.f32 %v1304, %v1280
  %v1310 = vmul.f32 %v1305, %v1295
  %v1311 = vadd.f32 %v1306, 1.4214138
  %v1312 = vadd.f32 %v1307, 1.4214138
  %v1313 = vadd.f32 %v1308, 1.4214138
  %v1314 = vadd.f32 %v1309, 1.4214138
  %v1315 = vadd.f32 %v1310, 1.4214138
  %v1316 = vmul.f32 %v1311, %v1235
  %v1317 = vmul.f32 %v1312, %v1250
  %v1318 = vmul.f32 %v1313, %v1265
  %v1319 = vmul.f32 %v1314, %v1280
  %v1320 = vmul.f32 %v1315, %v1295
  %v1321 = vadd.f32 %v1316, -0.28449672
  %v1322 = vadd.f32 %v1317, -0.28449672
  %v1323 = vadd.f32 %v1318, -0.28449672
  %v1324 = vadd.f32 %v1319, -0.28449672
  %v1325 = vadd.f32 %v1320, -0.28449672
  %v1326 = vmul.f32 %v1321, %v1235
  %v1327 = vmul.f32 %v1322, %v1250
  %v1328 = vmul.f32 %v1323, %v1265
  %v1329 = vmul.f32 %v1324, %v1280
  %v1330 = vmul.f32 %v1325, %v1295
  %v1331 = vadd.f32 %v1326, 0.2548296
  %v1332 = vadd.f32 %v1327, 0.2548296
  %v1333 = vadd.f32 %v1328, 0.2548296
  %v1334 = vadd.f32 %v1329, 0.2548296
  %v1335 = vadd.f32 %v1330, 0.2548296
  %v1336 = vmul.f32 %v1331, %v1235
  %v1337 = vmul.f32 %v1332, %v1250
  %v1338 = vmul.f32 %v1333, %v1265
  %v1339 = vmul.f32 %v1334, %v1280
  %v1340 = vmul.f32 %v1335, %v1295
  %v1341 = vsub.f32 0.0, %v1206
  %v1342 = vsub.f32 0.0, %v1207
  %v1343 = vsub.f32 0.0, %v1208
  %v1344 = vsub.f32 0.0, %v1209
  %v1345 = vsub.f32 0.0, %v1210
  %v1346 = vmul.f32 %v1341, %v1206
  %v1347 = vmul.f32 %v1342, %v1207
  %v1348 = vmul.f32 %v1343, %v1208
  %v1349 = vmul.f32 %v1344, %v1209
  %v1350 = vmul.f32 %v1345, %v1210
  %v1351 = vmul.f32 %v1346, 1.442695
  %v1352 = vpow.pop %v1351
  %v1353 = vmul.f32 %v1347, 1.442695
  %v1354 = vpow.pop %v1353
  %v1355 = vmul.f32 %v1348, 1.442695
  %v1356 = vpow.pop %v1355
  %v1357 = vmul.f32 %v1349, 1.442695
  %v1358 = vpow.pop %v1357
  %v1359 = vmul.f32 %v1350, 1.442695
  %v1360 = vpow.pop %v1359
  %v1361 = vmul.f32 %v1336, %v1352
  %v1362 = vmul.f32 %v1337, %v1354
  %v1363 = vmul.f32 %v1338, %v1356
  %v1364 = vmul.f32 %v1339, %v1358
  %v1365 = vmul.f32 %v1340, %v1360
  %v1366 = vsub.f32 1.0, %v1361
  %v1367 = vsub.f32 1.0, %v1362
  %v1368 = vsub.f32 1.0, %v1363
  %v1369 = vsub.f32 1.0, %v1364
  %v1370 = vsub.f32 1.0, %v1365
  %v1371 = vmul.f32 %v1201, %v1366
  %v1372 = vmul.f32 %v1202, %v1367
  %v1373 = vmul.f32 %v1203, %v1368
  %v1374 = vmul.f32 %v1204, %v1369
  %v1375 = vmul.f32 %v1205, %v1370
  %v1376 = vadd.f32 %v1371, 1.0
  %v1377 = vadd.f32 %v1372, 1.0
  %v1378 = vadd.f32 %v1373, 1.0
  %v1379 = vadd.f32 %v1374, 1.0
  %v1380 = vadd.f32 %v1375, 1.0
  %v1381 = vmul.f32 %v1186, %v1376
  %v1382 = vmul.f32 %v1187, %v1377
  %v1383 = vmul.f32 %v1188, %v1378
  %v1384 = vmul.f32 %v1189, %v1379
  %v1385 = vmul.f32 %v1190, %v1380
  %v1386 = vpack.c.bf16 %v1382, %v1381
  %v1387 = vpack.c.bf16 %v1384, %v1383
  %v1388 = vpack.c.bf16 %v1385, %v1385
  %v1389 = vld [vmem:[%s4] sm:$0xf]
  %v1390 = vld [vmem:[%s4 + $0x4] sm:$0xf]
  %v1391 = vld [vmem:[%s4 + $0x8] sm:$0xf]
  %v1392 = vld [vmem:[%s4 + $0xc] sm:$0xf]
  %v1393 = vld [vmem:[%s4 + $0x10] sm:$0xf]
  %v1394 = vld [vmem:[%s4 + $0x14] sm:$0xf]
  %v1395 = vld [vmem:[%s4 + $0x18] sm:$0xf]
  %v1396 = vld [vmem:[%s4 + $0x1c] sm:$0xf]
  %v1397 = vld [vmem:[%s4 + $0x20] sm:$0xf]
  %v1398 = vld [vmem:[%s4 + $0x24] sm:$0xf]
  %v1399 = vld [vmem:[%s4 + $0x28] sm:$0xf]
  %v1400 = vld [vmem:[%s4 + $0x2c] sm:$0xf]
  %v1401 = vld [vmem:[%s4 + $0x30] sm:$0xf]
  %v1402 = vld [vmem:[%s4 + $0x34] sm:$0xf]
  %v1403 = vld [vmem:[%s4 + $0x38] sm:$0xf]
  %v1404 = vld [vmem:[%s4 + $0x3c] sm:$0xf]
  %v1405 = vperm.slane %v123, 5
  %v1422 = vunpack.c.l.b16 %v1389
  %v1423 = vunpack.c.l.b16 %v1390
  %v1424 = vunpack.c.l.b16 %v1391
  %v1425 = vunpack.c.l.b16 %v1392
  %v1426 = vunpack.c.l.b16 %v1393
  %v1427 = vunpack.c.l.b16 %v1394
  %v1428 = vunpack.c.l.b16 %v1395
  %v1429 = vunpack.c.l.b16 %v1396
  %v1430 = vunpack.c.l.b16 %v1397
  %v1431 = vunpack.c.l.b16 %v1398
  %v1432 = vunpack.c.l.b16 %v1399
  %v1433 = vunpack.c.l.b16 %v1400
  %v1434 = vunpack.c.l.b16 %v1401
  %v1435 = vunpack.c.l.b16 %v1402
  %v1436 = vunpack.c.l.b16 %v1403
  %v1437 = vunpack.c.l.b16 %v1404
  %v1438 = vpack.c.b16 %v1423, %v1422
  %v1439 = vpack.c.b16 %v1425, %v1424
  %v1440 = vpack.c.b16 %v1427, %v1426
  %v1441 = vpack.c.b16 %v1429, %v1428
  %v1442 = vpack.c.b16 %v1431, %v1430
  %v1443 = vpack.c.b16 %v1433, %v1432
  %v1444 = vpack.c.b16 %v1435, %v1434
  %v1445 = vpack.c.b16 %v1437, %v1436
  %1454 = vmatpush.bf16.msra.mxu0 %v1445
  %1455 = vmatpush.bf16.msra.mxu0 %v1444
  %1456 = vmatpush.bf16.msra.mxu0 %v1443
  %1457 = vmatpush.bf16.msra.mxu0 %v1442
  %1458 = vmatpush.bf16.msra.mxu0 %v1441
  %1459 = vmatpush.bf16.msra.mxu0 %v1440
  %1460 = vmatpush.bf16.msra.mxu0 %v1439
  %1461 = vmatpush.bf16.msra.mxu0 %v1438
  %1462 = vmatmul.bf16.gmra.mxu0 %v1386
  %v1463 = vpop.f32.mrf.mxu0
  %v1464 = vadd.f32 %v1405, %v1463
  %v1465 = vpop.f32.mrf.mxu0
  %v1466 = vadd.f32 %v1405, %v1465
  %1467 = vmatmul.bf16.gmra.mxu0 %v1387
  %v1468 = vpop.f32.mrf.mxu0
  %v1469 = vadd.f32 %v1405, %v1468
  %v1470 = vpop.f32.mrf.mxu0
  %v1471 = vadd.f32 %v1405, %v1470
  %1472 = vmatmul.bf16.gmra.mxu0 %v1388
  %v1473 = vpop.f32.mrf.mxu0
  %v1474 = vadd.f32 %v1405, %v1473
  %v1475 = vpop.f32.mrf.mxu0
  %1476 = vdwg.mxu0
  %v1477 = vadd.f32 %v1133, %v1464
  %v1478 = vadd.f32 %v1134, %v1466
  %v1479 = vadd.f32 %v1135, %v1469
  %v1480 = vadd.f32 %v1136, %v1471
  %v1481 = vadd.f32 %v1137, %v1474
  %v1482 = vsel %vm140, %v1477, 0.0
  %1483 = vadd.xlane.f32.xlu0 %v1482
  %v1484 = vpop.xlane.xlu0 %1483
  %v1485 = vsel %vm140, %v1478, 0.0
  %1486 = vadd.xlane.f32.xlu0 %v1485
  %v1487 = vpop.xlane.xlu0 %1486
  %v1488 = vsel %vm140, %v1479, 0.0
  %1489 = vadd.xlane.f32.xlu0 %v1488
  %v1490 = vpop.xlane.xlu0 %1489
  %v1491 = vsel %vm140, %v1480, 0.0
  %1492 = vadd.xlane.f32.xlu0 %v1491
  %v1493 = vpop.xlane.xlu0 %1492
  %v1494 = vsel %vm140, %v1481, 0.0
  %1495 = vadd.xlane.f32.xlu0 %v1494
  %v1496 = vpop.xlane.xlu0 %1495
  %v1497 = vmul.f32 %v1484, %v1030
  %v1498 = vmul.f32 %v1487, %v1030
  %v1499 = vmul.f32 %v1490, %v1030
  %v1500 = vmul.f32 %v1493, %v1030
  %v1501 = vmul.f32 %v1496, %v1030
  %v1502 = vsub.f32 %v1477, %v1497
  %v1503 = vsub.f32 %v1478, %v1498
  %v1504 = vsub.f32 %v1479, %v1499
  %v1505 = vsub.f32 %v1480, %v1500
  %v1506 = vsub.f32 %v1481, %v1501
  %v1507 = vmul.f32 %v1502, %v1502
  %v1508 = vmul.f32 %v1503, %v1503
  %v1509 = vmul.f32 %v1504, %v1504
  %v1510 = vmul.f32 %v1505, %v1505
  %v1511 = vmul.f32 %v1506, %v1506
  %v1512 = vsel %vm140, %v1507, 0.0
  %1513 = vadd.xlane.f32.xlu0 %v1512
  %v1514 = vpop.xlane.xlu0 %1513
  %v1515 = vsel %vm140, %v1508, 0.0
  %1516 = vadd.xlane.f32.xlu0 %v1515
  %v1517 = vpop.xlane.xlu0 %1516
  %v1518 = vsel %vm140, %v1509, 0.0
  %1519 = vadd.xlane.f32.xlu0 %v1518
  %v1520 = vpop.xlane.xlu0 %1519
  %v1521 = vsel %vm140, %v1510, 0.0
  %1522 = vadd.xlane.f32.xlu0 %v1521
  %v1523 = vpop.xlane.xlu0 %1522
  %v1524 = vsel %vm140, %v1511, 0.0
  %1525 = vadd.xlane.f32.xlu0 %v1524
  %v1526 = vpop.xlane.xlu0 %1525
  %v1527 = vmul.f32 %v1514, %v1030
  %v1528 = vmul.f32 %v1517, %v1030
  %v1529 = vmul.f32 %v1520, %v1030
  %v1530 = vmul.f32 %v1523, %v1030
  %v1531 = vmul.f32 %v1526, %v1030
  %v1532 = vadd.f32 %v1527, 1e-05
  %v1533 = vadd.f32 %v1528, 1e-05
  %v1534 = vadd.f32 %v1529, 1e-05
  %v1535 = vadd.f32 %v1530, 1e-05
  %v1536 = vadd.f32 %v1531, 1e-05
  %v1537 = vrsqrt.pop %v1532
  %v1538 = vmul.f32 %v1537, %v1532
  %v1539 = vmul.f32 %v1538, %v1537
  %v1540 = vmul.f32 0.5, %v1539
  %v1541 = vsub.f32 1.5, %v1540
  %v1542 = vmul.f32 %v1537, %v1541
  %vm1543 = vweird.f32 %v1532
  %vm1544 = vweird.f32 %v1537
  %vm1545 = vmor %vm1543, %vm1544
  %v1546 = vsel %vm1545, %v1537, %v1542
  %v1547 = vrsqrt.pop %v1533
  %v1548 = vmul.f32 %v1547, %v1533
  %v1549 = vmul.f32 %v1548, %v1547
  %v1550 = vmul.f32 0.5, %v1549
  %v1551 = vsub.f32 1.5, %v1550
  %v1552 = vmul.f32 %v1547, %v1551
  %vm1553 = vweird.f32 %v1533
  %vm1554 = vweird.f32 %v1547
  %vm1555 = vmor %vm1553, %vm1554
  %v1556 = vsel %vm1555, %v1547, %v1552
  %v1557 = vrsqrt.pop %v1534
  %v1558 = vmul.f32 %v1557, %v1534
  %v1559 = vmul.f32 %v1558, %v1557
  %v1560 = vmul.f32 0.5, %v1559
  %v1561 = vsub.f32 1.5, %v1560
  %v1562 = vmul.f32 %v1557, %v1561
  %vm1563 = vweird.f32 %v1534
  %vm1564 = vweird.f32 %v1557
  %vm1565 = vmor %vm1563, %vm1564
  %v1566 = vsel %vm1565, %v1557, %v1562
  %v1567 = vrsqrt.pop %v1535
  %v1568 = vmul.f32 %v1567, %v1535
  %v1569 = vmul.f32 %v1568, %v1567
  %v1570 = vmul.f32 0.5, %v1569
  %v1571 = vsub.f32 1.5, %v1570
  %v1572 = vmul.f32 %v1567, %v1571
  %vm1573 = vweird.f32 %v1535
  %vm1574 = vweird.f32 %v1567
  %vm1575 = vmor %vm1573, %vm1574
  %v1576 = vsel %vm1575, %v1567, %v1572
  %v1577 = vrsqrt.pop %v1536
  %v1578 = vmul.f32 %v1577, %v1536
  %v1579 = vmul.f32 %v1578, %v1577
  %v1580 = vmul.f32 0.5, %v1579
  %v1581 = vsub.f32 1.5, %v1580
  %v1582 = vmul.f32 %v1577, %v1581
  %vm1583 = vweird.f32 %v1536
  %vm1584 = vweird.f32 %v1577
  %vm1585 = vmor %vm1583, %vm1584
  %v1586 = vsel %vm1585, %v1577, %v1582
  %v1587 = vmul.f32 %v1502, %v1546
  %v1588 = vmul.f32 %v1503, %v1556
  %v1589 = vmul.f32 %v1504, %v1566
  %v1590 = vmul.f32 %v1505, %v1576
  %v1591 = vmul.f32 %v1506, %v1586
  %v1592 = vperm.slane %v123, 6
  %v1593 = vmul.f32 %v1587, %v1592
  %v1594 = vmul.f32 %v1588, %v1592
  %v1595 = vmul.f32 %v1589, %v1592
  %v1596 = vmul.f32 %v1590, %v1592
  %v1597 = vmul.f32 %v1591, %v1592
  %v1598 = vperm.slane %v123, 7
  %v1599 = vadd.f32 %v1593, %v1598
  %v1600 = vadd.f32 %v1594, %v1598
  %v1601 = vadd.f32 %v1595, %v1598
  %v1602 = vadd.f32 %v1596, %v1598
  %v1603 = vadd.f32 %v1597, %v1598
  %s1604 = scalar_lea.vmem %s3, 32
  %v1605 = vld [vmem:[%s1604] sm:$0xf]
  %v1606 = vld [vmem:[%s1604 + $0x4] sm:$0xf]
  %v1607 = vld [vmem:[%s1604 + $0x8] sm:$0xf]
  %v1608 = vld [vmem:[%s1604 + $0xc] sm:$0xf]
  %v1609 = vld [vmem:[%s1604 + $0x10] sm:$0xf]
  %v1610 = vld [vmem:[%s1604 + $0x14] sm:$0xf]
  %v1611 = vld [vmem:[%s1604 + $0x18] sm:$0xf]
  %v1612 = vld [vmem:[%s1604 + $0x1c] sm:$0xf]
  %s1613 = scalar_lea.vmem %s5, 8
  %v1614 = vld [vmem:[%s1613] sm:$0xff]
  %v1615 = vpack.c.bf16 %v1600, %v1599
  %v1616 = vpack.c.bf16 %v1602, %v1601
  %v1617 = vpack.c.bf16 %v1603, %v1603
  %v1618 = vperm.slane %v1614, 0
  %v1623 = vunpack.c.l.b16 %v1605
  %v1624 = vunpack.c.l.b16 %v1606
  %v1625 = vunpack.c.l.b16 %v1607
  %v1626 = vunpack.c.l.b16 %v1608
  %v1627 = vpack.c.b16 %v1624, %v1623
  %v1628 = vpack.c.b16 %v1626, %v1625
  %v1632 = vsel %vm140, %v1615, 0
  %v1635 = vsel %vm140, %v1616, 0
  %v1638 = vsel %vm140, %v1617, 0
  %1640 = vmatpush.bf16.msra.mxu0 0
  %1641 = vmatpush.bf16.msra.mxu0 0
  %1642 = vmatpush.bf16.msra.mxu0 0
  %1643 = vmatpush.bf16.msra.mxu0 0
  %1644 = vmatpush.bf16.msra.mxu0 0
  %1645 = vmatpush.bf16.msra.mxu0 0
  %1646 = vmatpush.bf16.msra.mxu0 %v1628
  %1647 = vmatpush.bf16.msra.mxu0 %v1627
  %1648 = vmatmul.bf16.gmra.mxu0 %v1632
  %v1649 = vpop.f32.mrf.mxu0
  %v1650 = vadd.f32 %v1618, %v1649
  %v1651 = vpop.f32.mrf.mxu0
  %v1652 = vadd.f32 %v1618, %v1651
  %1653 = vmatmul.bf16.gmra.mxu0 %v1635
  %v1654 = vpop.f32.mrf.mxu0
  %v1655 = vadd.f32 %v1618, %v1654
  %v1656 = vpop.f32.mrf.mxu0
  %v1657 = vadd.f32 %v1618, %v1656
  %1658 = vmatmul.bf16.gmra.mxu0 %v1638
  %v1659 = vpop.f32.mrf.mxu0
  %v1660 = vadd.f32 %v1618, %v1659
  %v1661 = vpop.f32.mrf.mxu0
  %1662 = vdwg.mxu0
  %1668 = vrot.lane.b32.xlu0 %v1650, 96
  %v1669 = vpop.permute.xlu0 %1668
  %1670 = vrot.lane.b32.xlu0 %v1652, 96
  %v1671 = vpop.permute.xlu0 %1670
  %1672 = vrot.lane.b32.xlu0 %v1655, 96
  %v1673 = vpop.permute.xlu0 %1672
  %1674 = vrot.lane.b32.xlu0 %v1657, 96
  %v1675 = vpop.permute.xlu0 %1674
  %1676 = vrot.lane.b32.xlu0 %v1660, 96
  %v1677 = vpop.permute.xlu0 %1676
  %v1683 = vsel %vm174, %v1669, 0.0
  %v1684 = vsel %vm174, %v1671, 0.0
  %v1685 = vsel %vm174, %v1673, 0.0
  %v1686 = vsel %vm174, %v1675, 0.0
  %v1687 = vsel %vm174, %v1677, 0.0
  %1688 = vrot.lane.b32.xlu0 %v1650, 64
  %v1689 = vpop.permute.xlu0 %1688
  %1690 = vrot.lane.b32.xlu0 %v1652, 64
  %v1691 = vpop.permute.xlu0 %1690
  %1692 = vrot.lane.b32.xlu0 %v1655, 64
  %v1693 = vpop.permute.xlu0 %1692
  %1694 = vrot.lane.b32.xlu0 %v1657, 64
  %v1695 = vpop.permute.xlu0 %1694
  %1696 = vrot.lane.b32.xlu0 %v1660, 64
  %v1697 = vpop.permute.xlu0 %1696
  %v1703 = vsel %vm174, %v1689, 0.0
  %v1704 = vsel %vm174, %v1691, 0.0
  %v1705 = vsel %vm174, %v1693, 0.0
  %v1706 = vsel %vm174, %v1695, 0.0
  %v1707 = vsel %vm174, %v1697, 0.0
  %v1708 = vsel %vm221, %v1669, 0.0
  %v1709 = vsel %vm221, %v1671, 0.0
  %v1710 = vsel %vm221, %v1673, 0.0
  %v1711 = vsel %vm221, %v1675, 0.0
  %v1712 = vsel %vm221, %v1677, 0.0
  %v1713 = vsel %vm221, %v1689, 0.0
  %v1714 = vsel %vm221, %v1691, 0.0
  %v1715 = vsel %vm221, %v1693, 0.0
  %v1716 = vsel %vm221, %v1695, 0.0
  %v1717 = vsel %vm221, %v1697, 0.0
  %v1718 = vsel %vm233, %v1669, 0.0
  %v1719 = vsel %vm233, %v1671, 0.0
  %v1720 = vsel %vm233, %v1673, 0.0
  %v1721 = vsel %vm233, %v1675, 0.0
  %v1722 = vsel %vm233, %v1677, 0.0
  %v1723 = vsel %vm233, %v1689, 0.0
  %v1724 = vsel %vm233, %v1691, 0.0
  %v1725 = vsel %vm233, %v1693, 0.0
  %v1726 = vsel %vm233, %v1695, 0.0
  %v1727 = vsel %vm233, %v1697, 0.0
  %v1728 = vsel %vm245, %v1669, 0.0
  %v1729 = vsel %vm245, %v1671, 0.0
  %v1730 = vsel %vm245, %v1673, 0.0
  %v1731 = vsel %vm245, %v1675, 0.0
  %v1732 = vsel %vm245, %v1677, 0.0
  %v1733 = vsel %vm245, %v1689, 0.0
  %v1734 = vsel %vm245, %v1691, 0.0
  %v1735 = vsel %vm245, %v1693, 0.0
  %v1736 = vsel %vm245, %v1695, 0.0
  %v1737 = vsel %vm245, %v1697, 0.0
  %v1738 = vpack.c.bf16 %v1684, %v1683
  %v1739 = vpack.c.bf16 %v1686, %v1685
  %v1740 = vpack.c.bf16 0.0, %v1687
  %v1741 = vpack.c.bf16 %v1709, %v1708
  %v1742 = vpack.c.bf16 %v1711, %v1710
  %v1743 = vpack.c.bf16 0.0, %v1712
  %v1744 = vpack.c.bf16 %v1719, %v1718
  %v1745 = vpack.c.bf16 %v1721, %v1720
  %v1746 = vpack.c.bf16 0.0, %v1722
  %v1747 = vpack.c.bf16 %v1729, %v1728
  %v1748 = vpack.c.bf16 %v1731, %v1730
  %v1749 = vpack.c.bf16 0.0, %v1732
  %v1750 = vpack.c.bf16 %v1704, %v1703
  %v1751 = vpack.c.bf16 %v1706, %v1705
  %v1752 = vpack.c.bf16 0.0, %v1707
  %v1753 = vpack.c.bf16 %v1714, %v1713
  %v1754 = vpack.c.bf16 %v1716, %v1715
  %v1755 = vpack.c.bf16 0.0, %v1717
  %v1756 = vpack.c.bf16 %v1724, %v1723
  %v1757 = vpack.c.bf16 %v1726, %v1725
  %v1758 = vpack.c.bf16 0.0, %v1727
  %v1759 = vpack.c.bf16 %v1734, %v1733
  %v1760 = vpack.c.bf16 %v1736, %v1735
  %v1761 = vpack.c.bf16 0.0, %v1737
  %v1762 = vpack.c.bf16 %v1652, %v1650
  %v1763 = vpack.c.bf16 %v1657, %v1655
  %v1764 = vpack.c.bf16 %v1660, %v1660
  %v1766 = vsel %vm140, %v1762, 0
  %v1769 = vsel %vm140, %v1763, 0
  %v1772 = vsel %vm140, %v1764, 0
  %v1775 = vsel %vm140, %v1738, 0
  %v1778 = vsel %vm140, %v1739, 0
  %v1781 = vsel %vm140, %v1740, 0
  %v1784 = vsel %vm140, %v1741, 0
  %v1787 = vsel %vm140, %v1742, 0
  %v1790 = vsel %vm140, %v1743, 0
  %v1793 = vsel %vm140, %v1744, 0
  %v1796 = vsel %vm140, %v1745, 0
  %v1799 = vsel %vm140, %v1746, 0
  %v1802 = vsel %vm140, %v1747, 0
  %v1805 = vsel %vm140, %v1748, 0
  %v1808 = vsel %vm140, %v1749, 0
  %1810 = vmatpush.bf16.xpose.msra.mxu0 %v303
  %1811 = vmatpush.bf16.xpose.msra.mxu0 %v1790
  %1812 = vmatpush.bf16.xpose.msra.mxu0 %v1787
  %1813 = vmatpush.bf16.xpose.msra.mxu0 %v1784
  %1814 = vmatpush.bf16.xpose.msra.mxu0 %v303
  %1815 = vmatpush.bf16.xpose.msra.mxu0 %v1781
  %1816 = vmatpush.bf16.xpose.msra.mxu0 %v1778
  %1817 = vmatpush.bf16.xpose.msra.mxu0 %v1775
  %1818 = vmatmul.bf16.gmra.mxu0 %v1766
  %v1819 = vpop.f32.mrf.mxu0
  %v1820 = vadd.f32 %v91, %v1819
  %v1821 = vpop.f32.mrf.mxu0
  %v1822 = vadd.f32 %v93, %v1821
  %1823 = vmatmul.bf16.gmra.mxu0 %v1769
  %v1824 = vpop.f32.mrf.mxu0
  %v1825 = vadd.f32 %v95, %v1824
  %v1826 = vpop.f32.mrf.mxu0
  %v1827 = vadd.f32 %v97, %v1826
  %1828 = vmatmul.bf16.gmra.mxu0 %v1772
  %v1829 = vpop.f32.mrf.mxu0
  %v1830 = vadd.f32 %v99, %v1829
  %v1831 = vpop.f32.mrf.mxu0
  %1832 = vdwg.mxu0
  %1833 = vmatpush.bf16.xpose.msra.mxu0 %v303
  %1834 = vmatpush.bf16.xpose.msra.mxu0 %v1808
  %1835 = vmatpush.bf16.xpose.msra.mxu0 %v1805
  %1836 = vmatpush.bf16.xpose.msra.mxu0 %v1802
  %1837 = vmatpush.bf16.xpose.msra.mxu0 %v303
  %1838 = vmatpush.bf16.xpose.msra.mxu0 %v1799
  %1839 = vmatpush.bf16.xpose.msra.mxu0 %v1796
  %1840 = vmatpush.bf16.xpose.msra.mxu0 %v1793
  %1841 = vmatmul.bf16.gmra.mxu0 %v1766
  %v1842 = vpop.f32.mrf.mxu0
  %v1843 = vadd.f32 %v92, %v1842
  %v1844 = vpop.f32.mrf.mxu0
  %v1845 = vadd.f32 %v94, %v1844
  %1846 = vmatmul.bf16.gmra.mxu0 %v1769
  %v1847 = vpop.f32.mrf.mxu0
  %v1848 = vadd.f32 %v96, %v1847
  %v1849 = vpop.f32.mrf.mxu0
  %v1850 = vadd.f32 %v98, %v1849
  %1851 = vmatmul.bf16.gmra.mxu0 %v1772
  %v1852 = vpop.f32.mrf.mxu0
  %v1853 = vadd.f32 %v100, %v1852
  %v1854 = vpop.f32.mrf.mxu0
  %1855 = vdwg.mxu0
  %v1856 = vsel %vm378, %v1820, -inf
  %1857 = vmax.xlane.f32.xlu0 %v1856
  %v1858 = vpop.xlane.xlu0 %1857
  %v1859 = vsel %vm378, %v1822, -inf
  %1860 = vmax.xlane.f32.xlu0 %v1859
  %v1861 = vpop.xlane.xlu0 %1860
  %v1862 = vsel %vm378, %v1825, -inf
  %1863 = vmax.xlane.f32.xlu0 %v1862
  %v1864 = vpop.xlane.xlu0 %1863
  %v1865 = vsel %vm378, %v1827, -inf
  %1866 = vmax.xlane.f32.xlu0 %v1865
  %v1867 = vpop.xlane.xlu0 %1866
  %v1868 = vsel %vm378, %v1830, -inf
  %1869 = vmax.xlane.f32.xlu0 %v1868
  %v1870 = vpop.xlane.xlu0 %1869
  %v1871 = vsub.f32 %v1820, %v1858
  %v1872 = vsub.f32 %v1822, %v1861
  %v1873 = vsub.f32 %v1825, %v1864
  %v1874 = vsub.f32 %v1827, %v1867
  %v1875 = vsub.f32 %v1830, %v1870
  %v1876 = vmul.f32 %v1871, 1.442695
  %v1877 = vpow.pop %v1876
  %v1878 = vmul.f32 %v1872, 1.442695
  %v1879 = vpow.pop %v1878
  %v1880 = vmul.f32 %v1873, 1.442695
  %v1881 = vpow.pop %v1880
  %v1882 = vmul.f32 %v1874, 1.442695
  %v1883 = vpow.pop %v1882
  %v1884 = vmul.f32 %v1875, 1.442695
  %v1885 = vpow.pop %v1884
  %v1886 = vsel %vm378, %v1877, 0.0
  %1887 = vadd.xlane.f32.xlu0 %v1886
  %v1888 = vpop.xlane.xlu0 %1887
  %v1889 = vsel %vm378, %v1879, 0.0
  %1890 = vadd.xlane.f32.xlu0 %v1889
  %v1891 = vpop.xlane.xlu0 %1890
  %v1892 = vsel %vm378, %v1881, 0.0
  %1893 = vadd.xlane.f32.xlu0 %v1892
  %v1894 = vpop.xlane.xlu0 %1893
  %v1895 = vsel %vm378, %v1883, 0.0
  %1896 = vadd.xlane.f32.xlu0 %v1895
  %v1897 = vpop.xlane.xlu0 %1896
  %v1898 = vsel %vm378, %v1885, 0.0
  %1899 = vadd.xlane.f32.xlu0 %v1898
  %v1900 = vpop.xlane.xlu0 %1899
  %v1901 = vrcp.pop %v1888
  %v1902 = vmul.f32 %v1888, %v1901
  %v1903 = vsub.f32 1.0, %v1902
  %v1904 = vmul.f32 %v1901, %v1903
  %v1905 = vadd.f32 %v1901, %v1904
  %vm1906 = vweird.f32 %v1888
  %vm1907 = vweird.f32 %v1901
  %vm1908 = vmor %vm1906, %vm1907
  %v1909 = vsel %vm1908, %v1901, %v1905
  %v1910 = vand.u32 2147483647, %v1888
  %vm1911 = vcmp.eq.f32.partialorder %v1910, 8.507059e+37
  %v1912 = vand.u32 %v1888, 2147483648
  %v1913 = vor.u32 1.1754944e-38, %v1912
  %v1914 = vsel %vm1911, %v1913, %v1909
  %v1915 = vrcp.pop %v1891
  %v1916 = vmul.f32 %v1891, %v1915
  %v1917 = vsub.f32 1.0, %v1916
  %v1918 = vmul.f32 %v1915, %v1917
  %v1919 = vadd.f32 %v1915, %v1918
  %vm1920 = vweird.f32 %v1891
  %vm1921 = vweird.f32 %v1915
  %vm1922 = vmor %vm1920, %vm1921
  %v1923 = vsel %vm1922, %v1915, %v1919
  %v1924 = vand.u32 2147483647, %v1891
  %vm1925 = vcmp.eq.f32.partialorder %v1924, 8.507059e+37
  %v1926 = vand.u32 %v1891, 2147483648
  %v1927 = vor.u32 1.1754944e-38, %v1926
  %v1928 = vsel %vm1925, %v1927, %v1923
  %v1929 = vrcp.pop %v1894
  %v1930 = vmul.f32 %v1894, %v1929
  %v1931 = vsub.f32 1.0, %v1930
  %v1932 = vmul.f32 %v1929, %v1931
  %v1933 = vadd.f32 %v1929, %v1932
  %vm1934 = vweird.f32 %v1894
  %vm1935 = vweird.f32 %v1929
  %vm1936 = vmor %vm1934, %vm1935
  %v1937 = vsel %vm1936, %v1929, %v1933
  %v1938 = vand.u32 2147483647, %v1894
  %vm1939 = vcmp.eq.f32.partialorder %v1938, 8.507059e+37
  %v1940 = vand.u32 %v1894, 2147483648
  %v1941 = vor.u32 1.1754944e-38, %v1940
  %v1942 = vsel %vm1939, %v1941, %v1937
  %v1943 = vrcp.pop %v1897
  %v1944 = vmul.f32 %v1897, %v1943
  %v1945 = vsub.f32 1.0, %v1944
  %v1946 = vmul.f32 %v1943, %v1945
  %v1947 = vadd.f32 %v1943, %v1946
  %vm1948 = vweird.f32 %v1897
  %vm1949 = vweird.f32 %v1943
  %vm1950 = vmor %vm1948, %vm1949
  %v1951 = vsel %vm1950, %v1943, %v1947
  %v1952 = vand.u32 2147483647, %v1897
  %vm1953 = vcmp.eq.f32.partialorder %v1952, 8.507059e+37
  %v1954 = vand.u32 %v1897, 2147483648
  %v1955 = vor.u32 1.1754944e-38, %v1954
  %v1956 = vsel %vm1953, %v1955, %v1951
  %v1957 = vrcp.pop %v1900
  %v1958 = vmul.f32 %v1900, %v1957
  %v1959 = vsub.f32 1.0, %v1958
  %v1960 = vmul.f32 %v1957, %v1959
  %v1961 = vadd.f32 %v1957, %v1960
  %vm1962 = vweird.f32 %v1900
  %vm1963 = vweird.f32 %v1957
  %vm1964 = vmor %vm1962, %vm1963
  %v1965 = vsel %vm1964, %v1957, %v1961
  %v1966 = vand.u32 2147483647, %v1900
  %vm1967 = vcmp.eq.f32.partialorder %v1966, 8.507059e+37
  %v1968 = vand.u32 %v1900, 2147483648
  %v1969 = vor.u32 1.1754944e-38, %v1968
  %v1970 = vsel %vm1967, %v1969, %v1965
  %v1971 = vmul.f32 %v1877, %v1914
  %v1972 = vmul.f32 %v1879, %v1928
  %v1973 = vmul.f32 %v1881, %v1942
  %v1974 = vmul.f32 %v1883, %v1956
  %v1975 = vmul.f32 %v1885, %v1970
  %v1976 = vsel %vm499, %v1820, -inf
  %1977 = vmax.xlane.f32.xlu0 %v1976
  %v1978 = vpop.xlane.xlu0 %1977
  %v1979 = vsel %vm499, %v1822, -inf
  %1980 = vmax.xlane.f32.xlu0 %v1979
  %v1981 = vpop.xlane.xlu0 %1980
  %v1982 = vsel %vm499, %v1825, -inf
  %1983 = vmax.xlane.f32.xlu0 %v1982
  %v1984 = vpop.xlane.xlu0 %1983
  %v1985 = vsel %vm499, %v1827, -inf
  %1986 = vmax.xlane.f32.xlu0 %v1985
  %v1987 = vpop.xlane.xlu0 %1986
  %v1988 = vsel %vm499, %v1830, -inf
  %1989 = vmax.xlane.f32.xlu0 %v1988
  %v1990 = vpop.xlane.xlu0 %1989
  %v1991 = vsub.f32 %v1820, %v1978
  %v1992 = vsub.f32 %v1822, %v1981
  %v1993 = vsub.f32 %v1825, %v1984
  %v1994 = vsub.f32 %v1827, %v1987
  %v1995 = vsub.f32 %v1830, %v1990
  %v1996 = vmul.f32 %v1991, 1.442695
  %v1997 = vpow.pop %v1996
  %v1998 = vmul.f32 %v1992, 1.442695
  %v1999 = vpow.pop %v1998
  %v2000 = vmul.f32 %v1993, 1.442695
  %v2001 = vpow.pop %v2000
  %v2002 = vmul.f32 %v1994, 1.442695
  %v2003 = vpow.pop %v2002
  %v2004 = vmul.f32 %v1995, 1.442695
  %v2005 = vpow.pop %v2004
  %2011 = vrot.lane.b32.xlu0 %v1997, 64
  %v2012 = vpop.permute.xlu0 %2011
  %2013 = vrot.lane.b32.xlu0 %v1999, 64
  %v2014 = vpop.permute.xlu0 %2013
  %2015 = vrot.lane.b32.xlu0 %v2001, 64
  %v2016 = vpop.permute.xlu0 %2015
  %2017 = vrot.lane.b32.xlu0 %v2003, 64
  %v2018 = vpop.permute.xlu0 %2017
  %2019 = vrot.lane.b32.xlu0 %v2005, 64
  %v2020 = vpop.permute.xlu0 %2019
  %v2026 = vsel %vm378, %v2012, 0.0
  %2027 = vadd.xlane.f32.xlu0 %v2026
  %v2028 = vpop.xlane.xlu0 %2027
  %v2029 = vsel %vm378, %v2014, 0.0
  %2030 = vadd.xlane.f32.xlu0 %v2029
  %v2031 = vpop.xlane.xlu0 %2030
  %v2032 = vsel %vm378, %v2016, 0.0
  %2033 = vadd.xlane.f32.xlu0 %v2032
  %v2034 = vpop.xlane.xlu0 %2033
  %v2035 = vsel %vm378, %v2018, 0.0
  %2036 = vadd.xlane.f32.xlu0 %v2035
  %v2037 = vpop.xlane.xlu0 %2036
  %v2038 = vsel %vm378, %v2020, 0.0
  %2039 = vadd.xlane.f32.xlu0 %v2038
  %v2040 = vpop.xlane.xlu0 %2039
  %v2041 = vrcp.pop %v2028
  %v2042 = vmul.f32 %v2028, %v2041
  %v2043 = vsub.f32 1.0, %v2042
  %v2044 = vmul.f32 %v2041, %v2043
  %v2045 = vadd.f32 %v2041, %v2044
  %vm2046 = vweird.f32 %v2028
  %vm2047 = vweird.f32 %v2041
  %vm2048 = vmor %vm2046, %vm2047
  %v2049 = vsel %vm2048, %v2041, %v2045
  %v2050 = vand.u32 2147483647, %v2028
  %vm2051 = vcmp.eq.f32.partialorder %v2050, 8.507059e+37
  %v2052 = vand.u32 %v2028, 2147483648
  %v2053 = vor.u32 1.1754944e-38, %v2052
  %v2054 = vsel %vm2051, %v2053, %v2049
  %v2055 = vrcp.pop %v2031
  %v2056 = vmul.f32 %v2031, %v2055
  %v2057 = vsub.f32 1.0, %v2056
  %v2058 = vmul.f32 %v2055, %v2057
  %v2059 = vadd.f32 %v2055, %v2058
  %vm2060 = vweird.f32 %v2031
  %vm2061 = vweird.f32 %v2055
  %vm2062 = vmor %vm2060, %vm2061
  %v2063 = vsel %vm2062, %v2055, %v2059
  %v2064 = vand.u32 2147483647, %v2031
  %vm2065 = vcmp.eq.f32.partialorder %v2064, 8.507059e+37
  %v2066 = vand.u32 %v2031, 2147483648
  %v2067 = vor.u32 1.1754944e-38, %v2066
  %v2068 = vsel %vm2065, %v2067, %v2063
  %v2069 = vrcp.pop %v2034
  %v2070 = vmul.f32 %v2034, %v2069
  %v2071 = vsub.f32 1.0, %v2070
  %v2072 = vmul.f32 %v2069, %v2071
  %v2073 = vadd.f32 %v2069, %v2072
  %vm2074 = vweird.f32 %v2034
  %vm2075 = vweird.f32 %v2069
  %vm2076 = vmor %vm2074, %vm2075
  %v2077 = vsel %vm2076, %v2069, %v2073
  %v2078 = vand.u32 2147483647, %v2034
  %vm2079 = vcmp.eq.f32.partialorder %v2078, 8.507059e+37
  %v2080 = vand.u32 %v2034, 2147483648
  %v2081 = vor.u32 1.1754944e-38, %v2080
  %v2082 = vsel %vm2079, %v2081, %v2077
  %v2083 = vrcp.pop %v2037
  %v2084 = vmul.f32 %v2037, %v2083
  %v2085 = vsub.f32 1.0, %v2084
  %v2086 = vmul.f32 %v2083, %v2085
  %v2087 = vadd.f32 %v2083, %v2086
  %vm2088 = vweird.f32 %v2037
  %vm2089 = vweird.f32 %v2083
  %vm2090 = vmor %vm2088, %vm2089
  %v2091 = vsel %vm2090, %v2083, %v2087
  %v2092 = vand.u32 2147483647, %v2037
  %vm2093 = vcmp.eq.f32.partialorder %v2092, 8.507059e+37
  %v2094 = vand.u32 %v2037, 2147483648
  %v2095 = vor.u32 1.1754944e-38, %v2094
  %v2096 = vsel %vm2093, %v2095, %v2091
  %v2097 = vrcp.pop %v2040
  %v2098 = vmul.f32 %v2040, %v2097
  %v2099 = vsub.f32 1.0, %v2098
  %v2100 = vmul.f32 %v2097, %v2099
  %v2101 = vadd.f32 %v2097, %v2100
  %vm2102 = vweird.f32 %v2040
  %vm2103 = vweird.f32 %v2097
  %vm2104 = vmor %vm2102, %vm2103
  %v2105 = vsel %vm2104, %v2097, %v2101
  %v2106 = vand.u32 2147483647, %v2040
  %vm2107 = vcmp.eq.f32.partialorder %v2106, 8.507059e+37
  %v2108 = vand.u32 %v2040, 2147483648
  %v2109 = vor.u32 1.1754944e-38, %v2108
  %v2110 = vsel %vm2107, %v2109, %v2105
  %v2111 = vmul.f32 %v1997, %v2054
  %v2112 = vmul.f32 %v1999, %v2068
  %v2113 = vmul.f32 %v2001, %v2082
  %v2114 = vmul.f32 %v2003, %v2096
  %v2115 = vmul.f32 %v2005, %v2110
  %v2116 = vsel %vm378, %v1843, -inf
  %2117 = vmax.xlane.f32.xlu0 %v2116
  %v2118 = vpop.xlane.xlu0 %2117
  %v2119 = vsel %vm378, %v1845, -inf
  %2120 = vmax.xlane.f32.xlu0 %v2119
  %v2121 = vpop.xlane.xlu0 %2120
  %v2122 = vsel %vm378, %v1848, -inf
  %2123 = vmax.xlane.f32.xlu0 %v2122
  %v2124 = vpop.xlane.xlu0 %2123
  %v2125 = vsel %vm378, %v1850, -inf
  %2126 = vmax.xlane.f32.xlu0 %v2125
  %v2127 = vpop.xlane.xlu0 %2126
  %v2128 = vsel %vm378, %v1853, -inf
  %2129 = vmax.xlane.f32.xlu0 %v2128
  %v2130 = vpop.xlane.xlu0 %2129
  %v2131 = vsub.f32 %v1843, %v2118
  %v2132 = vsub.f32 %v1845, %v2121
  %v2133 = vsub.f32 %v1848, %v2124
  %v2134 = vsub.f32 %v1850, %v2127
  %v2135 = vsub.f32 %v1853, %v2130
  %v2136 = vmul.f32 %v2131, 1.442695
  %v2137 = vpow.pop %v2136
  %v2138 = vmul.f32 %v2132, 1.442695
  %v2139 = vpow.pop %v2138
  %v2140 = vmul.f32 %v2133, 1.442695
  %v2141 = vpow.pop %v2140
  %v2142 = vmul.f32 %v2134, 1.442695
  %v2143 = vpow.pop %v2142
  %v2144 = vmul.f32 %v2135, 1.442695
  %v2145 = vpow.pop %v2144
  %v2146 = vsel %vm378, %v2137, 0.0
  %2147 = vadd.xlane.f32.xlu0 %v2146
  %v2148 = vpop.xlane.xlu0 %2147
  %v2149 = vsel %vm378, %v2139, 0.0
  %2150 = vadd.xlane.f32.xlu0 %v2149
  %v2151 = vpop.xlane.xlu0 %2150
  %v2152 = vsel %vm378, %v2141, 0.0
  %2153 = vadd.xlane.f32.xlu0 %v2152
  %v2154 = vpop.xlane.xlu0 %2153
  %v2155 = vsel %vm378, %v2143, 0.0
  %2156 = vadd.xlane.f32.xlu0 %v2155
  %v2157 = vpop.xlane.xlu0 %2156
  %v2158 = vsel %vm378, %v2145, 0.0
  %2159 = vadd.xlane.f32.xlu0 %v2158
  %v2160 = vpop.xlane.xlu0 %2159
  %v2161 = vrcp.pop %v2148
  %v2162 = vmul.f32 %v2148, %v2161
  %v2163 = vsub.f32 1.0, %v2162
  %v2164 = vmul.f32 %v2161, %v2163
  %v2165 = vadd.f32 %v2161, %v2164
  %vm2166 = vweird.f32 %v2148
  %vm2167 = vweird.f32 %v2161
  %vm2168 = vmor %vm2166, %vm2167
  %v2169 = vsel %vm2168, %v2161, %v2165
  %v2170 = vand.u32 2147483647, %v2148
  %vm2171 = vcmp.eq.f32.partialorder %v2170, 8.507059e+37
  %v2172 = vand.u32 %v2148, 2147483648
  %v2173 = vor.u32 1.1754944e-38, %v2172
  %v2174 = vsel %vm2171, %v2173, %v2169
  %v2175 = vrcp.pop %v2151
  %v2176 = vmul.f32 %v2151, %v2175
  %v2177 = vsub.f32 1.0, %v2176
  %v2178 = vmul.f32 %v2175, %v2177
  %v2179 = vadd.f32 %v2175, %v2178
  %vm2180 = vweird.f32 %v2151
  %vm2181 = vweird.f32 %v2175
  %vm2182 = vmor %vm2180, %vm2181
  %v2183 = vsel %vm2182, %v2175, %v2179
  %v2184 = vand.u32 2147483647, %v2151
  %vm2185 = vcmp.eq.f32.partialorder %v2184, 8.507059e+37
  %v2186 = vand.u32 %v2151, 2147483648
  %v2187 = vor.u32 1.1754944e-38, %v2186
  %v2188 = vsel %vm2185, %v2187, %v2183
  %v2189 = vrcp.pop %v2154
  %v2190 = vmul.f32 %v2154, %v2189
  %v2191 = vsub.f32 1.0, %v2190
  %v2192 = vmul.f32 %v2189, %v2191
  %v2193 = vadd.f32 %v2189, %v2192
  %vm2194 = vweird.f32 %v2154
  %vm2195 = vweird.f32 %v2189
  %vm2196 = vmor %vm2194, %vm2195
  %v2197 = vsel %vm2196, %v2189, %v2193
  %v2198 = vand.u32 2147483647, %v2154
  %vm2199 = vcmp.eq.f32.partialorder %v2198, 8.507059e+37
  %v2200 = vand.u32 %v2154, 2147483648
  %v2201 = vor.u32 1.1754944e-38, %v2200
  %v2202 = vsel %vm2199, %v2201, %v2197
  %v2203 = vrcp.pop %v2157
  %v2204 = vmul.f32 %v2157, %v2203
  %v2205 = vsub.f32 1.0, %v2204
  %v2206 = vmul.f32 %v2203, %v2205
  %v2207 = vadd.f32 %v2203, %v2206
  %vm2208 = vweird.f32 %v2157
  %vm2209 = vweird.f32 %v2203
  %vm2210 = vmor %vm2208, %vm2209
  %v2211 = vsel %vm2210, %v2203, %v2207
  %v2212 = vand.u32 2147483647, %v2157
  %vm2213 = vcmp.eq.f32.partialorder %v2212, 8.507059e+37
  %v2214 = vand.u32 %v2157, 2147483648
  %v2215 = vor.u32 1.1754944e-38, %v2214
  %v2216 = vsel %vm2213, %v2215, %v2211
  %v2217 = vrcp.pop %v2160
  %v2218 = vmul.f32 %v2160, %v2217
  %v2219 = vsub.f32 1.0, %v2218
  %v2220 = vmul.f32 %v2217, %v2219
  %v2221 = vadd.f32 %v2217, %v2220
  %vm2222 = vweird.f32 %v2160
  %vm2223 = vweird.f32 %v2217
  %vm2224 = vmor %vm2222, %vm2223
  %v2225 = vsel %vm2224, %v2217, %v2221
  %v2226 = vand.u32 2147483647, %v2160
  %vm2227 = vcmp.eq.f32.partialorder %v2226, 8.507059e+37
  %v2228 = vand.u32 %v2160, 2147483648
  %v2229 = vor.u32 1.1754944e-38, %v2228
  %v2230 = vsel %vm2227, %v2229, %v2225
  %v2231 = vmul.f32 %v2137, %v2174
  %v2232 = vmul.f32 %v2139, %v2188
  %v2233 = vmul.f32 %v2141, %v2202
  %v2234 = vmul.f32 %v2143, %v2216
  %v2235 = vmul.f32 %v2145, %v2230
  %v2236 = vsel %vm499, %v1843, -inf
  %2237 = vmax.xlane.f32.xlu0 %v2236
  %v2238 = vpop.xlane.xlu0 %2237
  %v2239 = vsel %vm499, %v1845, -inf
  %2240 = vmax.xlane.f32.xlu0 %v2239
  %v2241 = vpop.xlane.xlu0 %2240
  %v2242 = vsel %vm499, %v1848, -inf
  %2243 = vmax.xlane.f32.xlu0 %v2242
  %v2244 = vpop.xlane.xlu0 %2243
  %v2245 = vsel %vm499, %v1850, -inf
  %2246 = vmax.xlane.f32.xlu0 %v2245
  %v2247 = vpop.xlane.xlu0 %2246
  %v2248 = vsel %vm499, %v1853, -inf
  %2249 = vmax.xlane.f32.xlu0 %v2248
  %v2250 = vpop.xlane.xlu0 %2249
  %v2251 = vsub.f32 %v1843, %v2238
  %v2252 = vsub.f32 %v1845, %v2241
  %v2253 = vsub.f32 %v1848, %v2244
  %v2254 = vsub.f32 %v1850, %v2247
  %v2255 = vsub.f32 %v1853, %v2250
  %v2256 = vmul.f32 %v2251, 1.442695
  %v2257 = vpow.pop %v2256
  %v2258 = vmul.f32 %v2252, 1.442695
  %v2259 = vpow.pop %v2258
  %v2260 = vmul.f32 %v2253, 1.442695
  %v2261 = vpow.pop %v2260
  %v2262 = vmul.f32 %v2254, 1.442695
  %v2263 = vpow.pop %v2262
  %v2264 = vmul.f32 %v2255, 1.442695
  %v2265 = vpow.pop %v2264
  %2271 = vrot.lane.b32.xlu0 %v2257, 64
  %v2272 = vpop.permute.xlu0 %2271
  %2273 = vrot.lane.b32.xlu0 %v2259, 64
  %v2274 = vpop.permute.xlu0 %2273
  %2275 = vrot.lane.b32.xlu0 %v2261, 64
  %v2276 = vpop.permute.xlu0 %2275
  %2277 = vrot.lane.b32.xlu0 %v2263, 64
  %v2278 = vpop.permute.xlu0 %2277
  %2279 = vrot.lane.b32.xlu0 %v2265, 64
  %v2280 = vpop.permute.xlu0 %2279
  %v2286 = vsel %vm378, %v2272, 0.0
  %2287 = vadd.xlane.f32.xlu0 %v2286
  %v2288 = vpop.xlane.xlu0 %2287
  %v2289 = vsel %vm378, %v2274, 0.0
  %2290 = vadd.xlane.f32.xlu0 %v2289
  %v2291 = vpop.xlane.xlu0 %2290
  %v2292 = vsel %vm378, %v2276, 0.0
  %2293 = vadd.xlane.f32.xlu0 %v2292
  %v2294 = vpop.xlane.xlu0 %2293
  %v2295 = vsel %vm378, %v2278, 0.0
  %2296 = vadd.xlane.f32.xlu0 %v2295
  %v2297 = vpop.xlane.xlu0 %2296
  %v2298 = vsel %vm378, %v2280, 0.0
  %2299 = vadd.xlane.f32.xlu0 %v2298
  %v2300 = vpop.xlane.xlu0 %2299
  %v2301 = vrcp.pop %v2288
  %v2302 = vmul.f32 %v2288, %v2301
  %v2303 = vsub.f32 1.0, %v2302
  %v2304 = vmul.f32 %v2301, %v2303
  %v2305 = vadd.f32 %v2301, %v2304
  %vm2306 = vweird.f32 %v2288
  %vm2307 = vweird.f32 %v2301
  %vm2308 = vmor %vm2306, %vm2307
  %v2309 = vsel %vm2308, %v2301, %v2305
  %v2310 = vand.u32 2147483647, %v2288
  %vm2311 = vcmp.eq.f32.partialorder %v2310, 8.507059e+37
  %v2312 = vand.u32 %v2288, 2147483648
  %v2313 = vor.u32 1.1754944e-38, %v2312
  %v2314 = vsel %vm2311, %v2313, %v2309
  %v2315 = vrcp.pop %v2291
  %v2316 = vmul.f32 %v2291, %v2315
  %v2317 = vsub.f32 1.0, %v2316
  %v2318 = vmul.f32 %v2315, %v2317
  %v2319 = vadd.f32 %v2315, %v2318
  %vm2320 = vweird.f32 %v2291
  %vm2321 = vweird.f32 %v2315
  %vm2322 = vmor %vm2320, %vm2321
  %v2323 = vsel %vm2322, %v2315, %v2319
  %v2324 = vand.u32 2147483647, %v2291
  %vm2325 = vcmp.eq.f32.partialorder %v2324, 8.507059e+37
  %v2326 = vand.u32 %v2291, 2147483648
  %v2327 = vor.u32 1.1754944e-38, %v2326
  %v2328 = vsel %vm2325, %v2327, %v2323
  %v2329 = vrcp.pop %v2294
  %v2330 = vmul.f32 %v2294, %v2329
  %v2331 = vsub.f32 1.0, %v2330
  %v2332 = vmul.f32 %v2329, %v2331
  %v2333 = vadd.f32 %v2329, %v2332
  %vm2334 = vweird.f32 %v2294
  %vm2335 = vweird.f32 %v2329
  %vm2336 = vmor %vm2334, %vm2335
  %v2337 = vsel %vm2336, %v2329, %v2333
  %v2338 = vand.u32 2147483647, %v2294
  %vm2339 = vcmp.eq.f32.partialorder %v2338, 8.507059e+37
  %v2340 = vand.u32 %v2294, 2147483648
  %v2341 = vor.u32 1.1754944e-38, %v2340
  %v2342 = vsel %vm2339, %v2341, %v2337
  %v2343 = vrcp.pop %v2297
  %v2344 = vmul.f32 %v2297, %v2343
  %v2345 = vsub.f32 1.0, %v2344
  %v2346 = vmul.f32 %v2343, %v2345
  %v2347 = vadd.f32 %v2343, %v2346
  %vm2348 = vweird.f32 %v2297
  %vm2349 = vweird.f32 %v2343
  %vm2350 = vmor %vm2348, %vm2349
  %v2351 = vsel %vm2350, %v2343, %v2347
  %v2352 = vand.u32 2147483647, %v2297
  %vm2353 = vcmp.eq.f32.partialorder %v2352, 8.507059e+37
  %v2354 = vand.u32 %v2297, 2147483648
  %v2355 = vor.u32 1.1754944e-38, %v2354
  %v2356 = vsel %vm2353, %v2355, %v2351
  %v2357 = vrcp.pop %v2300
  %v2358 = vmul.f32 %v2300, %v2357
  %v2359 = vsub.f32 1.0, %v2358
  %v2360 = vmul.f32 %v2357, %v2359
  %v2361 = vadd.f32 %v2357, %v2360
  %vm2362 = vweird.f32 %v2300
  %vm2363 = vweird.f32 %v2357
  %vm2364 = vmor %vm2362, %vm2363
  %v2365 = vsel %vm2364, %v2357, %v2361
  %v2366 = vand.u32 2147483647, %v2300
  %vm2367 = vcmp.eq.f32.partialorder %v2366, 8.507059e+37
  %v2368 = vand.u32 %v2300, 2147483648
  %v2369 = vor.u32 1.1754944e-38, %v2368
  %v2370 = vsel %vm2367, %v2369, %v2365
  %v2371 = vmul.f32 %v2257, %v2314
  %v2372 = vmul.f32 %v2259, %v2328
  %v2373 = vmul.f32 %v2261, %v2342
  %v2374 = vmul.f32 %v2263, %v2356
  %v2375 = vmul.f32 %v2265, %v2370
  %v2376 = vsel %vm378, %v1971, %v2111
  %v2377 = vsel %vm378, %v1972, %v2112
  %v2378 = vsel %vm378, %v1973, %v2113
  %v2379 = vsel %vm378, %v1974, %v2114
  %v2380 = vsel %vm378, %v1975, %v2115
  %v2381 = vsel %vm378, %v2231, %v2371
  %v2382 = vsel %vm378, %v2232, %v2372
  %v2383 = vsel %vm378, %v2233, %v2373
  %v2384 = vsel %vm378, %v2234, %v2374
  %v2385 = vsel %vm378, %v2235, %v2375
  %v2386 = vpack.c.bf16 %v2377, %v2376
  %v2387 = vpack.c.bf16 %v2382, %v2381
  %v2388 = vpack.c.bf16 %v2379, %v2378
  %v2389 = vpack.c.bf16 %v2384, %v2383
  %v2390 = vpack.c.bf16 %v2380, %v2380
  %v2391 = vpack.c.bf16 %v2385, %v2385
  %2392 = vmatpush.bf16.msra.mxu0 %v259
  %2393 = vmatpush.bf16.msra.mxu0 %v1755
  %2394 = vmatpush.bf16.msra.mxu0 %v1754
  %2395 = vmatpush.bf16.msra.mxu0 %v1753
  %2396 = vmatpush.bf16.msra.mxu0 %v259
  %2397 = vmatpush.bf16.msra.mxu0 %v1752
  %2398 = vmatpush.bf16.msra.mxu0 %v1751
  %2399 = vmatpush.bf16.msra.mxu0 %v1750
  %2400 = vmatmul.bf16.gmra.mxu0 %v2386
  %v2401 = vpop.f32.mrf.mxu0
  %v2402 = vadd.f32 0.0, %v2401
  %v2403 = vpop.f32.mrf.mxu0
  %v2404 = vadd.f32 0.0, %v2403
  %2405 = vmatmul.bf16.gmra.mxu0 %v2388
  %v2406 = vpop.f32.mrf.mxu0
  %v2407 = vadd.f32 0.0, %v2406
  %v2408 = vpop.f32.mrf.mxu0
  %v2409 = vadd.f32 0.0, %v2408
  %2410 = vmatmul.bf16.gmra.mxu0 %v2390
  %v2411 = vpop.f32.mrf.mxu0
  %v2412 = vadd.f32 0.0, %v2411
  %v2413 = vpop.f32.mrf.mxu0
  %2414 = vdwg.mxu0
  %2415 = vmatpush.bf16.msra.mxu0 %v259
  %2416 = vmatpush.bf16.msra.mxu0 %v1761
  %2417 = vmatpush.bf16.msra.mxu0 %v1760
  %2418 = vmatpush.bf16.msra.mxu0 %v1759
  %2419 = vmatpush.bf16.msra.mxu0 %v259
  %2420 = vmatpush.bf16.msra.mxu0 %v1758
  %2421 = vmatpush.bf16.msra.mxu0 %v1757
  %2422 = vmatpush.bf16.msra.mxu0 %v1756
  %2423 = vmatmul.bf16.gmra.mxu0 %v2387
  %v2424 = vpop.f32.mrf.mxu0
  %v2425 = vadd.f32 %v2402, %v2424
  %v2426 = vpop.f32.mrf.mxu0
  %v2427 = vadd.f32 %v2404, %v2426
  %2428 = vmatmul.bf16.gmra.mxu0 %v2389
  %v2429 = vpop.f32.mrf.mxu0
  %v2430 = vadd.f32 %v2407, %v2429
  %v2431 = vpop.f32.mrf.mxu0
  %v2432 = vadd.f32 %v2409, %v2431
  %2433 = vmatmul.bf16.gmra.mxu0 %v2391
  %v2434 = vpop.f32.mrf.mxu0
  %v2435 = vadd.f32 %v2412, %v2434
  %v2436 = vpop.f32.mrf.mxu0
  %2437 = vdwg.mxu0
  %v2438 = vpack.c.bf16 %v2427, %v2425
  %v2439 = vpack.c.bf16 %v2432, %v2430
  %v2440 = vpack.c.bf16 %v2435, %v2435
  %v2441 = vperm.slane %v1614, 2
  %2442 = vrot.lane.b32.xlu0 %v1627, 32
  %v2443 = vpop.permute.xlu0 %2442
  %2444 = vrot.lane.b32.xlu0 %v1628, 32
  %v2445 = vpop.permute.xlu0 %2444
  %v2449 = vsel %vm140, %v2438, 0
  %v2452 = vsel %vm140, %v2439, 0
  %v2455 = vsel %vm140, %v2440, 0
  %2457 = vmatpush.bf16.msra.mxu0 0
  %2458 = vmatpush.bf16.msra.mxu0 0
  %2459 = vmatpush.bf16.msra.mxu0 0
  %2460 = vmatpush.bf16.msra.mxu0 0
  %2461 = vmatpush.bf16.msra.mxu0 0
  %2462 = vmatpush.bf16.msra.mxu0 0
  %2463 = vmatpush.bf16.msra.mxu0 %v2445
  %2464 = vmatpush.bf16.msra.mxu0 %v2443
  %2465 = vmatmul.bf16.gmra.mxu0 %v2449
  %v2466 = vpop.f32.mrf.mxu0
  %v2467 = vadd.f32 %v2441, %v2466
  %v2468 = vpop.f32.mrf.mxu0
  %v2469 = vadd.f32 %v2441, %v2468
  %2470 = vmatmul.bf16.gmra.mxu0 %v2452
  %v2471 = vpop.f32.mrf.mxu0
  %v2472 = vadd.f32 %v2441, %v2471
  %v2473 = vpop.f32.mrf.mxu0
  %v2474 = vadd.f32 %v2441, %v2473
  %2475 = vmatmul.bf16.gmra.mxu0 %v2455
  %v2476 = vpop.f32.mrf.mxu0
  %v2477 = vadd.f32 %v2441, %v2476
  %v2478 = vpop.f32.mrf.mxu0
  %2479 = vdwg.mxu0
  %v2480 = vadd.f32 %v1599, %v2467
  %v2481 = vadd.f32 %v1600, %v2469
  %v2482 = vadd.f32 %v1601, %v2472
  %v2483 = vadd.f32 %v1602, %v2474
  %v2484 = vadd.f32 %v1603, %v2477
  %v2485 = vsel %vm140, %v2480, 0.0
  %2486 = vadd.xlane.f32.xlu0 %v2485
  %v2487 = vpop.xlane.xlu0 %2486
  %v2488 = vsel %vm140, %v2481, 0.0
  %2489 = vadd.xlane.f32.xlu0 %v2488
  %v2490 = vpop.xlane.xlu0 %2489
  %v2491 = vsel %vm140, %v2482, 0.0
  %2492 = vadd.xlane.f32.xlu0 %v2491
  %v2493 = vpop.xlane.xlu0 %2492
  %v2494 = vsel %vm140, %v2483, 0.0
  %2495 = vadd.xlane.f32.xlu0 %v2494
  %v2496 = vpop.xlane.xlu0 %2495
  %v2497 = vsel %vm140, %v2484, 0.0
  %2498 = vadd.xlane.f32.xlu0 %v2497
  %v2499 = vpop.xlane.xlu0 %2498
  %v2500 = vmul.f32 %v2487, %v1030
  %v2501 = vmul.f32 %v2490, %v1030
  %v2502 = vmul.f32 %v2493, %v1030
  %v2503 = vmul.f32 %v2496, %v1030
  %v2504 = vmul.f32 %v2499, %v1030
  %v2505 = vsub.f32 %v2480, %v2500
  %v2506 = vsub.f32 %v2481, %v2501
  %v2507 = vsub.f32 %v2482, %v2502
  %v2508 = vsub.f32 %v2483, %v2503
  %v2509 = vsub.f32 %v2484, %v2504
  %v2510 = vmul.f32 %v2505, %v2505
  %v2511 = vmul.f32 %v2506, %v2506
  %v2512 = vmul.f32 %v2507, %v2507
  %v2513 = vmul.f32 %v2508, %v2508
  %v2514 = vmul.f32 %v2509, %v2509
  %v2515 = vsel %vm140, %v2510, 0.0
  %2516 = vadd.xlane.f32.xlu0 %v2515
  %v2517 = vpop.xlane.xlu0 %2516
  %v2518 = vsel %vm140, %v2511, 0.0
  %2519 = vadd.xlane.f32.xlu0 %v2518
  %v2520 = vpop.xlane.xlu0 %2519
  %v2521 = vsel %vm140, %v2512, 0.0
  %2522 = vadd.xlane.f32.xlu0 %v2521
  %v2523 = vpop.xlane.xlu0 %2522
  %v2524 = vsel %vm140, %v2513, 0.0
  %2525 = vadd.xlane.f32.xlu0 %v2524
  %v2526 = vpop.xlane.xlu0 %2525
  %v2527 = vsel %vm140, %v2514, 0.0
  %2528 = vadd.xlane.f32.xlu0 %v2527
  %v2529 = vpop.xlane.xlu0 %2528
  %v2530 = vmul.f32 %v2517, %v1030
  %v2531 = vmul.f32 %v2520, %v1030
  %v2532 = vmul.f32 %v2523, %v1030
  %v2533 = vmul.f32 %v2526, %v1030
  %v2534 = vmul.f32 %v2529, %v1030
  %v2535 = vadd.f32 %v2530, 1e-05
  %v2536 = vadd.f32 %v2531, 1e-05
  %v2537 = vadd.f32 %v2532, 1e-05
  %v2538 = vadd.f32 %v2533, 1e-05
  %v2539 = vadd.f32 %v2534, 1e-05
  %v2540 = vrsqrt.pop %v2535
  %v2541 = vmul.f32 %v2540, %v2535
  %v2542 = vmul.f32 %v2541, %v2540
  %v2543 = vmul.f32 0.5, %v2542
  %v2544 = vsub.f32 1.5, %v2543
  %v2545 = vmul.f32 %v2540, %v2544
  %vm2546 = vweird.f32 %v2535
  %vm2547 = vweird.f32 %v2540
  %vm2548 = vmor %vm2546, %vm2547
  %v2549 = vsel %vm2548, %v2540, %v2545
  %v2550 = vrsqrt.pop %v2536
  %v2551 = vmul.f32 %v2550, %v2536
  %v2552 = vmul.f32 %v2551, %v2550
  %v2553 = vmul.f32 0.5, %v2552
  %v2554 = vsub.f32 1.5, %v2553
  %v2555 = vmul.f32 %v2550, %v2554
  %vm2556 = vweird.f32 %v2536
  %vm2557 = vweird.f32 %v2550
  %vm2558 = vmor %vm2556, %vm2557
  %v2559 = vsel %vm2558, %v2550, %v2555
  %v2560 = vrsqrt.pop %v2537
  %v2561 = vmul.f32 %v2560, %v2537
  %v2562 = vmul.f32 %v2561, %v2560
  %v2563 = vmul.f32 0.5, %v2562
  %v2564 = vsub.f32 1.5, %v2563
  %v2565 = vmul.f32 %v2560, %v2564
  %vm2566 = vweird.f32 %v2537
  %vm2567 = vweird.f32 %v2560
  %vm2568 = vmor %vm2566, %vm2567
  %v2569 = vsel %vm2568, %v2560, %v2565
  %v2570 = vrsqrt.pop %v2538
  %v2571 = vmul.f32 %v2570, %v2538
  %v2572 = vmul.f32 %v2571, %v2570
  %v2573 = vmul.f32 0.5, %v2572
  %v2574 = vsub.f32 1.5, %v2573
  %v2575 = vmul.f32 %v2570, %v2574
  %vm2576 = vweird.f32 %v2538
  %vm2577 = vweird.f32 %v2570
  %vm2578 = vmor %vm2576, %vm2577
  %v2579 = vsel %vm2578, %v2570, %v2575
  %v2580 = vrsqrt.pop %v2539
  %v2581 = vmul.f32 %v2580, %v2539
  %v2582 = vmul.f32 %v2581, %v2580
  %v2583 = vmul.f32 0.5, %v2582
  %v2584 = vsub.f32 1.5, %v2583
  %v2585 = vmul.f32 %v2580, %v2584
  %vm2586 = vweird.f32 %v2539
  %vm2587 = vweird.f32 %v2580
  %vm2588 = vmor %vm2586, %vm2587
  %v2589 = vsel %vm2588, %v2580, %v2585
  %v2590 = vmul.f32 %v2505, %v2549
  %v2591 = vmul.f32 %v2506, %v2559
  %v2592 = vmul.f32 %v2507, %v2569
  %v2593 = vmul.f32 %v2508, %v2579
  %v2594 = vmul.f32 %v2509, %v2589
  %v2595 = vperm.slane %v1614, 3
  %v2596 = vmul.f32 %v2590, %v2595
  %v2597 = vmul.f32 %v2591, %v2595
  %v2598 = vmul.f32 %v2592, %v2595
  %v2599 = vmul.f32 %v2593, %v2595
  %v2600 = vmul.f32 %v2594, %v2595
  %v2601 = vperm.slane %v1614, 4
  %v2602 = vadd.f32 %v2596, %v2601
  %v2603 = vadd.f32 %v2597, %v2601
  %v2604 = vadd.f32 %v2598, %v2601
  %v2605 = vadd.f32 %v2599, %v2601
  %v2606 = vadd.f32 %v2600, %v2601
  %v2607 = vpack.c.bf16 %v2603, %v2602
  %v2608 = vpack.c.bf16 %v2605, %v2604
  %v2609 = vpack.c.bf16 %v2606, %v2606
  %v2610 = vperm.slane %v1614, 1
  %v2615 = vunpack.c.l.b16 %v1609
  %v2616 = vunpack.c.l.b16 %v1610
  %v2617 = vunpack.c.l.b16 %v1611
  %v2618 = vunpack.c.l.b16 %v1612
  %v2619 = vpack.c.b16 %v2616, %v2615
  %v2620 = vpack.c.b16 %v2618, %v2617
  %v2624 = vsel %vm140, %v2607, 0
  %v2627 = vsel %vm140, %v2608, 0
  %v2630 = vsel %vm140, %v2609, 0
  %2632 = vmatpush.bf16.msra.mxu0 0
  %2633 = vmatpush.bf16.msra.mxu0 0
  %2634 = vmatpush.bf16.msra.mxu0 0
  %2635 = vmatpush.bf16.msra.mxu0 0
  %2636 = vmatpush.bf16.msra.mxu0 0
  %2637 = vmatpush.bf16.msra.mxu0 0
  %2638 = vmatpush.bf16.msra.mxu0 %v2620
  %2639 = vmatpush.bf16.msra.mxu0 %v2619
  %2640 = vmatmul.bf16.gmra.mxu0 %v2624
  %v2641 = vpop.f32.mrf.mxu0
  %v2642 = vadd.f32 %v2610, %v2641
  %v2643 = vpop.f32.mrf.mxu0
  %v2644 = vadd.f32 %v2610, %v2643
  %2645 = vmatmul.bf16.gmra.mxu0 %v2627
  %v2646 = vpop.f32.mrf.mxu0
  %v2647 = vadd.f32 %v2610, %v2646
  %v2648 = vpop.f32.mrf.mxu0
  %v2649 = vadd.f32 %v2610, %v2648
  %2650 = vmatmul.bf16.gmra.mxu0 %v2630
  %v2651 = vpop.f32.mrf.mxu0
  %v2652 = vadd.f32 %v2610, %v2651
  %v2653 = vpop.f32.mrf.mxu0
  %2654 = vdwg.mxu0
  %v2655 = vmul.f32 %v2642, 0.5
  %v2656 = vmul.f32 %v2644, 0.5
  %v2657 = vmul.f32 %v2647, 0.5
  %v2658 = vmul.f32 %v2649, 0.5
  %v2659 = vmul.f32 %v2652, 0.5
  %v2660 = vmul.f32 %v2642, 0.70710677
  %v2661 = vmul.f32 %v2644, 0.70710677
  %v2662 = vmul.f32 %v2647, 0.70710677
  %v2663 = vmul.f32 %v2649, 0.70710677
  %v2664 = vmul.f32 %v2652, 0.70710677
  %vm2665 = vcmp.ge.f32.partialorder %v2660, 0.0
  %vm2666 = vcmp.ge.f32.partialorder %v2661, 0.0
  %vm2667 = vcmp.ge.f32.partialorder %v2662, 0.0
  %vm2668 = vcmp.ge.f32.partialorder %v2663, 0.0
  %vm2669 = vcmp.ge.f32.partialorder %v2664, 0.0
  %v2670 = vsel %vm2665, 1.0, -1.0
  %v2671 = vsel %vm2666, 1.0, -1.0
  %v2672 = vsel %vm2667, 1.0, -1.0
  %v2673 = vsel %vm2668, 1.0, -1.0
  %v2674 = vsel %vm2669, 1.0, -1.0
  %v2675 = vand.u32 2147483647, %v2660
  %v2676 = vand.u32 2147483647, %v2661
  %v2677 = vand.u32 2147483647, %v2662
  %v2678 = vand.u32 2147483647, %v2663
  %v2679 = vand.u32 2147483647, %v2664
  %v2680 = vmul.f32 %v2675, 0.3275911
  %v2681 = vmul.f32 %v2676, 0.3275911
  %v2682 = vmul.f32 %v2677, 0.3275911
  %v2683 = vmul.f32 %v2678, 0.3275911
  %v2684 = vmul.f32 %v2679, 0.3275911
  %v2685 = vadd.f32 %v2680, 1.0
  %v2686 = vadd.f32 %v2681, 1.0
  %v2687 = vadd.f32 %v2682, 1.0
  %v2688 = vadd.f32 %v2683, 1.0
  %v2689 = vadd.f32 %v2684, 1.0
  %v2690 = vrcp.pop %v2685
  %v2691 = vmul.f32 %v2685, %v2690
  %v2692 = vsub.f32 1.0, %v2691
  %v2693 = vmul.f32 %v2690, %v2692
  %v2694 = vadd.f32 %v2690, %v2693
  %vm2695 = vweird.f32 %v2685
  %vm2696 = vweird.f32 %v2690
  %vm2697 = vmor %vm2695, %vm2696
  %v2698 = vsel %vm2697, %v2690, %v2694
  %v2699 = vand.u32 2147483647, %v2685
  %vm2700 = vcmp.eq.f32.partialorder %v2699, 8.507059e+37
  %v2701 = vand.u32 %v2685, 2147483648
  %v2702 = vor.u32 1.1754944e-38, %v2701
  %v2703 = vsel %vm2700, %v2702, %v2698
  %v2704 = vmul.f32 1.0, %v2703
  %v2705 = vrcp.pop %v2686
  %v2706 = vmul.f32 %v2686, %v2705
  %v2707 = vsub.f32 1.0, %v2706
  %v2708 = vmul.f32 %v2705, %v2707
  %v2709 = vadd.f32 %v2705, %v2708
  %vm2710 = vweird.f32 %v2686
  %vm2711 = vweird.f32 %v2705
  %vm2712 = vmor %vm2710, %vm2711
  %v2713 = vsel %vm2712, %v2705, %v2709
  %v2714 = vand.u32 2147483647, %v2686
  %vm2715 = vcmp.eq.f32.partialorder %v2714, 8.507059e+37
  %v2716 = vand.u32 %v2686, 2147483648
  %v2717 = vor.u32 1.1754944e-38, %v2716
  %v2718 = vsel %vm2715, %v2717, %v2713
  %v2719 = vmul.f32 1.0, %v2718
  %v2720 = vrcp.pop %v2687
  %v2721 = vmul.f32 %v2687, %v2720
  %v2722 = vsub.f32 1.0, %v2721
  %v2723 = vmul.f32 %v2720, %v2722
  %v2724 = vadd.f32 %v2720, %v2723
  %vm2725 = vweird.f32 %v2687
  %vm2726 = vweird.f32 %v2720
  %vm2727 = vmor %vm2725, %vm2726
  %v2728 = vsel %vm2727, %v2720, %v2724
  %v2729 = vand.u32 2147483647, %v2687
  %vm2730 = vcmp.eq.f32.partialorder %v2729, 8.507059e+37
  %v2731 = vand.u32 %v2687, 2147483648
  %v2732 = vor.u32 1.1754944e-38, %v2731
  %v2733 = vsel %vm2730, %v2732, %v2728
  %v2734 = vmul.f32 1.0, %v2733
  %v2735 = vrcp.pop %v2688
  %v2736 = vmul.f32 %v2688, %v2735
  %v2737 = vsub.f32 1.0, %v2736
  %v2738 = vmul.f32 %v2735, %v2737
  %v2739 = vadd.f32 %v2735, %v2738
  %vm2740 = vweird.f32 %v2688
  %vm2741 = vweird.f32 %v2735
  %vm2742 = vmor %vm2740, %vm2741
  %v2743 = vsel %vm2742, %v2735, %v2739
  %v2744 = vand.u32 2147483647, %v2688
  %vm2745 = vcmp.eq.f32.partialorder %v2744, 8.507059e+37
  %v2746 = vand.u32 %v2688, 2147483648
  %v2747 = vor.u32 1.1754944e-38, %v2746
  %v2748 = vsel %vm2745, %v2747, %v2743
  %v2749 = vmul.f32 1.0, %v2748
  %v2750 = vrcp.pop %v2689
  %v2751 = vmul.f32 %v2689, %v2750
  %v2752 = vsub.f32 1.0, %v2751
  %v2753 = vmul.f32 %v2750, %v2752
  %v2754 = vadd.f32 %v2750, %v2753
  %vm2755 = vweird.f32 %v2689
  %vm2756 = vweird.f32 %v2750
  %vm2757 = vmor %vm2755, %vm2756
  %v2758 = vsel %vm2757, %v2750, %v2754
  %v2759 = vand.u32 2147483647, %v2689
  %vm2760 = vcmp.eq.f32.partialorder %v2759, 8.507059e+37
  %v2761 = vand.u32 %v2689, 2147483648
  %v2762 = vor.u32 1.1754944e-38, %v2761
  %v2763 = vsel %vm2760, %v2762, %v2758
  %v2764 = vmul.f32 1.0, %v2763
  %v2765 = vmul.f32 %v2704, 1.0614054
  %v2766 = vmul.f32 %v2719, 1.0614054
  %v2767 = vmul.f32 %v2734, 1.0614054
  %v2768 = vmul.f32 %v2749, 1.0614054
  %v2769 = vmul.f32 %v2764, 1.0614054
  %v2770 = vadd.f32 %v2765, -1.4531521
  %v2771 = vadd.f32 %v2766, -1.4531521
  %v2772 = vadd.f32 %v2767, -1.4531521
  %v2773 = vadd.f32 %v2768, -1.4531521
  %v2774 = vadd.f32 %v2769, -1.4531521
  %v2775 = vmul.f32 %v2770, %v2704
  %v2776 = vmul.f32 %v2771, %v2719
  %v2777 = vmul.f32 %v2772, %v2734
  %v2778 = vmul.f32 %v2773, %v2749
  %v2779 = vmul.f32 %v2774, %v2764
  %v2780 = vadd.f32 %v2775, 1.4214138
  %v2781 = vadd.f32 %v2776, 1.4214138
  %v2782 = vadd.f32 %v2777, 1.4214138
  %v2783 = vadd.f32 %v2778, 1.4214138
  %v2784 = vadd.f32 %v2779, 1.4214138
  %v2785 = vmul.f32 %v2780, %v2704
  %v2786 = vmul.f32 %v2781, %v2719
  %v2787 = vmul.f32 %v2782, %v2734
  %v2788 = vmul.f32 %v2783, %v2749
  %v2789 = vmul.f32 %v2784, %v2764
  %v2790 = vadd.f32 %v2785, -0.28449672
  %v2791 = vadd.f32 %v2786, -0.28449672
  %v2792 = vadd.f32 %v2787, -0.28449672
  %v2793 = vadd.f32 %v2788, -0.28449672
  %v2794 = vadd.f32 %v2789, -0.28449672
  %v2795 = vmul.f32 %v2790, %v2704
  %v2796 = vmul.f32 %v2791, %v2719
  %v2797 = vmul.f32 %v2792, %v2734
  %v2798 = vmul.f32 %v2793, %v2749
  %v2799 = vmul.f32 %v2794, %v2764
  %v2800 = vadd.f32 %v2795, 0.2548296
  %v2801 = vadd.f32 %v2796, 0.2548296
  %v2802 = vadd.f32 %v2797, 0.2548296
  %v2803 = vadd.f32 %v2798, 0.2548296
  %v2804 = vadd.f32 %v2799, 0.2548296
  %v2805 = vmul.f32 %v2800, %v2704
  %v2806 = vmul.f32 %v2801, %v2719
  %v2807 = vmul.f32 %v2802, %v2734
  %v2808 = vmul.f32 %v2803, %v2749
  %v2809 = vmul.f32 %v2804, %v2764
  %v2810 = vsub.f32 0.0, %v2675
  %v2811 = vsub.f32 0.0, %v2676
  %v2812 = vsub.f32 0.0, %v2677
  %v2813 = vsub.f32 0.0, %v2678
  %v2814 = vsub.f32 0.0, %v2679
  %v2815 = vmul.f32 %v2810, %v2675
  %v2816 = vmul.f32 %v2811, %v2676
  %v2817 = vmul.f32 %v2812, %v2677
  %v2818 = vmul.f32 %v2813, %v2678
  %v2819 = vmul.f32 %v2814, %v2679
  %v2820 = vmul.f32 %v2815, 1.442695
  %v2821 = vpow.pop %v2820
  %v2822 = vmul.f32 %v2816, 1.442695
  %v2823 = vpow.pop %v2822
  %v2824 = vmul.f32 %v2817, 1.442695
  %v2825 = vpow.pop %v2824
  %v2826 = vmul.f32 %v2818, 1.442695
  %v2827 = vpow.pop %v2826
  %v2828 = vmul.f32 %v2819, 1.442695
  %v2829 = vpow.pop %v2828
  %v2830 = vmul.f32 %v2805, %v2821
  %v2831 = vmul.f32 %v2806, %v2823
  %v2832 = vmul.f32 %v2807, %v2825
  %v2833 = vmul.f32 %v2808, %v2827
  %v2834 = vmul.f32 %v2809, %v2829
  %v2835 = vsub.f32 1.0, %v2830
  %v2836 = vsub.f32 1.0, %v2831
  %v2837 = vsub.f32 1.0, %v2832
  %v2838 = vsub.f32 1.0, %v2833
  %v2839 = vsub.f32 1.0, %v2834
  %v2840 = vmul.f32 %v2670, %v2835
  %v2841 = vmul.f32 %v2671, %v2836
  %v2842 = vmul.f32 %v2672, %v2837
  %v2843 = vmul.f32 %v2673, %v2838
  %v2844 = vmul.f32 %v2674, %v2839
  %v2845 = vadd.f32 %v2840, 1.0
  %v2846 = vadd.f32 %v2841, 1.0
  %v2847 = vadd.f32 %v2842, 1.0
  %v2848 = vadd.f32 %v2843, 1.0
  %v2849 = vadd.f32 %v2844, 1.0
  %v2850 = vmul.f32 %v2655, %v2845
  %v2851 = vmul.f32 %v2656, %v2846
  %v2852 = vmul.f32 %v2657, %v2847
  %v2853 = vmul.f32 %v2658, %v2848
  %v2854 = vmul.f32 %v2659, %v2849
  %v2855 = vpack.c.bf16 %v2851, %v2850
  %v2856 = vpack.c.bf16 %v2853, %v2852
  %v2857 = vpack.c.bf16 %v2854, %v2854
  %s2858 = scalar_lea.vmem %s4, 64
  %v2859 = vld [vmem:[%s2858] sm:$0xf]
  %v2860 = vld [vmem:[%s2858 + $0x4] sm:$0xf]
  %v2861 = vld [vmem:[%s2858 + $0x8] sm:$0xf]
  %v2862 = vld [vmem:[%s2858 + $0xc] sm:$0xf]
  %v2863 = vld [vmem:[%s2858 + $0x10] sm:$0xf]
  %v2864 = vld [vmem:[%s2858 + $0x14] sm:$0xf]
  %v2865 = vld [vmem:[%s2858 + $0x18] sm:$0xf]
  %v2866 = vld [vmem:[%s2858 + $0x1c] sm:$0xf]
  %v2867 = vld [vmem:[%s2858 + $0x20] sm:$0xf]
  %v2868 = vld [vmem:[%s2858 + $0x24] sm:$0xf]
  %v2869 = vld [vmem:[%s2858 + $0x28] sm:$0xf]
  %v2870 = vld [vmem:[%s2858 + $0x2c] sm:$0xf]
  %v2871 = vld [vmem:[%s2858 + $0x30] sm:$0xf]
  %v2872 = vld [vmem:[%s2858 + $0x34] sm:$0xf]
  %v2873 = vld [vmem:[%s2858 + $0x38] sm:$0xf]
  %v2874 = vld [vmem:[%s2858 + $0x3c] sm:$0xf]
  %v2875 = vperm.slane %v1614, 5
  %v2892 = vunpack.c.l.b16 %v2859
  %v2893 = vunpack.c.l.b16 %v2860
  %v2894 = vunpack.c.l.b16 %v2861
  %v2895 = vunpack.c.l.b16 %v2862
  %v2896 = vunpack.c.l.b16 %v2863
  %v2897 = vunpack.c.l.b16 %v2864
  %v2898 = vunpack.c.l.b16 %v2865
  %v2899 = vunpack.c.l.b16 %v2866
  %v2900 = vunpack.c.l.b16 %v2867
  %v2901 = vunpack.c.l.b16 %v2868
  %v2902 = vunpack.c.l.b16 %v2869
  %v2903 = vunpack.c.l.b16 %v2870
  %v2904 = vunpack.c.l.b16 %v2871
  %v2905 = vunpack.c.l.b16 %v2872
  %v2906 = vunpack.c.l.b16 %v2873
  %v2907 = vunpack.c.l.b16 %v2874
  %v2908 = vpack.c.b16 %v2893, %v2892
  %v2909 = vpack.c.b16 %v2895, %v2894
  %v2910 = vpack.c.b16 %v2897, %v2896
  %v2911 = vpack.c.b16 %v2899, %v2898
  %v2912 = vpack.c.b16 %v2901, %v2900
  %v2913 = vpack.c.b16 %v2903, %v2902
  %v2914 = vpack.c.b16 %v2905, %v2904
  %v2915 = vpack.c.b16 %v2907, %v2906
  %2924 = vmatpush.bf16.msra.mxu0 %v2915
  %2925 = vmatpush.bf16.msra.mxu0 %v2914
  %2926 = vmatpush.bf16.msra.mxu0 %v2913
  %2927 = vmatpush.bf16.msra.mxu0 %v2912
  %2928 = vmatpush.bf16.msra.mxu0 %v2911
  %2929 = vmatpush.bf16.msra.mxu0 %v2910
  %2930 = vmatpush.bf16.msra.mxu0 %v2909
  %2931 = vmatpush.bf16.msra.mxu0 %v2908
  %2932 = vmatmul.bf16.gmra.mxu0 %v2855
  %v2933 = vpop.f32.mrf.mxu0
  %v2934 = vadd.f32 %v2875, %v2933
  %v2935 = vpop.f32.mrf.mxu0
  %v2936 = vadd.f32 %v2875, %v2935
  %2937 = vmatmul.bf16.gmra.mxu0 %v2856
  %v2938 = vpop.f32.mrf.mxu0
  %v2939 = vadd.f32 %v2875, %v2938
  %v2940 = vpop.f32.mrf.mxu0
  %v2941 = vadd.f32 %v2875, %v2940
  %2942 = vmatmul.bf16.gmra.mxu0 %v2857
  %v2943 = vpop.f32.mrf.mxu0
  %v2944 = vadd.f32 %v2875, %v2943
  %v2945 = vpop.f32.mrf.mxu0
  %2946 = vdwg.mxu0
  %v2947 = vadd.f32 %v2602, %v2934
  %v2948 = vadd.f32 %v2603, %v2936
  %v2949 = vadd.f32 %v2604, %v2939
  %v2950 = vadd.f32 %v2605, %v2941
  %v2951 = vadd.f32 %v2606, %v2944
  %v2952 = vsel %vm140, %v2947, 0.0
  %2953 = vadd.xlane.f32.xlu0 %v2952
  %v2954 = vpop.xlane.xlu0 %2953
  %v2955 = vsel %vm140, %v2948, 0.0
  %2956 = vadd.xlane.f32.xlu0 %v2955
  %v2957 = vpop.xlane.xlu0 %2956
  %v2958 = vsel %vm140, %v2949, 0.0
  %2959 = vadd.xlane.f32.xlu0 %v2958
  %v2960 = vpop.xlane.xlu0 %2959
  %v2961 = vsel %vm140, %v2950, 0.0
  %2962 = vadd.xlane.f32.xlu0 %v2961
  %v2963 = vpop.xlane.xlu0 %2962
  %v2964 = vsel %vm140, %v2951, 0.0
  %2965 = vadd.xlane.f32.xlu0 %v2964
  %v2966 = vpop.xlane.xlu0 %2965
  %v2967 = vmul.f32 %v2954, %v1030
  %v2968 = vmul.f32 %v2957, %v1030
  %v2969 = vmul.f32 %v2960, %v1030
  %v2970 = vmul.f32 %v2963, %v1030
  %v2971 = vmul.f32 %v2966, %v1030
  %v2972 = vsub.f32 %v2947, %v2967
  %v2973 = vsub.f32 %v2948, %v2968
  %v2974 = vsub.f32 %v2949, %v2969
  %v2975 = vsub.f32 %v2950, %v2970
  %v2976 = vsub.f32 %v2951, %v2971
  %v2977 = vmul.f32 %v2972, %v2972
  %v2978 = vmul.f32 %v2973, %v2973
  %v2979 = vmul.f32 %v2974, %v2974
  %v2980 = vmul.f32 %v2975, %v2975
  %v2981 = vmul.f32 %v2976, %v2976
  %v2982 = vsel %vm140, %v2977, 0.0
  %2983 = vadd.xlane.f32.xlu0 %v2982
  %v2984 = vpop.xlane.xlu0 %2983
  %v2985 = vsel %vm140, %v2978, 0.0
  %2986 = vadd.xlane.f32.xlu0 %v2985
  %v2987 = vpop.xlane.xlu0 %2986
  %v2988 = vsel %vm140, %v2979, 0.0
  %2989 = vadd.xlane.f32.xlu0 %v2988
  %v2990 = vpop.xlane.xlu0 %2989
  %v2991 = vsel %vm140, %v2980, 0.0
  %2992 = vadd.xlane.f32.xlu0 %v2991
  %v2993 = vpop.xlane.xlu0 %2992
  %v2994 = vsel %vm140, %v2981, 0.0
  %2995 = vadd.xlane.f32.xlu0 %v2994
  %v2996 = vpop.xlane.xlu0 %2995
  %v2997 = vmul.f32 %v2984, %v1030
  %v2998 = vmul.f32 %v2987, %v1030
  %v2999 = vmul.f32 %v2990, %v1030
  %v3000 = vmul.f32 %v2993, %v1030
  %v3001 = vmul.f32 %v2996, %v1030
  %v3002 = vadd.f32 %v2997, 1e-05
  %v3003 = vadd.f32 %v2998, 1e-05
  %v3004 = vadd.f32 %v2999, 1e-05
  %v3005 = vadd.f32 %v3000, 1e-05
  %v3006 = vadd.f32 %v3001, 1e-05
  %v3007 = vrsqrt.pop %v3002
  %v3008 = vmul.f32 %v3007, %v3002
  %v3009 = vmul.f32 %v3008, %v3007
  %v3010 = vmul.f32 0.5, %v3009
  %v3011 = vsub.f32 1.5, %v3010
  %v3012 = vmul.f32 %v3007, %v3011
  %vm3013 = vweird.f32 %v3002
  %vm3014 = vweird.f32 %v3007
  %vm3015 = vmor %vm3013, %vm3014
  %v3016 = vsel %vm3015, %v3007, %v3012
  %v3017 = vrsqrt.pop %v3003
  %v3018 = vmul.f32 %v3017, %v3003
  %v3019 = vmul.f32 %v3018, %v3017
  %v3020 = vmul.f32 0.5, %v3019
  %v3021 = vsub.f32 1.5, %v3020
  %v3022 = vmul.f32 %v3017, %v3021
  %vm3023 = vweird.f32 %v3003
  %vm3024 = vweird.f32 %v3017
  %vm3025 = vmor %vm3023, %vm3024
  %v3026 = vsel %vm3025, %v3017, %v3022
  %v3027 = vrsqrt.pop %v3004
  %v3028 = vmul.f32 %v3027, %v3004
  %v3029 = vmul.f32 %v3028, %v3027
  %v3030 = vmul.f32 0.5, %v3029
  %v3031 = vsub.f32 1.5, %v3030
  %v3032 = vmul.f32 %v3027, %v3031
  %vm3033 = vweird.f32 %v3004
  %vm3034 = vweird.f32 %v3027
  %vm3035 = vmor %vm3033, %vm3034
  %v3036 = vsel %vm3035, %v3027, %v3032
  %v3037 = vrsqrt.pop %v3005
  %v3038 = vmul.f32 %v3037, %v3005
  %v3039 = vmul.f32 %v3038, %v3037
  %v3040 = vmul.f32 0.5, %v3039
  %v3041 = vsub.f32 1.5, %v3040
  %v3042 = vmul.f32 %v3037, %v3041
  %vm3043 = vweird.f32 %v3005
  %vm3044 = vweird.f32 %v3037
  %vm3045 = vmor %vm3043, %vm3044
  %v3046 = vsel %vm3045, %v3037, %v3042
  %v3047 = vrsqrt.pop %v3006
  %v3048 = vmul.f32 %v3047, %v3006
  %v3049 = vmul.f32 %v3048, %v3047
  %v3050 = vmul.f32 0.5, %v3049
  %v3051 = vsub.f32 1.5, %v3050
  %v3052 = vmul.f32 %v3047, %v3051
  %vm3053 = vweird.f32 %v3006
  %vm3054 = vweird.f32 %v3047
  %vm3055 = vmor %vm3053, %vm3054
  %v3056 = vsel %vm3055, %v3047, %v3052
  %v3057 = vmul.f32 %v2972, %v3016
  %v3058 = vmul.f32 %v2973, %v3026
  %v3059 = vmul.f32 %v2974, %v3036
  %v3060 = vmul.f32 %v2975, %v3046
  %v3061 = vmul.f32 %v2976, %v3056
  %v3062 = vperm.slane %v1614, 6
  %v3063 = vmul.f32 %v3057, %v3062
  %v3064 = vmul.f32 %v3058, %v3062
  %v3065 = vmul.f32 %v3059, %v3062
  %v3066 = vmul.f32 %v3060, %v3062
  %v3067 = vmul.f32 %v3061, %v3062
  %v3068 = vperm.slane %v1614, 7
  %v3069 = vadd.f32 %v3063, %v3068
  %v3070 = vadd.f32 %v3064, %v3068
  %v3071 = vadd.f32 %v3065, %v3068
  %v3072 = vadd.f32 %v3066, %v3068
  %v3073 = vadd.f32 %v3067, %v3068
  %v3074 = vld [vmem:[%s6] sm:$0xff]
  %v3075 = vld [vmem:[%s6 + $0x8] sm:$0xff]
  %v3076 = vld [vmem:[%s6 + $0x10] sm:$0xff]
  %v3077 = vld [vmem:[%s6 + $0x18] sm:$0xff]
  %v3078 = vld [vmem:[%s6 + $0x20] sm:$0x7]
  %v3079 = vsel %vm140, %v3069, 0.0
  %3080 = vadd.xlane.f32.xlu0 %v3079
  %v3081 = vpop.xlane.xlu0 %3080
  %v3082 = vsel %vm140, %v3070, 0.0
  %3083 = vadd.xlane.f32.xlu0 %v3082
  %v3084 = vpop.xlane.xlu0 %3083
  %v3085 = vsel %vm140, %v3071, 0.0
  %3086 = vadd.xlane.f32.xlu0 %v3085
  %v3087 = vpop.xlane.xlu0 %3086
  %v3088 = vsel %vm140, %v3072, 0.0
  %3089 = vadd.xlane.f32.xlu0 %v3088
  %v3090 = vpop.xlane.xlu0 %3089
  %v3091 = vsel %vm140, %v3073, 0.0
  %3092 = vadd.xlane.f32.xlu0 %v3091
  %v3093 = vpop.xlane.xlu0 %3092
  %v3094 = vmul.f32 %v3081, %v1030
  %v3095 = vmul.f32 %v3084, %v1030
  %v3096 = vmul.f32 %v3087, %v1030
  %v3097 = vmul.f32 %v3090, %v1030
  %v3098 = vmul.f32 %v3093, %v1030
  %v3099 = vsub.f32 %v3069, %v3094
  %v3100 = vsub.f32 %v3070, %v3095
  %v3101 = vsub.f32 %v3071, %v3096
  %v3102 = vsub.f32 %v3072, %v3097
  %v3103 = vsub.f32 %v3073, %v3098
  %v3104 = vmul.f32 %v3099, %v3099
  %v3105 = vmul.f32 %v3100, %v3100
  %v3106 = vmul.f32 %v3101, %v3101
  %v3107 = vmul.f32 %v3102, %v3102
  %v3108 = vmul.f32 %v3103, %v3103
  %v3109 = vsel %vm140, %v3104, 0.0
  %3110 = vadd.xlane.f32.xlu0 %v3109
  %v3111 = vpop.xlane.xlu0 %3110
  %v3112 = vsel %vm140, %v3105, 0.0
  %3113 = vadd.xlane.f32.xlu0 %v3112
  %v3114 = vpop.xlane.xlu0 %3113
  %v3115 = vsel %vm140, %v3106, 0.0
  %3116 = vadd.xlane.f32.xlu0 %v3115
  %v3117 = vpop.xlane.xlu0 %3116
  %v3118 = vsel %vm140, %v3107, 0.0
  %3119 = vadd.xlane.f32.xlu0 %v3118
  %v3120 = vpop.xlane.xlu0 %3119
  %v3121 = vsel %vm140, %v3108, 0.0
  %3122 = vadd.xlane.f32.xlu0 %v3121
  %v3123 = vpop.xlane.xlu0 %3122
  %v3124 = vmul.f32 %v3111, %v1030
  %v3125 = vmul.f32 %v3114, %v1030
  %v3126 = vmul.f32 %v3117, %v1030
  %v3127 = vmul.f32 %v3120, %v1030
  %v3128 = vmul.f32 %v3123, %v1030
  %v3129 = vadd.f32 %v3124, 1e-05
  %v3130 = vadd.f32 %v3125, 1e-05
  %v3131 = vadd.f32 %v3126, 1e-05
  %v3132 = vadd.f32 %v3127, 1e-05
  %v3133 = vadd.f32 %v3128, 1e-05
  %v3134 = vrsqrt.pop %v3129
  %v3135 = vmul.f32 %v3134, %v3129
  %v3136 = vmul.f32 %v3135, %v3134
  %v3137 = vmul.f32 0.5, %v3136
  %v3138 = vsub.f32 1.5, %v3137
  %v3139 = vmul.f32 %v3134, %v3138
  %vm3140 = vweird.f32 %v3129
  %vm3141 = vweird.f32 %v3134
  %vm3142 = vmor %vm3140, %vm3141
  %v3143 = vsel %vm3142, %v3134, %v3139
  %v3144 = vrsqrt.pop %v3130
  %v3145 = vmul.f32 %v3144, %v3130
  %v3146 = vmul.f32 %v3145, %v3144
  %v3147 = vmul.f32 0.5, %v3146
  %v3148 = vsub.f32 1.5, %v3147
  %v3149 = vmul.f32 %v3144, %v3148
  %vm3150 = vweird.f32 %v3130
  %vm3151 = vweird.f32 %v3144
  %vm3152 = vmor %vm3150, %vm3151
  %v3153 = vsel %vm3152, %v3144, %v3149
  %v3154 = vrsqrt.pop %v3131
  %v3155 = vmul.f32 %v3154, %v3131
  %v3156 = vmul.f32 %v3155, %v3154
  %v3157 = vmul.f32 0.5, %v3156
  %v3158 = vsub.f32 1.5, %v3157
  %v3159 = vmul.f32 %v3154, %v3158
  %vm3160 = vweird.f32 %v3131
  %vm3161 = vweird.f32 %v3154
  %vm3162 = vmor %vm3160, %vm3161
  %v3163 = vsel %vm3162, %v3154, %v3159
  %v3164 = vrsqrt.pop %v3132
  %v3165 = vmul.f32 %v3164, %v3132
  %v3166 = vmul.f32 %v3165, %v3164
  %v3167 = vmul.f32 0.5, %v3166
  %v3168 = vsub.f32 1.5, %v3167
  %v3169 = vmul.f32 %v3164, %v3168
  %vm3170 = vweird.f32 %v3132
  %vm3171 = vweird.f32 %v3164
  %vm3172 = vmor %vm3170, %vm3171
  %v3173 = vsel %vm3172, %v3164, %v3169
  %v3174 = vrsqrt.pop %v3133
  %v3175 = vmul.f32 %v3174, %v3133
  %v3176 = vmul.f32 %v3175, %v3174
  %v3177 = vmul.f32 0.5, %v3176
  %v3178 = vsub.f32 1.5, %v3177
  %v3179 = vmul.f32 %v3174, %v3178
  %vm3180 = vweird.f32 %v3133
  %vm3181 = vweird.f32 %v3174
  %vm3182 = vmor %vm3180, %vm3181
  %v3183 = vsel %vm3182, %v3174, %v3179
  %v3184 = vmul.f32 %v3099, %v3143
  %v3185 = vmul.f32 %v3100, %v3153
  %v3186 = vmul.f32 %v3101, %v3163
  %v3187 = vmul.f32 %v3102, %v3173
  %v3188 = vmul.f32 %v3103, %v3183
  %v3189 = vperm.slane %v3078, 1
  %v3190 = vmul.f32 %v3184, %v3189
  %v3191 = vmul.f32 %v3185, %v3189
  %v3192 = vmul.f32 %v3186, %v3189
  %v3193 = vmul.f32 %v3187, %v3189
  %v3194 = vmul.f32 %v3188, %v3189
  %v3195 = vperm.slane %v3078, 2
  %v3196 = vadd.f32 %v3190, %v3195
  %v3197 = vadd.f32 %v3191, %v3195
  %v3198 = vadd.f32 %v3192, %v3195
  %v3199 = vadd.f32 %v3193, %v3195
  %v3200 = vadd.f32 %v3194, %v3195
  %v3201 = vperm.slane %v3078, 0
  %v3203 = vsel %vm140, %v3196, 0
  %v3206 = vsel %vm140, %v3197, 0
  %v3209 = vsel %vm140, %v3198, 0
  %v3212 = vsel %vm140, %v3199, 0
  %v3215 = vsel %vm140, %v3200, 0
  %3217 = vmatpush.msra.mxu0 0.0
  %3218 = vmatpush.msra.mxu0 0.0
  %3219 = vmatpush.msra.mxu0 0.0
  %3220 = vmatpush.msra.mxu0 0.0
  %3221 = vmatpush.msra.mxu0 0.0
  %3222 = vmatpush.msra.mxu0 0.0
  %3223 = vmatpush.msra.mxu0 0.0
  %3224 = vmatpush.msra.mxu0 0.0
  %3225 = vmatpush.msra.mxu0 0.0
  %3226 = vmatpush.msra.mxu0 0.0
  %3227 = vmatpush.msra.mxu0 0.0
  %3228 = vmatpush.msra.mxu0 0.0
  %3229 = vmatpush.msra.mxu0 %v3077
  %3230 = vmatpush.msra.mxu0 %v3076
  %3231 = vmatpush.msra.mxu0 %v3075
  %3232 = vmatpush.msra.mxu0 %v3074
  %3233 = vmatmul.f32.gmra.mxu0 %v3203
  %v3234 = vpop.f32.mrf.mxu0
  %v3235 = vadd.f32 %v3201, %v3234
  %3236 = vmatmul.f32.gmra.mxu0 %v3206
  %v3237 = vpop.f32.mrf.mxu0
  %v3238 = vadd.f32 %v3201, %v3237
  %3239 = vmatmul.f32.gmra.mxu0 %v3209
  %v3240 = vpop.f32.mrf.mxu0
  %v3241 = vadd.f32 %v3201, %v3240
  %3242 = vmatmul.f32.gmra.mxu0 %v3212
  %v3243 = vpop.f32.mrf.mxu0
  %v3244 = vadd.f32 %v3201, %v3243
  %3245 = vmatmul.f32.gmra.mxu0 %v3215
  %v3246 = vpop.f32.mrf.mxu0
  %v3247 = vadd.f32 %v3201, %v3246
  %3248 = vdwg.mxu0
  %v3249 = vxor.u32 %v3235, 2147483648
  %v3250 = vxor.u32 %v3238, 2147483648
  %v3251 = vxor.u32 %v3241, 2147483648
  %v3252 = vxor.u32 %v3244, 2147483648
  %v3253 = vxor.u32 %v3247, 2147483648
  %v3254 = vmul.f32 %v3249, 1.442695
  %v3255 = vpow.pop %v3254
  %v3256 = vmul.f32 %v3250, 1.442695
  %v3257 = vpow.pop %v3256
  %v3258 = vmul.f32 %v3251, 1.442695
  %v3259 = vpow.pop %v3258
  %v3260 = vmul.f32 %v3252, 1.442695
  %v3261 = vpow.pop %v3260
  %v3262 = vmul.f32 %v3253, 1.442695
  %v3263 = vpow.pop %v3262
  %v3264 = vadd.f32 %v3255, 1.0
  %v3265 = vadd.f32 %v3257, 1.0
  %v3266 = vadd.f32 %v3259, 1.0
  %v3267 = vadd.f32 %v3261, 1.0
  %v3268 = vadd.f32 %v3263, 1.0
  %v3269 = vrcp.pop %v3264
  %v3270 = vmul.f32 %v3264, %v3269
  %v3271 = vsub.f32 1.0, %v3270
  %v3272 = vmul.f32 %v3269, %v3271
  %v3273 = vadd.f32 %v3269, %v3272
  %vm3274 = vweird.f32 %v3264
  %vm3275 = vweird.f32 %v3269
  %vm3276 = vmor %vm3274, %vm3275
  %v3277 = vsel %vm3276, %v3269, %v3273
  %v3278 = vand.u32 2147483647, %v3264
  %vm3279 = vcmp.eq.f32.partialorder %v3278, 8.507059e+37
  %v3280 = vand.u32 %v3264, 2147483648
  %v3281 = vor.u32 1.1754944e-38, %v3280
  %v3282 = vsel %vm3279, %v3281, %v3277
  %v3283 = vmul.f32 1.0, %v3282
  %v3284 = vrcp.pop %v3265
  %v3285 = vmul.f32 %v3265, %v3284
  %v3286 = vsub.f32 1.0, %v3285
  %v3287 = vmul.f32 %v3284, %v3286
  %v3288 = vadd.f32 %v3284, %v3287
  %vm3289 = vweird.f32 %v3265
  %vm3290 = vweird.f32 %v3284
  %vm3291 = vmor %vm3289, %vm3290
  %v3292 = vsel %vm3291, %v3284, %v3288
  %v3293 = vand.u32 2147483647, %v3265
  %vm3294 = vcmp.eq.f32.partialorder %v3293, 8.507059e+37
  %v3295 = vand.u32 %v3265, 2147483648
  %v3296 = vor.u32 1.1754944e-38, %v3295
  %v3297 = vsel %vm3294, %v3296, %v3292
  %v3298 = vmul.f32 1.0, %v3297
  %v3299 = vrcp.pop %v3266
  %v3300 = vmul.f32 %v3266, %v3299
  %v3301 = vsub.f32 1.0, %v3300
  %v3302 = vmul.f32 %v3299, %v3301
  %v3303 = vadd.f32 %v3299, %v3302
  %vm3304 = vweird.f32 %v3266
  %vm3305 = vweird.f32 %v3299
  %vm3306 = vmor %vm3304, %vm3305
  %v3307 = vsel %vm3306, %v3299, %v3303
  %v3308 = vand.u32 2147483647, %v3266
  %vm3309 = vcmp.eq.f32.partialorder %v3308, 8.507059e+37
  %v3310 = vand.u32 %v3266, 2147483648
  %v3311 = vor.u32 1.1754944e-38, %v3310
  %v3312 = vsel %vm3309, %v3311, %v3307
  %v3313 = vmul.f32 1.0, %v3312
  %v3314 = vrcp.pop %v3267
  %v3315 = vmul.f32 %v3267, %v3314
  %v3316 = vsub.f32 1.0, %v3315
  %v3317 = vmul.f32 %v3314, %v3316
  %v3318 = vadd.f32 %v3314, %v3317
  %vm3319 = vweird.f32 %v3267
  %vm3320 = vweird.f32 %v3314
  %vm3321 = vmor %vm3319, %vm3320
  %v3322 = vsel %vm3321, %v3314, %v3318
  %v3323 = vand.u32 2147483647, %v3267
  %vm3324 = vcmp.eq.f32.partialorder %v3323, 8.507059e+37
  %v3325 = vand.u32 %v3267, 2147483648
  %v3326 = vor.u32 1.1754944e-38, %v3325
  %v3327 = vsel %vm3324, %v3326, %v3322
  %v3328 = vmul.f32 1.0, %v3327
  %v3329 = vrcp.pop %v3268
  %v3330 = vmul.f32 %v3268, %v3329
  %v3331 = vsub.f32 1.0, %v3330
  %v3332 = vmul.f32 %v3329, %v3331
  %v3333 = vadd.f32 %v3329, %v3332
  %vm3334 = vweird.f32 %v3268
  %vm3335 = vweird.f32 %v3329
  %vm3336 = vmor %vm3334, %vm3335
  %v3337 = vsel %vm3336, %v3329, %v3333
  %v3338 = vand.u32 2147483647, %v3268
  %vm3339 = vcmp.eq.f32.partialorder %v3338, 8.507059e+37
  %v3340 = vand.u32 %v3268, 2147483648
  %v3341 = vor.u32 1.1754944e-38, %v3340
  %v3342 = vsel %vm3339, %v3341, %v3337
  %v3343 = vmul.f32 1.0, %v3342
  %3344 = vst [vmem:[%s7] sm:$0xff] %v3283
  %3345 = vst [vmem:[%s7 + $0x8] sm:$0xff] %v3298
  %3346 = vst [vmem:[%s7 + $0x10] sm:$0xff] %v3313
  %3347 = vst [vmem:[%s7 + $0x18] sm:$0xff] %v3328
  %3348 = vst [vmem:[%s7 + $0x20] sm:$0xff] %v3343
  // Predicated region
  $region30: #{vit_forward.1} parent=0 // pred_check
    _
  $region31: #{vit_forward.1} parent=0 // pred_check_branch
    %3350 = sbr.rel (0) target = $region33
  $region32: #{vit_forward.1} parent=0 // pred_region
    _
  $region33: #{vit_forward.1} parent=0 // pred_fallthru
    _
  // Predicated region
  $region34: #{vit_forward.1} parent=0 // pred_check
    _
  $region35: #{vit_forward.1} parent=0 // pred_check_branch
    %3352 = sbr.rel (0) target = $region37
  $region36: #{vit_forward.1} parent=0 // pred_region
    _
  $region37: #{vit_forward.1} parent=0 // pred_fallthru
    _

</llo_original>
